<compile_context>
chip_gen: v5e
topology: v5e:2x2
jax: 0.10.0
libtpu: 0.0.40
codegen_flags: <defaults>
</compile_context>

<pallas_src>
import functools

import numpy as np
import jax
import jax.numpy as jnp
from jax import lax
from jax.experimental import pallas as pl
from jax.experimental.pallas import tpu as pltpu

KSIZE = 7            # SA conv kernel size (SACA uses kernel_size=7)
PAD = 3              # padding=3 for kernel_size=7 ("same" conv)
NTAPS = KSIZE * KSIZE


# ---------------------------------------------------------------------------
# Fused SA + CA kernel, operating on a lane-dense (bt, C, HW) block.
# ---------------------------------------------------------------------------
def _saca_kernel(x_ref, wtap_ref, cb_ref, w1_ref, b1_ref, w2_ref, b2_ref,
                 out_ref, *, shifts, bt):
    # x_ref    : (bt, C, HW)        activations (f32 or bf16)  VMEM
    # wtap_ref : (49, 2*bt, HW) f32 masked conv taps, pre-broadcast to line up
    #                               with the sublane-stacked [avg; max] planes
    # cb_ref   : (1,) f32 SMEM      conv bias
    # w1/b1/w2/b2 : CA MLP params (f32, VMEM)
    x = x_ref[...].astype(jnp.float32)                       # (bt, C, HW)
    hw = x.shape[-1]

    # ---------------- SA stage ----------------
    # Channel mean / max, stacked along sublanes: every tap then needs ONE
    # lane rotate and ONE multiply on full vregs (49 rolls, not 98).
    planes = jnp.concatenate(
        [jnp.mean(x, axis=1), jnp.max(x, axis=1)], axis=0)   # (2*bt, HW)

    acc2 = jnp.zeros((2 * bt, hw), jnp.float32)
    for t, s in enumerate(shifts):                           # 49 static taps, unrolled
        p = planes if s == 0 else pltpu.roll(planes, shift=s, axis=1)  # XLU rotate
        acc2 = acc2 + wtap_ref[t] * p                        # weights already (2*bt, HW)
    # Fold the avg/max halves of the stacked accumulator together + conv bias.
    logits = acc2[:bt] + acc2[bt:] + cb_ref[0]               # (bt, HW)
    gate = jax.nn.sigmoid(logits)

    # ---------------- CA stage ----------------
    # y = SA(x) * x = x^2 * gate; only its spatial pools feed the MLP.
    y = x * x * gate[:, None, :]                             # (bt, C, HW)
    pooled = jnp.concatenate(
        [jnp.mean(y, axis=2), jnp.max(y, axis=2)], axis=0)   # (2*bt, C)

    # Both CA branches share the MLP -> one batched matmul pair.
    h = jnp.maximum(
        jnp.dot(pooled, w1_ref[...], preferred_element_type=jnp.float32)
        + b1_ref[...], 0.0)                                  # (2*bt, HID)
    o = jax.nn.sigmoid(
        jnp.dot(h, w2_ref[...], preferred_element_type=jnp.float32)
        + b2_ref[...])                                       # (2*bt, C)
    scale = o[:bt] + o[bt:]                                  # (bt, C)

    # ---------------- epilogue ----------------
    # out = (scale * y) * y = scale * gate^2 * x^4.  Recompute y from the input
    # ref rather than keeping it live across the MLP (lower VMEM/vreg pressure).
    xv = x_ref[...].astype(jnp.float32)
    y2 = xv * xv * gate[:, None, :]
    out_ref[...] = (y2 * y2 * scale[:, :, None]).astype(out_ref.dtype)


# ---------------------------------------------------------------------------
# Batch-tile selection: prefer multiples of 8 (full vreg sublanes), cap by a
# VMEM budget, and on dual-TC chips prefer at least 2 grid steps.
# ---------------------------------------------------------------------------
def _pick_bt(B, C, HW, act_bytes, prefer_two_steps, budget=24 << 20):
    def cost(d):
        io = 2 * 2 * d * C * HW * act_bytes          # double-buffered in + out blocks
        wt = 2 * NTAPS * 2 * d * HW * 4              # double-buffered masked-tap planes
        return io + wt

    divisors = [d for d in range(1, B + 1) if B % d == 0]
    fitting = [d for d in divisors if cost(d) <= budget] or [1]
    mult8 = [d for d in fitting if d % 8 == 0]
    pool = mult8 if mult8 else fitting
    bt = max(pool)
    if prefer_two_steps and B // bt < 2:
        alt = ([d for d in pool if B // d >= 2]
               or [d for d in fitting if B // d >= 2])
        if alt:
            bt = max(alt)
    return bt


def _is_dual_core_chip():
    try:
        kind = jax.devices()[0].device_kind.lower()
        return "v7" in kind or "7x" in kind
    except Exception:   # pragma: no cover
        return False


# ---------------------------------------------------------------------------
# Wrapper
# ---------------------------------------------------------------------------
def saca_forward(x, conv_w, conv_b, w1, b1, w2, b2, *, bt=None):
    B, C, H, W = x.shape
    HW = H * W
    # NOTE: for ConvNeXt's last stage (7x7 -> HW=49) pad HW up to a multiple of
    # 128 before reusing this layout to keep output stores lane-dense.

    # Parameter canonicalization.  PyTorch Conv2d(2,1,7).weight is (1,2,7,7);
    # (2,7,7) is also accepted.  Linear biases may be (HID,)/(C,) or 2-D.
    conv_w = jnp.asarray(conv_w, jnp.float32).reshape(2, NTAPS)
    conv_b = jnp.asarray(conv_b, jnp.float32).reshape(1)
    w1 = jnp.asarray(w1, jnp.float32)
    w2 = jnp.asarray(w2, jnp.float32)
    HID = w1.shape[1]
    b1 = jnp.asarray(b1, jnp.float32).reshape(1, HID)
    b2 = jnp.asarray(b2, jnp.float32).reshape(1, C)

    act_bytes = jnp.dtype(x.dtype).itemsize
    if bt is None:
        bt = _pick_bt(B, C, HW, act_bytes, prefer_two_steps=_is_dual_core_chip())
    assert B % bt == 0, "batch must be divisible by the batch tile"

    # Pre-fold the zero-padding validity mask of the "same" conv into the
    # weights, one (HW,) plane per tap, and record each tap's static lane shift
    # in the flattened (y*W + x) layout.  Pre-broadcast each tap to (2*bt, HW)
    # so it lines up with the sublane-stacked [avg; max] planes in the kernel.
    yy = np.repeat(np.arange(H), W)                    # row index per flat pos
    xx = np.tile(np.arange(W), H)                      # col index per flat pos
    valid = np.zeros((NTAPS, HW), np.float32)
    shifts = []
    for ky in range(KSIZE):
        for kx in range(KSIZE):
            dy, dx = ky - PAD, kx - PAD
            t = ky * KSIZE + kx
            valid[t] = ((yy + dy >= 0) & (yy + dy < H) &
                        (xx + dx >= 0) & (xx + dx < W)).astype(np.float32)
            shifts.append((-(dy * W + dx)) % HW)       # non-negative static roll

    valid_j = jnp.asarray(valid)                       # (49, HW)
    wa = conv_w[0][:, None] * valid_j                  # (49, HW) avg-plane taps
    wm = conv_w[1][:, None] * valid_j                  # (49, HW) max-plane taps
    # TODO(synk): for large HW, switch to the row/column-separable 14-roll form
    # to shrink this tap table and the rotate count.
    wtap = jnp.concatenate(
        [jnp.broadcast_to(wa[:, None, :], (NTAPS, bt, HW)),
         jnp.broadcast_to(wm[:, None, :], (NTAPS, bt, HW))], axis=1)  # (49, 2*bt, HW)

    x_flat = x.reshape(B, C, HW)                       # lane-dense view (free)

    # VMEM budget: double-buffered in+out blocks + tap table + MLP params.
    blk = bt * C * HW * act_bytes
    need = (2 * 2 * blk + 2 * NTAPS * 2 * bt * HW * 4
            + 4 * (C * HID + HID + HID * C + C))
    vmem_limit = int(min(max(2 * need, 32 << 20), 64 << 20))

    kernel = functools.partial(_saca_kernel, shifts=tuple(shifts), bt=bt)

    out_flat = pl.pallas_call(
        kernel,
        out_shape=jax.ShapeDtypeStruct((B, C, HW), x.dtype),
        grid=(B // bt,),
        in_specs=[
            pl.BlockSpec((bt, C, HW), lambda b: (b, 0, 0)),            # x
            pl.BlockSpec((NTAPS, 2 * bt, HW), lambda b: (0, 0, 0)),    # masked taps
            pl.BlockSpec(memory_space=pltpu.SMEM),                     # conv bias
            pl.BlockSpec((C, HID), lambda b: (0, 0)),                  # w1
            pl.BlockSpec((1, HID), lambda b: (0, 0)),                  # b1
            pl.BlockSpec((HID, C), lambda b: (0, 0)),                  # w2
            pl.BlockSpec((1, C), lambda b: (0, 0)),                    # b2
        ],
        out_specs=pl.BlockSpec((bt, C, HW), lambda b: (b, 0, 0)),
        compiler_params=pltpu.CompilerParams(
            dimension_semantics=("parallel",),
            vmem_limit_bytes=vmem_limit),
    )(x_flat, wtap, conv_b, w1, b1, w2, b2)

    return out_flat.reshape(B, C, H, W)


# ---------------------------------------------------------------------------
# Pure-JAX reference (mirrors the PyTorch SACA forward) for correctness check.
# ---------------------------------------------------------------------------
def saca_reference(x, conv_w, conv_b, w1, b1, w2, b2):
    avg = jnp.mean(x, axis=1, keepdims=True)
    mx = jnp.max(x, axis=1, keepdims=True)
    two = jnp.concatenate([avg, mx], axis=1)                      # (B,2,H,W)
    conv = lax.conv_general_dilated(
        two, conv_w[None], (1, 1), [(PAD, PAD), (PAD, PAD)],
        dimension_numbers=("NCHW", "OIHW", "NCHW")) + conv_b.reshape(1, 1, 1, 1)
    sa = x * jax.nn.sigmoid(conv)
    out = sa * x
    a = jnp.mean(out, axis=(2, 3))
    m = jnp.max(out, axis=(2, 3))

    def fc(v):
        h = jnp.maximum(v @ w1 + b1, 0.0)
        return jax.nn.sigmoid(h @ w2 + b2)

    scale = fc(a) + fc(m)
    ca = scale[:, :, None, None] * out
    return ca * out


if __name__ == "__main__":
    B, C, H, W = 8, 32, 16, 16        # channel=32 so hidden = channel//16 = 2
    HID = C // 16

    key = jax.random.PRNGKey(0)
    kx, kw, kb, k1, kb1, k2, kb2 = jax.random.split(key, 7)

    x = jax.random.normal(kx, (B, C, H, W), jnp.float32)

    # Synthetic parameters; shapes match the nn.Module __init__
    # (Conv2d(2,1,7).weight is (1,2,7,7); Linear biases are 1-D).
    conv_w = 0.1 * jax.random.normal(kw, (1, 2, KSIZE, KSIZE), jnp.float32)
    conv_b = 0.05 * jax.random.normal(kb, (1,), jnp.float32)
    w1 = 0.2 * jax.random.normal(k1, (C, HID), jnp.float32)       # Linear(C, C//16) (pre-transposed)
    b1 = 0.1 * jax.random.normal(kb1, (HID,), jnp.float32)
    w2 = 0.2 * jax.random.normal(k2, (HID, C), jnp.float32)       # Linear(C//16, C) (pre-transposed)
    b2 = 0.1 * jax.random.normal(kb2, (C,), jnp.float32)

    conv_w_ref = conv_w.reshape(2, KSIZE, KSIZE)

    # --- float32 path: strict correctness check ---
    out = saca_forward(x, conv_w, conv_b, w1, b1, w2, b2)
    out = jax.block_until_ready(out)
    ref = saca_reference(x, conv_w_ref, conv_b, w1, b1, w2, b2)
    np.testing.assert_allclose(np.asarray(out), np.asarray(ref),
                               rtol=1e-3, atol=1e-3)

    # --- bf16 I/O path (halves HBM traffic; compute stays f32 in-kernel) ---
    x_bf = x.astype(jnp.bfloat16)
    out_bf = jax.block_until_ready(
        saca_forward(x_bf, conv_w, conv_b, w1, b1, w2, b2))
    ref_bf = saca_reference(x_bf.astype(jnp.float32), conv_w_ref, conv_b,
                            w1, b1, w2, b2)
    np.testing.assert_allclose(np.asarray(out_bf).astype(np.float32),
                               np.asarray(ref_bf), rtol=5e-2, atol=5e-2)

    print("KERNEL_OK")
</pallas_src>

<mosaic_0001>
module attributes {stable_mosaic.version = 11 : i64} {
  func.func @_saca_kernel(%arg0: i32, %arg1: memref<8x32x256xf32, #tpu.memory_space<vmem>>, %arg2: memref<49x16x256xf32, #tpu.memory_space<vmem>>, %arg3: memref<1xf32, #tpu.memory_space<smem>>, %arg4: memref<32x2xf32, #tpu.memory_space<vmem>>, %arg5: memref<1x2xf32, #tpu.memory_space<vmem>>, %arg6: memref<2x32xf32, #tpu.memory_space<vmem>>, %arg7: memref<1x32xf32, #tpu.memory_space<vmem>>, %arg8: memref<8x32x256xf32, #tpu.memory_space<vmem>>) attributes {dimension_semantics = [#tpu.dimension_semantics<parallel>], iteration_bounds = array<i64: 1>, scalar_prefetch = 0 : i64, scratch_operands = 0 : i64, tpu.core_type = #tpu.core_type<tc>, window_params = [{transform_indices = @transform_0, window_bounds = array<i64: 8, 32, 256>}, {pipeline_mode = #tpu.pipeline_mode<synchronous>, transform_indices = @transform_1, window_bounds = array<i64: 49, 16, 256>}, {transform_indices = @transform_2, window_bounds = array<i64: 1>}, {pipeline_mode = #tpu.pipeline_mode<synchronous>, transform_indices = @transform_3, window_bounds = array<i64: 32, 2>}, {pipeline_mode = #tpu.pipeline_mode<synchronous>, transform_indices = @transform_4, window_bounds = array<i64: 1, 2>}, {pipeline_mode = #tpu.pipeline_mode<synchronous>, transform_indices = @transform_5, window_bounds = array<i64: 2, 32>}, {pipeline_mode = #tpu.pipeline_mode<synchronous>, transform_indices = @transform_6, window_bounds = array<i64: 1, 32>}, {transform_indices = @transform_7, window_bounds = array<i64: 8, 32, 256>}]} {
    %c0 = arith.constant 0 : index
    %c0_0 = arith.constant 0 : index
    %c0_1 = arith.constant 0 : index
    %0 = vector.load %arg1[%c0, %c0_0, %c0_1] : memref<8x32x256xf32, #tpu.memory_space<vmem>>, vector<8x32x256xf32>
    %cst = arith.constant dense<0.000000e+00> : vector<8x256xf32>
    %1 = vector.multi_reduction <add>, %0, %cst [1] : vector<8x32x256xf32> to vector<8x256xf32>
    %cst_2 = arith.constant 3.200000e+01 : f32
    %2 = vector.broadcast %cst_2 : f32 to vector<8x256xf32>
    %3 = arith.divf %1, %2 : vector<8x256xf32>
    %cst_3 = arith.constant dense<0xFF800000> : vector<8x256xf32>
    %4 = vector.multi_reduction <maximumf>, %0, %cst_3 [1] : vector<8x32x256xf32> to vector<8x256xf32>
    %5 = tpu.concatenate %3, %4 in 0 : vector<8x256xf32>, vector<8x256xf32> -> vector<16x256xf32>
    %cst_4 = arith.constant 0.000000e+00 : f32
    %6 = vector.broadcast %cst_4 : f32 to vector<16x256xf32>
    %c51_i32 = arith.constant 51 : i32
    %7 = tpu.dynamic_rotate %5 by %c51_i32 dim 1 : vector<16x256xf32>, i32 -> vector<16x256xf32>
    %c0_5 = arith.constant 0 : index
    %c0_6 = arith.constant 0 : index
    %c0_7 = arith.constant 0 : index
    %8 = vector.load %arg2[%c0_5, %c0_6, %c0_7] : memref<49x16x256xf32, #tpu.memory_space<vmem>>, vector<1x16x256xf32>
    %9 = vector.shape_cast %8 : vector<1x16x256xf32> to vector<16x256xf32>
    %10 = arith.mulf %9, %7 : vector<16x256xf32>
    %11 = arith.addf %6, %10 : vector<16x256xf32>
    %c50_i32 = arith.constant 50 : i32
    %12 = tpu.dynamic_rotate %5 by %c50_i32 dim 1 : vector<16x256xf32>, i32 -> vector<16x256xf32>
    %c1 = arith.constant 1 : index
    %c0_8 = arith.constant 0 : index
    %c0_9 = arith.constant 0 : index
    %13 = vector.load %arg2[%c1, %c0_8, %c0_9] : memref<49x16x256xf32, #tpu.memory_space<vmem>>, vector<1x16x256xf32>
    %14 = vector.shape_cast %13 : vector<1x16x256xf32> to vector<16x256xf32>
    %15 = arith.mulf %14, %12 : vector<16x256xf32>
    %16 = arith.addf %11, %15 : vector<16x256xf32>
    %c49_i32 = arith.constant 49 : i32
    %17 = tpu.dynamic_rotate %5 by %c49_i32 dim 1 : vector<16x256xf32>, i32 -> vector<16x256xf32>
    %c2 = arith.constant 2 : index
    %c0_10 = arith.constant 0 : index
    %c0_11 = arith.constant 0 : index
    %18 = vector.load %arg2[%c2, %c0_10, %c0_11] : memref<49x16x256xf32, #tpu.memory_space<vmem>>, vector<1x16x256xf32>
    %19 = vector.shape_cast %18 : vector<1x16x256xf32> to vector<16x256xf32>
    %20 = arith.mulf %19, %17 : vector<16x256xf32>
    %21 = arith.addf %16, %20 : vector<16x256xf32>
    %c48_i32 = arith.constant 48 : i32
    %22 = tpu.dynamic_rotate %5 by %c48_i32 dim 1 : vector<16x256xf32>, i32 -> vector<16x256xf32>
    %c3 = arith.constant 3 : index
    %c0_12 = arith.constant 0 : index
    %c0_13 = arith.constant 0 : index
    %23 = vector.load %arg2[%c3, %c0_12, %c0_13] : memref<49x16x256xf32, #tpu.memory_space<vmem>>, vector<1x16x256xf32>
    %24 = vector.shape_cast %23 : vector<1x16x256xf32> to vector<16x256xf32>
    %25 = arith.mulf %24, %22 : vector<16x256xf32>
    %26 = arith.addf %21, %25 : vector<16x256xf32>
    %c47_i32 = arith.constant 47 : i32
    %27 = tpu.dynamic_rotate %5 by %c47_i32 dim 1 : vector<16x256xf32>, i32 -> vector<16x256xf32>
    %c4 = arith.constant 4 : index
    %c0_14 = arith.constant 0 : index
    %c0_15 = arith.constant 0 : index
    %28 = vector.load %arg2[%c4, %c0_14, %c0_15] : memref<49x16x256xf32, #tpu.memory_space<vmem>>, vector<1x16x256xf32>
    %29 = vector.shape_cast %28 : vector<1x16x256xf32> to vector<16x256xf32>
    %30 = arith.mulf %29, %27 : vector<16x256xf32>
    %31 = arith.addf %26, %30 : vector<16x256xf32>
    %c46_i32 = arith.constant 46 : i32
    %32 = tpu.dynamic_rotate %5 by %c46_i32 dim 1 : vector<16x256xf32>, i32 -> vector<16x256xf32>
    %c5 = arith.constant 5 : index
    %c0_16 = arith.constant 0 : index
    %c0_17 = arith.constant 0 : index
    %33 = vector.load %arg2[%c5, %c0_16, %c0_17] : memref<49x16x256xf32, #tpu.memory_space<vmem>>, vector<1x16x256xf32>
    %34 = vector.shape_cast %33 : vector<1x16x256xf32> to vector<16x256xf32>
    %35 = arith.mulf %34, %32 : vector<16x256xf32>
    %36 = arith.addf %31, %35 : vector<16x256xf32>
    %c45_i32 = arith.constant 45 : i32
    %37 = tpu.dynamic_rotate %5 by %c45_i32 dim 1 : vector<16x256xf32>, i32 -> vector<16x256xf32>
    %c6 = arith.constant 6 : index
    %c0_18 = arith.constant 0 : index
    %c0_19 = arith.constant 0 : index
    %38 = vector.load %arg2[%c6, %c0_18, %c0_19] : memref<49x16x256xf32, #tpu.memory_space<vmem>>, vector<1x16x256xf32>
    %39 = vector.shape_cast %38 : vector<1x16x256xf32> to vector<16x256xf32>
    %40 = arith.mulf %39, %37 : vector<16x256xf32>
    %41 = arith.addf %36, %40 : vector<16x256xf32>
    %c35_i32 = arith.constant 35 : i32
    %42 = tpu.dynamic_rotate %5 by %c35_i32 dim 1 : vector<16x256xf32>, i32 -> vector<16x256xf32>
    %c7 = arith.constant 7 : index
    %c0_20 = arith.constant 0 : index
    %c0_21 = arith.constant 0 : index
    %43 = vector.load %arg2[%c7, %c0_20, %c0_21] : memref<49x16x256xf32, #tpu.memory_space<vmem>>, vector<1x16x256xf32>
    %44 = vector.shape_cast %43 : vector<1x16x256xf32> to vector<16x256xf32>
    %45 = arith.mulf %44, %42 : vector<16x256xf32>
    %46 = arith.addf %41, %45 : vector<16x256xf32>
    %c34_i32 = arith.constant 34 : i32
    %47 = tpu.dynamic_rotate %5 by %c34_i32 dim 1 : vector<16x256xf32>, i32 -> vector<16x256xf32>
    %c8 = arith.constant 8 : index
    %c0_22 = arith.constant 0 : index
    %c0_23 = arith.constant 0 : index
    %48 = vector.load %arg2[%c8, %c0_22, %c0_23] : memref<49x16x256xf32, #tpu.memory_space<vmem>>, vector<1x16x256xf32>
    %49 = vector.shape_cast %48 : vector<1x16x256xf32> to vector<16x256xf32>
    %50 = arith.mulf %49, %47 : vector<16x256xf32>
    %51 = arith.addf %46, %50 : vector<16x256xf32>
    %c33_i32 = arith.constant 33 : i32
    %52 = tpu.dynamic_rotate %5 by %c33_i32 dim 1 : vector<16x256xf32>, i32 -> vector<16x256xf32>
    %c9 = arith.constant 9 : index
    %c0_24 = arith.constant 0 : index
    %c0_25 = arith.constant 0 : index
    %53 = vector.load %arg2[%c9, %c0_24, %c0_25] : memref<49x16x256xf32, #tpu.memory_space<vmem>>, vector<1x16x256xf32>
    %54 = vector.shape_cast %53 : vector<1x16x256xf32> to vector<16x256xf32>
    %55 = arith.mulf %54, %52 : vector<16x256xf32>
    %56 = arith.addf %51, %55 : vector<16x256xf32>
    %c32_i32 = arith.constant 32 : i32
    %57 = tpu.dynamic_rotate %5 by %c32_i32 dim 1 : vector<16x256xf32>, i32 -> vector<16x256xf32>
    %c10 = arith.constant 10 : index
    %c0_26 = arith.constant 0 : index
    %c0_27 = arith.constant 0 : index
    %58 = vector.load %arg2[%c10, %c0_26, %c0_27] : memref<49x16x256xf32, #tpu.memory_space<vmem>>, vector<1x16x256xf32>
    %59 = vector.shape_cast %58 : vector<1x16x256xf32> to vector<16x256xf32>
    %60 = arith.mulf %59, %57 : vector<16x256xf32>
    %61 = arith.addf %56, %60 : vector<16x256xf32>
    %c31_i32 = arith.constant 31 : i32
    %62 = tpu.dynamic_rotate %5 by %c31_i32 dim 1 : vector<16x256xf32>, i32 -> vector<16x256xf32>
    %c11 = arith.constant 11 : index
    %c0_28 = arith.constant 0 : index
    %c0_29 = arith.constant 0 : index
    %63 = vector.load %arg2[%c11, %c0_28, %c0_29] : memref<49x16x256xf32, #tpu.memory_space<vmem>>, vector<1x16x256xf32>
    %64 = vector.shape_cast %63 : vector<1x16x256xf32> to vector<16x256xf32>
    %65 = arith.mulf %64, %62 : vector<16x256xf32>
    %66 = arith.addf %61, %65 : vector<16x256xf32>
    %c30_i32 = arith.constant 30 : i32
    %67 = tpu.dynamic_rotate %5 by %c30_i32 dim 1 : vector<16x256xf32>, i32 -> vector<16x256xf32>
    %c12 = arith.constant 12 : index
    %c0_30 = arith.constant 0 : index
    %c0_31 = arith.constant 0 : index
    %68 = vector.load %arg2[%c12, %c0_30, %c0_31] : memref<49x16x256xf32, #tpu.memory_space<vmem>>, vector<1x16x256xf32>
    %69 = vector.shape_cast %68 : vector<1x16x256xf32> to vector<16x256xf32>
    %70 = arith.mulf %69, %67 : vector<16x256xf32>
    %71 = arith.addf %66, %70 : vector<16x256xf32>
    %c29_i32 = arith.constant 29 : i32
    %72 = tpu.dynamic_rotate %5 by %c29_i32 dim 1 : vector<16x256xf32>, i32 -> vector<16x256xf32>
    %c13 = arith.constant 13 : index
    %c0_32 = arith.constant 0 : index
    %c0_33 = arith.constant 0 : index
    %73 = vector.load %arg2[%c13, %c0_32, %c0_33] : memref<49x16x256xf32, #tpu.memory_space<vmem>>, vector<1x16x256xf32>
    %74 = vector.shape_cast %73 : vector<1x16x256xf32> to vector<16x256xf32>
    %75 = arith.mulf %74, %72 : vector<16x256xf32>
    %76 = arith.addf %71, %75 : vector<16x256xf32>
    %c19_i32 = arith.constant 19 : i32
    %77 = tpu.dynamic_rotate %5 by %c19_i32 dim 1 : vector<16x256xf32>, i32 -> vector<16x256xf32>
    %c14 = arith.constant 14 : index
    %c0_34 = arith.constant 0 : index
    %c0_35 = arith.constant 0 : index
    %78 = vector.load %arg2[%c14, %c0_34, %c0_35] : memref<49x16x256xf32, #tpu.memory_space<vmem>>, vector<1x16x256xf32>
    %79 = vector.shape_cast %78 : vector<1x16x256xf32> to vector<16x256xf32>
    %80 = arith.mulf %79, %77 : vector<16x256xf32>
    %81 = arith.addf %76, %80 : vector<16x256xf32>
    %c18_i32 = arith.constant 18 : i32
    %82 = tpu.dynamic_rotate %5 by %c18_i32 dim 1 : vector<16x256xf32>, i32 -> vector<16x256xf32>
    %c15 = arith.constant 15 : index
    %c0_36 = arith.constant 0 : index
    %c0_37 = arith.constant 0 : index
    %83 = vector.load %arg2[%c15, %c0_36, %c0_37] : memref<49x16x256xf32, #tpu.memory_space<vmem>>, vector<1x16x256xf32>
    %84 = vector.shape_cast %83 : vector<1x16x256xf32> to vector<16x256xf32>
    %85 = arith.mulf %84, %82 : vector<16x256xf32>
    %86 = arith.addf %81, %85 : vector<16x256xf32>
    %c17_i32 = arith.constant 17 : i32
    %87 = tpu.dynamic_rotate %5 by %c17_i32 dim 1 : vector<16x256xf32>, i32 -> vector<16x256xf32>
    %c16 = arith.constant 16 : index
    %c0_38 = arith.constant 0 : index
    %c0_39 = arith.constant 0 : index
    %88 = vector.load %arg2[%c16, %c0_38, %c0_39] : memref<49x16x256xf32, #tpu.memory_space<vmem>>, vector<1x16x256xf32>
    %89 = vector.shape_cast %88 : vector<1x16x256xf32> to vector<16x256xf32>
    %90 = arith.mulf %89, %87 : vector<16x256xf32>
    %91 = arith.addf %86, %90 : vector<16x256xf32>
    %c16_i32 = arith.constant 16 : i32
    %92 = tpu.dynamic_rotate %5 by %c16_i32 dim 1 : vector<16x256xf32>, i32 -> vector<16x256xf32>
    %c17 = arith.constant 17 : index
    %c0_40 = arith.constant 0 : index
    %c0_41 = arith.constant 0 : index
    %93 = vector.load %arg2[%c17, %c0_40, %c0_41] : memref<49x16x256xf32, #tpu.memory_space<vmem>>, vector<1x16x256xf32>
    %94 = vector.shape_cast %93 : vector<1x16x256xf32> to vector<16x256xf32>
    %95 = arith.mulf %94, %92 : vector<16x256xf32>
    %96 = arith.addf %91, %95 : vector<16x256xf32>
    %c15_i32 = arith.constant 15 : i32
    %97 = tpu.dynamic_rotate %5 by %c15_i32 dim 1 : vector<16x256xf32>, i32 -> vector<16x256xf32>
    %c18 = arith.constant 18 : index
    %c0_42 = arith.constant 0 : index
    %c0_43 = arith.constant 0 : index
    %98 = vector.load %arg2[%c18, %c0_42, %c0_43] : memref<49x16x256xf32, #tpu.memory_space<vmem>>, vector<1x16x256xf32>
    %99 = vector.shape_cast %98 : vector<1x16x256xf32> to vector<16x256xf32>
    %100 = arith.mulf %99, %97 : vector<16x256xf32>
    %101 = arith.addf %96, %100 : vector<16x256xf32>
    %c14_i32 = arith.constant 14 : i32
    %102 = tpu.dynamic_rotate %5 by %c14_i32 dim 1 : vector<16x256xf32>, i32 -> vector<16x256xf32>
    %c19 = arith.constant 19 : index
    %c0_44 = arith.constant 0 : index
    %c0_45 = arith.constant 0 : index
    %103 = vector.load %arg2[%c19, %c0_44, %c0_45] : memref<49x16x256xf32, #tpu.memory_space<vmem>>, vector<1x16x256xf32>
    %104 = vector.shape_cast %103 : vector<1x16x256xf32> to vector<16x256xf32>
    %105 = arith.mulf %104, %102 : vector<16x256xf32>
    %106 = arith.addf %101, %105 : vector<16x256xf32>
    %c13_i32 = arith.constant 13 : i32
    %107 = tpu.dynamic_rotate %5 by %c13_i32 dim 1 : vector<16x256xf32>, i32 -> vector<16x256xf32>
    %c20 = arith.constant 20 : index
    %c0_46 = arith.constant 0 : index
    %c0_47 = arith.constant 0 : index
    %108 = vector.load %arg2[%c20, %c0_46, %c0_47] : memref<49x16x256xf32, #tpu.memory_space<vmem>>, vector<1x16x256xf32>
    %109 = vector.shape_cast %108 : vector<1x16x256xf32> to vector<16x256xf32>
    %110 = arith.mulf %109, %107 : vector<16x256xf32>
    %111 = arith.addf %106, %110 : vector<16x256xf32>
    %c3_i32 = arith.constant 3 : i32
    %112 = tpu.dynamic_rotate %5 by %c3_i32 dim 1 : vector<16x256xf32>, i32 -> vector<16x256xf32>
    %c21 = arith.constant 21 : index
    %c0_48 = arith.constant 0 : index
    %c0_49 = arith.constant 0 : index
    %113 = vector.load %arg2[%c21, %c0_48, %c0_49] : memref<49x16x256xf32, #tpu.memory_space<vmem>>, vector<1x16x256xf32>
    %114 = vector.shape_cast %113 : vector<1x16x256xf32> to vector<16x256xf32>
    %115 = arith.mulf %114, %112 : vector<16x256xf32>
    %116 = arith.addf %111, %115 : vector<16x256xf32>
    %c2_i32 = arith.constant 2 : i32
    %117 = tpu.dynamic_rotate %5 by %c2_i32 dim 1 : vector<16x256xf32>, i32 -> vector<16x256xf32>
    %c22 = arith.constant 22 : index
    %c0_50 = arith.constant 0 : index
    %c0_51 = arith.constant 0 : index
    %118 = vector.load %arg2[%c22, %c0_50, %c0_51] : memref<49x16x256xf32, #tpu.memory_space<vmem>>, vector<1x16x256xf32>
    %119 = vector.shape_cast %118 : vector<1x16x256xf32> to vector<16x256xf32>
    %120 = arith.mulf %119, %117 : vector<16x256xf32>
    %121 = arith.addf %116, %120 : vector<16x256xf32>
    %c1_i32 = arith.constant 1 : i32
    %122 = tpu.dynamic_rotate %5 by %c1_i32 dim 1 : vector<16x256xf32>, i32 -> vector<16x256xf32>
    %c23 = arith.constant 23 : index
    %c0_52 = arith.constant 0 : index
    %c0_53 = arith.constant 0 : index
    %123 = vector.load %arg2[%c23, %c0_52, %c0_53] : memref<49x16x256xf32, #tpu.memory_space<vmem>>, vector<1x16x256xf32>
    %124 = vector.shape_cast %123 : vector<1x16x256xf32> to vector<16x256xf32>
    %125 = arith.mulf %124, %122 : vector<16x256xf32>
    %126 = arith.addf %121, %125 : vector<16x256xf32>
    %c24 = arith.constant 24 : index
    %c0_54 = arith.constant 0 : index
    %c0_55 = arith.constant 0 : index
    %127 = vector.load %arg2[%c24, %c0_54, %c0_55] : memref<49x16x256xf32, #tpu.memory_space<vmem>>, vector<1x16x256xf32>
    %128 = vector.shape_cast %127 : vector<1x16x256xf32> to vector<16x256xf32>
    %129 = arith.mulf %128, %5 : vector<16x256xf32>
    %130 = arith.addf %126, %129 : vector<16x256xf32>
    %c255_i32 = arith.constant 255 : i32
    %131 = tpu.dynamic_rotate %5 by %c255_i32 dim 1 : vector<16x256xf32>, i32 -> vector<16x256xf32>
    %c25 = arith.constant 25 : index
    %c0_56 = arith.constant 0 : index
    %c0_57 = arith.constant 0 : index
    %132 = vector.load %arg2[%c25, %c0_56, %c0_57] : memref<49x16x256xf32, #tpu.memory_space<vmem>>, vector<1x16x256xf32>
    %133 = vector.shape_cast %132 : vector<1x16x256xf32> to vector<16x256xf32>
    %134 = arith.mulf %133, %131 : vector<16x256xf32>
    %135 = arith.addf %130, %134 : vector<16x256xf32>
    %c254_i32 = arith.constant 254 : i32
    %136 = tpu.dynamic_rotate %5 by %c254_i32 dim 1 : vector<16x256xf32>, i32 -> vector<16x256xf32>
    %c26 = arith.constant 26 : index
    %c0_58 = arith.constant 0 : index
    %c0_59 = arith.constant 0 : index
    %137 = vector.load %arg2[%c26, %c0_58, %c0_59] : memref<49x16x256xf32, #tpu.memory_space<vmem>>, vector<1x16x256xf32>
    %138 = vector.shape_cast %137 : vector<1x16x256xf32> to vector<16x256xf32>
    %139 = arith.mulf %138, %136 : vector<16x256xf32>
    %140 = arith.addf %135, %139 : vector<16x256xf32>
    %c253_i32 = arith.constant 253 : i32
    %141 = tpu.dynamic_rotate %5 by %c253_i32 dim 1 : vector<16x256xf32>, i32 -> vector<16x256xf32>
    %c27 = arith.constant 27 : index
    %c0_60 = arith.constant 0 : index
    %c0_61 = arith.constant 0 : index
    %142 = vector.load %arg2[%c27, %c0_60, %c0_61] : memref<49x16x256xf32, #tpu.memory_space<vmem>>, vector<1x16x256xf32>
    %143 = vector.shape_cast %142 : vector<1x16x256xf32> to vector<16x256xf32>
    %144 = arith.mulf %143, %141 : vector<16x256xf32>
    %145 = arith.addf %140, %144 : vector<16x256xf32>
    %c243_i32 = arith.constant 243 : i32
    %146 = tpu.dynamic_rotate %5 by %c243_i32 dim 1 : vector<16x256xf32>, i32 -> vector<16x256xf32>
    %c28 = arith.constant 28 : index
    %c0_62 = arith.constant 0 : index
    %c0_63 = arith.constant 0 : index
    %147 = vector.load %arg2[%c28, %c0_62, %c0_63] : memref<49x16x256xf32, #tpu.memory_space<vmem>>, vector<1x16x256xf32>
    %148 = vector.shape_cast %147 : vector<1x16x256xf32> to vector<16x256xf32>
    %149 = arith.mulf %148, %146 : vector<16x256xf32>
    %150 = arith.addf %145, %149 : vector<16x256xf32>
    %c242_i32 = arith.constant 242 : i32
    %151 = tpu.dynamic_rotate %5 by %c242_i32 dim 1 : vector<16x256xf32>, i32 -> vector<16x256xf32>
    %c29 = arith.constant 29 : index
    %c0_64 = arith.constant 0 : index
    %c0_65 = arith.constant 0 : index
    %152 = vector.load %arg2[%c29, %c0_64, %c0_65] : memref<49x16x256xf32, #tpu.memory_space<vmem>>, vector<1x16x256xf32>
    %153 = vector.shape_cast %152 : vector<1x16x256xf32> to vector<16x256xf32>
    %154 = arith.mulf %153, %151 : vector<16x256xf32>
    %155 = arith.addf %150, %154 : vector<16x256xf32>
    %c241_i32 = arith.constant 241 : i32
    %156 = tpu.dynamic_rotate %5 by %c241_i32 dim 1 : vector<16x256xf32>, i32 -> vector<16x256xf32>
    %c30 = arith.constant 30 : index
    %c0_66 = arith.constant 0 : index
    %c0_67 = arith.constant 0 : index
    %157 = vector.load %arg2[%c30, %c0_66, %c0_67] : memref<49x16x256xf32, #tpu.memory_space<vmem>>, vector<1x16x256xf32>
    %158 = vector.shape_cast %157 : vector<1x16x256xf32> to vector<16x256xf32>
    %159 = arith.mulf %158, %156 : vector<16x256xf32>
    %160 = arith.addf %155, %159 : vector<16x256xf32>
    %c240_i32 = arith.constant 240 : i32
    %161 = tpu.dynamic_rotate %5 by %c240_i32 dim 1 : vector<16x256xf32>, i32 -> vector<16x256xf32>
    %c31 = arith.constant 31 : index
    %c0_68 = arith.constant 0 : index
    %c0_69 = arith.constant 0 : index
    %162 = vector.load %arg2[%c31, %c0_68, %c0_69] : memref<49x16x256xf32, #tpu.memory_space<vmem>>, vector<1x16x256xf32>
    %163 = vector.shape_cast %162 : vector<1x16x256xf32> to vector<16x256xf32>
    %164 = arith.mulf %163, %161 : vector<16x256xf32>
    %165 = arith.addf %160, %164 : vector<16x256xf32>
    %c239_i32 = arith.constant 239 : i32
    %166 = tpu.dynamic_rotate %5 by %c239_i32 dim 1 : vector<16x256xf32>, i32 -> vector<16x256xf32>
    %c32 = arith.constant 32 : index
    %c0_70 = arith.constant 0 : index
    %c0_71 = arith.constant 0 : index
    %167 = vector.load %arg2[%c32, %c0_70, %c0_71] : memref<49x16x256xf32, #tpu.memory_space<vmem>>, vector<1x16x256xf32>
    %168 = vector.shape_cast %167 : vector<1x16x256xf32> to vector<16x256xf32>
    %169 = arith.mulf %168, %166 : vector<16x256xf32>
    %170 = arith.addf %165, %169 : vector<16x256xf32>
    %c238_i32 = arith.constant 238 : i32
    %171 = tpu.dynamic_rotate %5 by %c238_i32 dim 1 : vector<16x256xf32>, i32 -> vector<16x256xf32>
    %c33 = arith.constant 33 : index
    %c0_72 = arith.constant 0 : index
    %c0_73 = arith.constant 0 : index
    %172 = vector.load %arg2[%c33, %c0_72, %c0_73] : memref<49x16x256xf32, #tpu.memory_space<vmem>>, vector<1x16x256xf32>
    %173 = vector.shape_cast %172 : vector<1x16x256xf32> to vector<16x256xf32>
    %174 = arith.mulf %173, %171 : vector<16x256xf32>
    %175 = arith.addf %170, %174 : vector<16x256xf32>
    %c237_i32 = arith.constant 237 : i32
    %176 = tpu.dynamic_rotate %5 by %c237_i32 dim 1 : vector<16x256xf32>, i32 -> vector<16x256xf32>
    %c34 = arith.constant 34 : index
    %c0_74 = arith.constant 0 : index
    %c0_75 = arith.constant 0 : index
    %177 = vector.load %arg2[%c34, %c0_74, %c0_75] : memref<49x16x256xf32, #tpu.memory_space<vmem>>, vector<1x16x256xf32>
    %178 = vector.shape_cast %177 : vector<1x16x256xf32> to vector<16x256xf32>
    %179 = arith.mulf %178, %176 : vector<16x256xf32>
    %180 = arith.addf %175, %179 : vector<16x256xf32>
    %c227_i32 = arith.constant 227 : i32
    %181 = tpu.dynamic_rotate %5 by %c227_i32 dim 1 : vector<16x256xf32>, i32 -> vector<16x256xf32>
    %c35 = arith.constant 35 : index
    %c0_76 = arith.constant 0 : index
    %c0_77 = arith.constant 0 : index
    %182 = vector.load %arg2[%c35, %c0_76, %c0_77] : memref<49x16x256xf32, #tpu.memory_space<vmem>>, vector<1x16x256xf32>
    %183 = vector.shape_cast %182 : vector<1x16x256xf32> to vector<16x256xf32>
    %184 = arith.mulf %183, %181 : vector<16x256xf32>
    %185 = arith.addf %180, %184 : vector<16x256xf32>
    %c226_i32 = arith.constant 226 : i32
    %186 = tpu.dynamic_rotate %5 by %c226_i32 dim 1 : vector<16x256xf32>, i32 -> vector<16x256xf32>
    %c36 = arith.constant 36 : index
    %c0_78 = arith.constant 0 : index
    %c0_79 = arith.constant 0 : index
    %187 = vector.load %arg2[%c36, %c0_78, %c0_79] : memref<49x16x256xf32, #tpu.memory_space<vmem>>, vector<1x16x256xf32>
    %188 = vector.shape_cast %187 : vector<1x16x256xf32> to vector<16x256xf32>
    %189 = arith.mulf %188, %186 : vector<16x256xf32>
    %190 = arith.addf %185, %189 : vector<16x256xf32>
    %c225_i32 = arith.constant 225 : i32
    %191 = tpu.dynamic_rotate %5 by %c225_i32 dim 1 : vector<16x256xf32>, i32 -> vector<16x256xf32>
    %c37 = arith.constant 37 : index
    %c0_80 = arith.constant 0 : index
    %c0_81 = arith.constant 0 : index
    %192 = vector.load %arg2[%c37, %c0_80, %c0_81] : memref<49x16x256xf32, #tpu.memory_space<vmem>>, vector<1x16x256xf32>
    %193 = vector.shape_cast %192 : vector<1x16x256xf32> to vector<16x256xf32>
    %194 = arith.mulf %193, %191 : vector<16x256xf32>
    %195 = arith.addf %190, %194 : vector<16x256xf32>
    %c224_i32 = arith.constant 224 : i32
    %196 = tpu.dynamic_rotate %5 by %c224_i32 dim 1 : vector<16x256xf32>, i32 -> vector<16x256xf32>
    %c38 = arith.constant 38 : index
    %c0_82 = arith.constant 0 : index
    %c0_83 = arith.constant 0 : index
    %197 = vector.load %arg2[%c38, %c0_82, %c0_83] : memref<49x16x256xf32, #tpu.memory_space<vmem>>, vector<1x16x256xf32>
    %198 = vector.shape_cast %197 : vector<1x16x256xf32> to vector<16x256xf32>
    %199 = arith.mulf %198, %196 : vector<16x256xf32>
    %200 = arith.addf %195, %199 : vector<16x256xf32>
    %c223_i32 = arith.constant 223 : i32
    %201 = tpu.dynamic_rotate %5 by %c223_i32 dim 1 : vector<16x256xf32>, i32 -> vector<16x256xf32>
    %c39 = arith.constant 39 : index
    %c0_84 = arith.constant 0 : index
    %c0_85 = arith.constant 0 : index
    %202 = vector.load %arg2[%c39, %c0_84, %c0_85] : memref<49x16x256xf32, #tpu.memory_space<vmem>>, vector<1x16x256xf32>
    %203 = vector.shape_cast %202 : vector<1x16x256xf32> to vector<16x256xf32>
    %204 = arith.mulf %203, %201 : vector<16x256xf32>
    %205 = arith.addf %200, %204 : vector<16x256xf32>
    %c222_i32 = arith.constant 222 : i32
    %206 = tpu.dynamic_rotate %5 by %c222_i32 dim 1 : vector<16x256xf32>, i32 -> vector<16x256xf32>
    %c40 = arith.constant 40 : index
    %c0_86 = arith.constant 0 : index
    %c0_87 = arith.constant 0 : index
    %207 = vector.load %arg2[%c40, %c0_86, %c0_87] : memref<49x16x256xf32, #tpu.memory_space<vmem>>, vector<1x16x256xf32>
    %208 = vector.shape_cast %207 : vector<1x16x256xf32> to vector<16x256xf32>
    %209 = arith.mulf %208, %206 : vector<16x256xf32>
    %210 = arith.addf %205, %209 : vector<16x256xf32>
    %c221_i32 = arith.constant 221 : i32
    %211 = tpu.dynamic_rotate %5 by %c221_i32 dim 1 : vector<16x256xf32>, i32 -> vector<16x256xf32>
    %c41 = arith.constant 41 : index
    %c0_88 = arith.constant 0 : index
    %c0_89 = arith.constant 0 : index
    %212 = vector.load %arg2[%c41, %c0_88, %c0_89] : memref<49x16x256xf32, #tpu.memory_space<vmem>>, vector<1x16x256xf32>
    %213 = vector.shape_cast %212 : vector<1x16x256xf32> to vector<16x256xf32>
    %214 = arith.mulf %213, %211 : vector<16x256xf32>
    %215 = arith.addf %210, %214 : vector<16x256xf32>
    %c211_i32 = arith.constant 211 : i32
    %216 = tpu.dynamic_rotate %5 by %c211_i32 dim 1 : vector<16x256xf32>, i32 -> vector<16x256xf32>
    %c42 = arith.constant 42 : index
    %c0_90 = arith.constant 0 : index
    %c0_91 = arith.constant 0 : index
    %217 = vector.load %arg2[%c42, %c0_90, %c0_91] : memref<49x16x256xf32, #tpu.memory_space<vmem>>, vector<1x16x256xf32>
    %218 = vector.shape_cast %217 : vector<1x16x256xf32> to vector<16x256xf32>
    %219 = arith.mulf %218, %216 : vector<16x256xf32>
    %220 = arith.addf %215, %219 : vector<16x256xf32>
    %c210_i32 = arith.constant 210 : i32
    %221 = tpu.dynamic_rotate %5 by %c210_i32 dim 1 : vector<16x256xf32>, i32 -> vector<16x256xf32>
    %c43 = arith.constant 43 : index
    %c0_92 = arith.constant 0 : index
    %c0_93 = arith.constant 0 : index
    %222 = vector.load %arg2[%c43, %c0_92, %c0_93] : memref<49x16x256xf32, #tpu.memory_space<vmem>>, vector<1x16x256xf32>
    %223 = vector.shape_cast %222 : vector<1x16x256xf32> to vector<16x256xf32>
    %224 = arith.mulf %223, %221 : vector<16x256xf32>
    %225 = arith.addf %220, %224 : vector<16x256xf32>
    %c209_i32 = arith.constant 209 : i32
    %226 = tpu.dynamic_rotate %5 by %c209_i32 dim 1 : vector<16x256xf32>, i32 -> vector<16x256xf32>
    %c44 = arith.constant 44 : index
    %c0_94 = arith.constant 0 : index
    %c0_95 = arith.constant 0 : index
    %227 = vector.load %arg2[%c44, %c0_94, %c0_95] : memref<49x16x256xf32, #tpu.memory_space<vmem>>, vector<1x16x256xf32>
    %228 = vector.shape_cast %227 : vector<1x16x256xf32> to vector<16x256xf32>
    %229 = arith.mulf %228, %226 : vector<16x256xf32>
    %230 = arith.addf %225, %229 : vector<16x256xf32>
    %c208_i32 = arith.constant 208 : i32
    %231 = tpu.dynamic_rotate %5 by %c208_i32 dim 1 : vector<16x256xf32>, i32 -> vector<16x256xf32>
    %c45 = arith.constant 45 : index
    %c0_96 = arith.constant 0 : index
    %c0_97 = arith.constant 0 : index
    %232 = vector.load %arg2[%c45, %c0_96, %c0_97] : memref<49x16x256xf32, #tpu.memory_space<vmem>>, vector<1x16x256xf32>
    %233 = vector.shape_cast %232 : vector<1x16x256xf32> to vector<16x256xf32>
    %234 = arith.mulf %233, %231 : vector<16x256xf32>
    %235 = arith.addf %230, %234 : vector<16x256xf32>
    %c207_i32 = arith.constant 207 : i32
    %236 = tpu.dynamic_rotate %5 by %c207_i32 dim 1 : vector<16x256xf32>, i32 -> vector<16x256xf32>
    %c46 = arith.constant 46 : index
    %c0_98 = arith.constant 0 : index
    %c0_99 = arith.constant 0 : index
    %237 = vector.load %arg2[%c46, %c0_98, %c0_99] : memref<49x16x256xf32, #tpu.memory_space<vmem>>, vector<1x16x256xf32>
    %238 = vector.shape_cast %237 : vector<1x16x256xf32> to vector<16x256xf32>
    %239 = arith.mulf %238, %236 : vector<16x256xf32>
    %240 = arith.addf %235, %239 : vector<16x256xf32>
    %c206_i32 = arith.constant 206 : i32
    %241 = tpu.dynamic_rotate %5 by %c206_i32 dim 1 : vector<16x256xf32>, i32 -> vector<16x256xf32>
    %c47 = arith.constant 47 : index
    %c0_100 = arith.constant 0 : index
    %c0_101 = arith.constant 0 : index
    %242 = vector.load %arg2[%c47, %c0_100, %c0_101] : memref<49x16x256xf32, #tpu.memory_space<vmem>>, vector<1x16x256xf32>
    %243 = vector.shape_cast %242 : vector<1x16x256xf32> to vector<16x256xf32>
    %244 = arith.mulf %243, %241 : vector<16x256xf32>
    %245 = arith.addf %240, %244 : vector<16x256xf32>
    %c205_i32 = arith.constant 205 : i32
    %246 = tpu.dynamic_rotate %5 by %c205_i32 dim 1 : vector<16x256xf32>, i32 -> vector<16x256xf32>
    %c48 = arith.constant 48 : index
    %c0_102 = arith.constant 0 : index
    %c0_103 = arith.constant 0 : index
    %247 = vector.load %arg2[%c48, %c0_102, %c0_103] : memref<49x16x256xf32, #tpu.memory_space<vmem>>, vector<1x16x256xf32>
    %248 = vector.shape_cast %247 : vector<1x16x256xf32> to vector<16x256xf32>
    %249 = arith.mulf %248, %246 : vector<16x256xf32>
    %250 = arith.addf %245, %249 : vector<16x256xf32>
    %251 = vector.extract_strided_slice %250 {offsets = [0, 0], sizes = [8, 256], strides = [1, 1]} : vector<16x256xf32> to vector<8x256xf32>
    %252 = vector.extract_strided_slice %250 {offsets = [8, 0], sizes = [8, 256], strides = [1, 1]} : vector<16x256xf32> to vector<8x256xf32>
    %253 = arith.addf %251, %252 : vector<8x256xf32>
    %c0_104 = arith.constant 0 : index
    %254 = memref.load %arg3[%c0_104] : memref<1xf32, #tpu.memory_space<smem>>
    %255 = vector.broadcast %254 : f32 to vector<8x256xf32>
    %256 = arith.addf %253, %255 : vector<8x256xf32>
    %257 = arith.negf %256 : vector<8x256xf32>
    %258 = math.exp %257 : vector<8x256xf32>
    %cst_105 = arith.constant 1.000000e+00 : f32
    %259 = vector.broadcast %cst_105 : f32 to vector<8x256xf32>
    %260 = arith.addf %259, %258 : vector<8x256xf32>
    %261 = arith.divf %259, %260 : vector<8x256xf32>
    %262 = arith.mulf %0, %0 : vector<8x32x256xf32>
    %263 = vector.shape_cast %261 : vector<8x256xf32> to vector<8x1x256xf32>
    %264 = vector.broadcast %263 : vector<8x1x256xf32> to vector<8x32x256xf32>
    %265 = arith.mulf %262, %264 : vector<8x32x256xf32>
    %cst_106 = arith.constant dense<0.000000e+00> : vector<8x32xf32>
    %266 = vector.multi_reduction <add>, %265, %cst_106 [2] : vector<8x32x256xf32> to vector<8x32xf32>
    %cst_107 = arith.constant 2.560000e+02 : f32
    %267 = vector.broadcast %cst_107 : f32 to vector<8x32xf32>
    %268 = arith.divf %266, %267 : vector<8x32xf32>
    %cst_108 = arith.constant dense<0xFF800000> : vector<8x32xf32>
    %269 = vector.multi_reduction <maximumf>, %265, %cst_108 [2] : vector<8x32x256xf32> to vector<8x32xf32>
    %270 = tpu.concatenate %268, %269 in 0 : vector<8x32xf32>, vector<8x32xf32> -> vector<16x32xf32>
    %c0_109 = arith.constant 0 : index
    %c0_110 = arith.constant 0 : index
    %271 = vector.load %arg4[%c0_109, %c0_110] : memref<32x2xf32, #tpu.memory_space<vmem>>, vector<32x2xf32>
    %cst_111 = arith.constant dense<0.000000e+00> : vector<16x2xf32>
    %272 = tpu.matmul %270, %271, %cst_111 {dimension_numbers = #tpu.dot_dimension_numbers<[1], [0], [0], [1], [0, 0, 1, 1], [], []>} : vector<16x32xf32>, vector<32x2xf32>, vector<16x2xf32> -> vector<16x2xf32>
    %c0_112 = arith.constant 0 : index
    %c0_113 = arith.constant 0 : index
    %273 = vector.load %arg5[%c0_112, %c0_113] : memref<1x2xf32, #tpu.memory_space<vmem>>, vector<1x2xf32>
    %274 = vector.broadcast %273 : vector<1x2xf32> to vector<16x2xf32>
    %275 = arith.addf %272, %274 : vector<16x2xf32>
    %cst_114 = arith.constant 0.000000e+00 : f32
    %276 = vector.broadcast %cst_114 : f32 to vector<16x2xf32>
    %277 = arith.maximumf %275, %276 : vector<16x2xf32>
    %c0_115 = arith.constant 0 : index
    %c0_116 = arith.constant 0 : index
    %278 = vector.load %arg6[%c0_115, %c0_116] : memref<2x32xf32, #tpu.memory_space<vmem>>, vector<2x32xf32>
    %cst_117 = arith.constant dense<0.000000e+00> : vector<16x32xf32>
    %279 = tpu.matmul %277, %278, %cst_117 {dimension_numbers = #tpu.dot_dimension_numbers<[1], [0], [0], [1], [0, 0, 1, 1], [], []>} : vector<16x2xf32>, vector<2x32xf32>, vector<16x32xf32> -> vector<16x32xf32>
    %c0_118 = arith.constant 0 : index
    %c0_119 = arith.constant 0 : index
    %280 = vector.load %arg7[%c0_118, %c0_119] : memref<1x32xf32, #tpu.memory_space<vmem>>, vector<1x32xf32>
    %281 = vector.broadcast %280 : vector<1x32xf32> to vector<16x32xf32>
    %282 = arith.addf %279, %281 : vector<16x32xf32>
    %283 = arith.negf %282 : vector<16x32xf32>
    %284 = math.exp %283 : vector<16x32xf32>
    %cst_120 = arith.constant 1.000000e+00 : f32
    %285 = vector.broadcast %cst_120 : f32 to vector<16x32xf32>
    %286 = arith.addf %285, %284 : vector<16x32xf32>
    %287 = arith.divf %285, %286 : vector<16x32xf32>
    %288 = vector.extract_strided_slice %287 {offsets = [0, 0], sizes = [8, 32], strides = [1, 1]} : vector<16x32xf32> to vector<8x32xf32>
    %289 = vector.extract_strided_slice %287 {offsets = [8, 0], sizes = [8, 32], strides = [1, 1]} : vector<16x32xf32> to vector<8x32xf32>
    %290 = arith.addf %288, %289 : vector<8x32xf32>
    %c0_121 = arith.constant 0 : index
    %c0_122 = arith.constant 0 : index
    %c0_123 = arith.constant 0 : index
    %291 = vector.load %arg1[%c0_121, %c0_122, %c0_123] : memref<8x32x256xf32, #tpu.memory_space<vmem>>, vector<8x32x256xf32>
    %292 = arith.mulf %291, %291 : vector<8x32x256xf32>
    %293 = vector.shape_cast %261 : vector<8x256xf32> to vector<8x1x256xf32>
    %294 = vector.broadcast %293 : vector<8x1x256xf32> to vector<8x32x256xf32>
    %295 = arith.mulf %292, %294 : vector<8x32x256xf32>
    %296 = arith.mulf %295, %295 : vector<8x32x256xf32>
    %297 = vector.shape_cast %290 : vector<8x32xf32> to vector<8x32x1xf32>
    %298 = vector.broadcast %297 : vector<8x32x1xf32> to vector<8x32x256xf32>
    %299 = arith.mulf %296, %298 : vector<8x32x256xf32>
    %c0_124 = arith.constant 0 : index
    %c0_125 = arith.constant 0 : index
    %c0_126 = arith.constant 0 : index
    %300 = vector.load %arg8[%c0_124, %c0_125, %c0_126] : memref<8x32x256xf32, #tpu.memory_space<vmem>>, vector<8x32x256xf32>
    tpu.vector_store %arg8[%c0_124, %c0_125, %c0_126], %299 {strides = array<i32>} : memref<8x32x256xf32, #tpu.memory_space<vmem>>, vector<8x32x256xf32>,
    return
  }
  func.func @transform_0(%arg0: i32) -> (i32, i32, i32) {
    %c0_i32 = arith.constant 0 : i32
    %c0_i32_0 = arith.constant 0 : i32
    %c0_i32_1 = arith.constant 0 : i32
    return %arg0, %c0_i32, %c0_i32_0 : i32, i32, i32
  }
  func.func @transform_1(%arg0: i32) -> (i32, i32, i32) {
    %c0_i32 = arith.constant 0 : i32
    %c0_i32_0 = arith.constant 0 : i32
    %c0_i32_1 = arith.constant 0 : i32
    %c0_i32_2 = arith.constant 0 : i32
    return %c0_i32, %c0_i32_0, %c0_i32_1 : i32, i32, i32
  }
  func.func @transform_2(%arg0: i32) -> i32 {
    %c0_i32 = arith.constant 0 : i32
    %c0_i32_0 = arith.constant 0 : i32
    return %c0_i32 : i32
  }
  func.func @transform_3(%arg0: i32) -> (i32, i32) {
    %c0_i32 = arith.constant 0 : i32
    %c0_i32_0 = arith.constant 0 : i32
    %c0_i32_1 = arith.constant 0 : i32
    return %c0_i32, %c0_i32_0 : i32, i32
  }
  func.func @transform_4(%arg0: i32) -> (i32, i32) {
    %c0_i32 = arith.constant 0 : i32
    %c0_i32_0 = arith.constant 0 : i32
    %c0_i32_1 = arith.constant 0 : i32
    return %c0_i32, %c0_i32_0 : i32, i32
  }
  func.func @transform_5(%arg0: i32) -> (i32, i32) {
    %c0_i32 = arith.constant 0 : i32
    %c0_i32_0 = arith.constant 0 : i32
    %c0_i32_1 = arith.constant 0 : i32
    return %c0_i32, %c0_i32_0 : i32, i32
  }
  func.func @transform_6(%arg0: i32) -> (i32, i32) {
    %c0_i32 = arith.constant 0 : i32
    %c0_i32_0 = arith.constant 0 : i32
    %c0_i32_1 = arith.constant 0 : i32
    return %c0_i32, %c0_i32_0 : i32, i32
  }
  func.func @transform_7(%arg0: i32) -> (i32, i32, i32) {
    %c0_i32 = arith.constant 0 : i32
    %c0_i32_0 = arith.constant 0 : i32
    %c0_i32_1 = arith.constant 0 : i32
    return %arg0, %c0_i32, %c0_i32_0 : i32, i32, i32
  }
}

</mosaic_0001>

<llo_original>
// kernel: tpu_custom_call.1
$region0: #{tpu_custom_call.1}
  #allocation0 [shape = 'u32[]', space=smem, size = 0x4, offset = 0x4, fixed_abs, tag = 'smem constant byte address 0x4 - core index']
  #allocation1 [shape = 'u32[72,128]{1,0:T(1,128)}', space=vmem, size = 0x9000, scoped, tag = 'internal scratch']
  #allocation2 [shape = 'f32[1]{0:T(128)S(6)}', space=smem, size = 0x200, scoped, tag = 'scoped memory for tpu_custom_call.1']
  %s0 = inlined_call_operand.hbm [shape: f32[8,32,256], index: 0, kind: input, shape index: {}]
  %s1 = inlined_call_operand.hbm [shape: f32[49,16,256], index: 1, kind: input, shape index: {}]
  %s2 = inlined_call_operand.<no memory space> [shape: f32[1], index: 2, kind: input, shape index: {}]
  %s3 = inlined_call_operand.vmem [shape: f32[32,2], index: 3, kind: input, shape index: {}]
  %s4 = inlined_call_operand.vmem [shape: f32[1,2], index: 4, kind: input, shape index: {}]
  %s5 = inlined_call_operand.vmem [shape: f32[2,32], index: 5, kind: input, shape index: {}]
  %s6 = inlined_call_operand.vmem [shape: f32[1,32], index: 6, kind: input, shape index: {}]
  %s7 = inlined_call_operand.hbm [shape: f32[8,32,256], index: 7, kind: output, shape index: {}]
  %s8 = sld [smem:[#allocation0]]
  $region46: #{tpu_custom_call.1} parent=0
    _
  %s10 = ssub.s32 1, %s8
  %s11 = scalar_select 0, %s10, %s8
  %12 = sst [smem:[#allocation2]] %s2
  $region1: #{tpu_custom_call.1} parent=0
    #allocation3 [shape = 'u8[262144]{0}', space=vmem, size = 0x40000, scoped, tag = 'input window, operand 0, single buffered']
    #allocation4 [shape = 's32[1]{0}', space=sflag, size = 0x4, scoped, tag = 'scoped memory for tpu_custom_call.1']
    #allocation5 [shape = 's32[1]{0}', space=sflag, size = 0x4, scoped, tag = 'scoped memory for tpu_custom_call.1']
    #allocation6 [shape = 'u8[802816]{0}', space=vmem, size = 0xc4000, scoped, tag = 'input window, operand 1, single buffered']
    #allocation7 [shape = 's32[1]{0}', space=sflag, size = 0x4, scoped, tag = 'scoped memory for tpu_custom_call.1']
    #allocation8 [shape = 'u8[262144]{0}', space=vmem, size = 0x40000, scoped, tag = 'output window, operand 0, single buffered']
    %13 = vsyncpa [#allocation4], 0
    %14 = vsyncpa [#allocation7], 0
    %15 = vsyncpa [#allocation5], 0
    // Predicated region
    $region2: #{tpu_custom_call.1} parent=1 // pred_check
      _
    $region3: #{tpu_custom_call.1} parent=1 // pred_check_branch
      %17 = sbr.rel (0) target = $region5
    $region4: #{tpu_custom_call.1} parent=1 // pred_region
      %19 = vsyncadd [#allocation4], 0
      %s20 = sshll.u32 %s0, 4
      %s21 = int_to_ptr.hbm [resolvable:$true] %s20
      %s22 = sshll.u32 [#allocation3], 4
      %s23 = int_to_ptr.vmem [resolvable:$true] %s22
      %28 = dma.hbm_to_vmem [thread:$0]  %s21, 8192, %s23, [#allocation4], 256, 256, 16
    $region5: #{tpu_custom_call.1} parent=1 // pred_fallthru
      _
    // Predicated region
    $region6: #{tpu_custom_call.1} parent=1 // pred_check
      _
    $region7: #{tpu_custom_call.1} parent=1 // pred_check_branch
      %30 = sbr.rel (0) target = $region9
    $region8: #{tpu_custom_call.1} parent=1 // pred_region
      %32 = vsyncadd [#allocation7], 0
      %s33 = sshll.u32 %s1, 4
      %s34 = int_to_ptr.hbm [resolvable:$true] %s33
      %s35 = sshll.u32 [#allocation6], 4
      %s36 = int_to_ptr.vmem [resolvable:$true] %s35
      %41 = dma.hbm_to_vmem [thread:$0]  %s34, 25088, %s36, [#allocation7], 256, 256, 16
    $region9: #{tpu_custom_call.1} parent=1 // pred_fallthru
      _
    // Predicated region
    $region10: #{tpu_custom_call.1} parent=1 // pred_check
      _
    $region11: #{tpu_custom_call.1} parent=1 // pred_check_branch
      %43 = sbr.rel (0) target = $region13
    $region12: #{tpu_custom_call.1} parent=1 // pred_region
      _
    $region13: #{tpu_custom_call.1} parent=1 // pred_fallthru
      _
    // Predicated region
    $region14: #{tpu_custom_call.1} parent=1 // pred_check
      _
    $region15: #{tpu_custom_call.1} parent=1 // pred_check_branch
      %45 = sbr.rel (0) target = $region17
    $region16: #{tpu_custom_call.1} parent=1 // pred_region
      _
    $region17: #{tpu_custom_call.1} parent=1 // pred_fallthru
      _
    // Predicated region
    $region18: #{tpu_custom_call.1} parent=1 // pred_check
      _
    $region19: #{tpu_custom_call.1} parent=1 // pred_check_branch
      %47 = sbr.rel (0) target = $region21
    $region20: #{tpu_custom_call.1} parent=1 // pred_region
      _
    $region21: #{tpu_custom_call.1} parent=1 // pred_fallthru
      _
    // Predicated region
    $region22: #{tpu_custom_call.1} parent=1 // pred_check
      _
    $region23: #{tpu_custom_call.1} parent=1 // pred_check_branch
      %49 = sbr.rel (0) target = $region25
    $region24: #{tpu_custom_call.1} parent=1 // pred_region
      _
    $region25: #{tpu_custom_call.1} parent=1 // pred_fallthru
      _
    // Predicated region
    $region26: #{tpu_custom_call.1} parent=1 // pred_check
      _
    $region27: #{tpu_custom_call.1} parent=1 // pred_check_branch
      %51 = sbr.rel (0) target = $region29
    $region28: #{tpu_custom_call.1} parent=1 // pred_region
      _
    $region29: #{tpu_custom_call.1} parent=1 // pred_fallthru
      _
    // Predicated region
    $region30: #{tpu_custom_call.1} parent=1 // pred_check
      _
    $region31: #{tpu_custom_call.1} parent=1 // pred_check_branch
      %53 = sbr.rel (0) target = $region33
    $region32: #{tpu_custom_call.1} parent=1 // pred_region
      %55 = dma.done [#allocation4], 8192
    $region33: #{tpu_custom_call.1} parent=1 // pred_fallthru
      _
    // Predicated region
    $region34: #{tpu_custom_call.1} parent=1 // pred_check
      _
    $region35: #{tpu_custom_call.1} parent=1 // pred_check_branch
      %57 = sbr.rel (0) target = $region37
    $region36: #{tpu_custom_call.1} parent=1 // pred_region
      %59 = dma.done [#allocation7], 25088
    $region37: #{tpu_custom_call.1} parent=1 // pred_fallthru
      _
    %v60 = vld [vmem:[#allocation3] sm:$0xff]
    %v61 = vld [vmem:[#allocation3 + $0x8] sm:$0xff]
    %v62 = vld [vmem:[#allocation3 + $0x10] sm:$0xff]
    %v63 = vld [vmem:[#allocation3 + $0x18] sm:$0xff]
    %v64 = vld [vmem:[#allocation3 + $0x20] sm:$0xff]
    %v65 = vld [vmem:[#allocation3 + $0x28] sm:$0xff]
    %v66 = vld [vmem:[#allocation3 + $0x30] sm:$0xff]
    %v67 = vld [vmem:[#allocation3 + $0x38] sm:$0xff]
    %v68 = vld [vmem:[#allocation3 + $0x40] sm:$0xff]
    %v69 = vld [vmem:[#allocation3 + $0x48] sm:$0xff]
    %v70 = vld [vmem:[#allocation3 + $0x50] sm:$0xff]
    %v71 = vld [vmem:[#allocation3 + $0x58] sm:$0xff]
    %v72 = vld [vmem:[#allocation3 + $0x60] sm:$0xff]
    %v73 = vld [vmem:[#allocation3 + $0x68] sm:$0xff]
    %v74 = vld [vmem:[#allocation3 + $0x70] sm:$0xff]
    %v75 = vld [vmem:[#allocation3 + $0x78] sm:$0xff]
    %v76 = vld [vmem:[#allocation3 + $0x80] sm:$0xff]
    %v77 = vld [vmem:[#allocation3 + $0x88] sm:$0xff]
    %v78 = vld [vmem:[#allocation3 + $0x90] sm:$0xff]
    %v79 = vld [vmem:[#allocation3 + $0x98] sm:$0xff]
    %v80 = vld [vmem:[#allocation3 + $0xa0] sm:$0xff]
    %v81 = vld [vmem:[#allocation3 + $0xa8] sm:$0xff]
    %v82 = vld [vmem:[#allocation3 + $0xb0] sm:$0xff]
    %v83 = vld [vmem:[#allocation3 + $0xb8] sm:$0xff]
    %v84 = vld [vmem:[#allocation3 + $0xc0] sm:$0xff]
    %v85 = vld [vmem:[#allocation3 + $0xc8] sm:$0xff]
    %v86 = vld [vmem:[#allocation3 + $0xd0] sm:$0xff]
    %v87 = vld [vmem:[#allocation3 + $0xd8] sm:$0xff]
    %v88 = vld [vmem:[#allocation3 + $0xe0] sm:$0xff]
    %v89 = vld [vmem:[#allocation3 + $0xe8] sm:$0xff]
    %v90 = vld [vmem:[#allocation3 + $0xf0] sm:$0xff]
    %v91 = vld [vmem:[#allocation3 + $0xf8] sm:$0xff]
    %v92 = vld [vmem:[#allocation3 + $0x100] sm:$0xff]
    %v93 = vld [vmem:[#allocation3 + $0x108] sm:$0xff]
    %v94 = vld [vmem:[#allocation3 + $0x110] sm:$0xff]
    %v95 = vld [vmem:[#allocation3 + $0x118] sm:$0xff]
    %v96 = vld [vmem:[#allocation3 + $0x120] sm:$0xff]
    %v97 = vld [vmem:[#allocation3 + $0x128] sm:$0xff]
    %v98 = vld [vmem:[#allocation3 + $0x130] sm:$0xff]
    %v99 = vld [vmem:[#allocation3 + $0x138] sm:$0xff]
    %v100 = vld [vmem:[#allocation3 + $0x140] sm:$0xff]
    %v101 = vld [vmem:[#allocation3 + $0x148] sm:$0xff]
    %v102 = vld [vmem:[#allocation3 + $0x150] sm:$0xff]
    %v103 = vld [vmem:[#allocation3 + $0x158] sm:$0xff]
    %v104 = vld [vmem:[#allocation3 + $0x160] sm:$0xff]
    %v105 = vld [vmem:[#allocation3 + $0x168] sm:$0xff]
    %v106 = vld [vmem:[#allocation3 + $0x170] sm:$0xff]
    %v107 = vld [vmem:[#allocation3 + $0x178] sm:$0xff]
    %v108 = vld [vmem:[#allocation3 + $0x180] sm:$0xff]
    %v109 = vld [vmem:[#allocation3 + $0x188] sm:$0xff]
    %v110 = vld [vmem:[#allocation3 + $0x190] sm:$0xff]
    %v111 = vld [vmem:[#allocation3 + $0x198] sm:$0xff]
    %v112 = vld [vmem:[#allocation3 + $0x1a0] sm:$0xff]
    %v113 = vld [vmem:[#allocation3 + $0x1a8] sm:$0xff]
    %v114 = vld [vmem:[#allocation3 + $0x1b0] sm:$0xff]
    %v115 = vld [vmem:[#allocation3 + $0x1b8] sm:$0xff]
    %v116 = vld [vmem:[#allocation3 + $0x1c0] sm:$0xff]
    %v117 = vld [vmem:[#allocation3 + $0x1c8] sm:$0xff]
    %v118 = vld [vmem:[#allocation3 + $0x1d0] sm:$0xff]
    %v119 = vld [vmem:[#allocation3 + $0x1d8] sm:$0xff]
    %v120 = vld [vmem:[#allocation3 + $0x1e0] sm:$0xff]
    %v121 = vld [vmem:[#allocation3 + $0x1e8] sm:$0xff]
    %v122 = vld [vmem:[#allocation3 + $0x1f0] sm:$0xff]
    %v123 = vld [vmem:[#allocation3 + $0x1f8] sm:$0xff]
    %v124 = vadd.f32 %v60, %v62
    %v125 = vadd.f32 %v124, %v64
    %v126 = vadd.f32 %v125, %v66
    %v127 = vrot.slane %v126, 4
    %v128 = vadd.f32 %v126, %v127
    %v129 = vrot.slane %v128, 2
    %v130 = vadd.f32 %v128, %v129
    %v131 = vrot.slane %v130, 1
    %v132 = vadd.f32 %v130, %v131
    %v133 = vadd.f32 %v61, %v63
    %v134 = vadd.f32 %v133, %v65
    %v135 = vadd.f32 %v134, %v67
    %v136 = vrot.slane %v135, 4
    %v137 = vadd.f32 %v135, %v136
    %v138 = vrot.slane %v137, 2
    %v139 = vadd.f32 %v137, %v138
    %v140 = vrot.slane %v139, 1
    %v141 = vadd.f32 %v139, %v140
    %v142 = vadd.f32 %v68, %v70
    %v143 = vadd.f32 %v142, %v72
    %v144 = vadd.f32 %v143, %v74
    %v145 = vrot.slane %v144, 4
    %v146 = vadd.f32 %v144, %v145
    %v147 = vrot.slane %v146, 2
    %v148 = vadd.f32 %v146, %v147
    %v149 = vrot.slane %v148, 1
    %v150 = vadd.f32 %v148, %v149
    %v151 = vadd.f32 %v69, %v71
    %v152 = vadd.f32 %v151, %v73
    %v153 = vadd.f32 %v152, %v75
    %v154 = vrot.slane %v153, 4
    %v155 = vadd.f32 %v153, %v154
    %v156 = vrot.slane %v155, 2
    %v157 = vadd.f32 %v155, %v156
    %v158 = vrot.slane %v157, 1
    %v159 = vadd.f32 %v157, %v158
    %v160 = vadd.f32 %v76, %v78
    %v161 = vadd.f32 %v160, %v80
    %v162 = vadd.f32 %v161, %v82
    %v163 = vrot.slane %v162, 4
    %v164 = vadd.f32 %v162, %v163
    %v165 = vrot.slane %v164, 2
    %v166 = vadd.f32 %v164, %v165
    %v167 = vrot.slane %v166, 1
    %v168 = vadd.f32 %v166, %v167
    %v169 = vadd.f32 %v77, %v79
    %v170 = vadd.f32 %v169, %v81
    %v171 = vadd.f32 %v170, %v83
    %v172 = vrot.slane %v171, 4
    %v173 = vadd.f32 %v171, %v172
    %v174 = vrot.slane %v173, 2
    %v175 = vadd.f32 %v173, %v174
    %v176 = vrot.slane %v175, 1
    %v177 = vadd.f32 %v175, %v176
    %v178 = vadd.f32 %v84, %v86
    %v179 = vadd.f32 %v178, %v88
    %v180 = vadd.f32 %v179, %v90
    %v181 = vrot.slane %v180, 4
    %v182 = vadd.f32 %v180, %v181
    %v183 = vrot.slane %v182, 2
    %v184 = vadd.f32 %v182, %v183
    %v185 = vrot.slane %v184, 1
    %v186 = vadd.f32 %v184, %v185
    %v187 = vadd.f32 %v85, %v87
    %v188 = vadd.f32 %v187, %v89
    %v189 = vadd.f32 %v188, %v91
    %v190 = vrot.slane %v189, 4
    %v191 = vadd.f32 %v189, %v190
    %v192 = vrot.slane %v191, 2
    %v193 = vadd.f32 %v191, %v192
    %v194 = vrot.slane %v193, 1
    %v195 = vadd.f32 %v193, %v194
    %v196 = vadd.f32 %v92, %v94
    %v197 = vadd.f32 %v196, %v96
    %v198 = vadd.f32 %v197, %v98
    %v199 = vrot.slane %v198, 4
    %v200 = vadd.f32 %v198, %v199
    %v201 = vrot.slane %v200, 2
    %v202 = vadd.f32 %v200, %v201
    %v203 = vrot.slane %v202, 1
    %v204 = vadd.f32 %v202, %v203
    %v205 = vadd.f32 %v93, %v95
    %v206 = vadd.f32 %v205, %v97
    %v207 = vadd.f32 %v206, %v99
    %v208 = vrot.slane %v207, 4
    %v209 = vadd.f32 %v207, %v208
    %v210 = vrot.slane %v209, 2
    %v211 = vadd.f32 %v209, %v210
    %v212 = vrot.slane %v211, 1
    %v213 = vadd.f32 %v211, %v212
    %v214 = vadd.f32 %v100, %v102
    %v215 = vadd.f32 %v214, %v104
    %v216 = vadd.f32 %v215, %v106
    %v217 = vrot.slane %v216, 4
    %v218 = vadd.f32 %v216, %v217
    %v219 = vrot.slane %v218, 2
    %v220 = vadd.f32 %v218, %v219
    %v221 = vrot.slane %v220, 1
    %v222 = vadd.f32 %v220, %v221
    %v223 = vadd.f32 %v101, %v103
    %v224 = vadd.f32 %v223, %v105
    %v225 = vadd.f32 %v224, %v107
    %v226 = vrot.slane %v225, 4
    %v227 = vadd.f32 %v225, %v226
    %v228 = vrot.slane %v227, 2
    %v229 = vadd.f32 %v227, %v228
    %v230 = vrot.slane %v229, 1
    %v231 = vadd.f32 %v229, %v230
    %v232 = vadd.f32 %v108, %v110
    %v233 = vadd.f32 %v232, %v112
    %v234 = vadd.f32 %v233, %v114
    %v235 = vrot.slane %v234, 4
    %v236 = vadd.f32 %v234, %v235
    %v237 = vrot.slane %v236, 2
    %v238 = vadd.f32 %v236, %v237
    %v239 = vrot.slane %v238, 1
    %v240 = vadd.f32 %v238, %v239
    %v241 = vadd.f32 %v109, %v111
    %v242 = vadd.f32 %v241, %v113
    %v243 = vadd.f32 %v242, %v115
    %v244 = vrot.slane %v243, 4
    %v245 = vadd.f32 %v243, %v244
    %v246 = vrot.slane %v245, 2
    %v247 = vadd.f32 %v245, %v246
    %v248 = vrot.slane %v247, 1
    %v249 = vadd.f32 %v247, %v248
    %v250 = vadd.f32 %v116, %v118
    %v251 = vadd.f32 %v250, %v120
    %v252 = vadd.f32 %v251, %v122
    %v253 = vrot.slane %v252, 4
    %v254 = vadd.f32 %v252, %v253
    %v255 = vrot.slane %v254, 2
    %v256 = vadd.f32 %v254, %v255
    %v257 = vrot.slane %v256, 1
    %v258 = vadd.f32 %v256, %v257
    %v259 = vadd.f32 %v117, %v119
    %v260 = vadd.f32 %v259, %v121
    %v261 = vadd.f32 %v260, %v123
    %v262 = vrot.slane %v261, 4
    %v263 = vadd.f32 %v261, %v262
    %v264 = vrot.slane %v263, 2
    %v265 = vadd.f32 %v263, %v264
    %v266 = vrot.slane %v265, 1
    %v267 = vadd.f32 %v265, %v266
    %v268 = vrcp.pop 32.0
    %v269 = vmul.f32 32.0, %v268
    %v270 = vsub.f32 1.0, %v269
    %v271 = vmul.f32 %v268, %v270
    %v272 = vadd.f32 %v268, %v271
    %vm273 = vweird.f32 %v268
    %v274 = vsel %vm273, %v268, %v272
    %v275 = vmul.f32 %v132, %v274
    %v276 = vmul.f32 %v141, %v274
    %v277 = vmul.f32 %v150, %v274
    %v278 = vmul.f32 %v159, %v274
    %v279 = vmul.f32 %v168, %v274
    %v280 = vmul.f32 %v177, %v274
    %v281 = vmul.f32 %v186, %v274
    %v282 = vmul.f32 %v195, %v274
    %v283 = vmul.f32 %v204, %v274
    %v284 = vmul.f32 %v213, %v274
    %v285 = vmul.f32 %v222, %v274
    %v286 = vmul.f32 %v231, %v274
    %v287 = vmul.f32 %v240, %v274
    %v288 = vmul.f32 %v249, %v274
    %v289 = vmul.f32 %v258, %v274
    %v290 = vmul.f32 %v267, %v274
    %v291 = vmax.f32 %v60, %v62
    %v292 = vmax.f32 %v291, %v64
    %v293 = vmax.f32 %v292, %v66
    %v294 = vrot.slane %v293, 4
    %v295 = vmax.f32 %v293, %v294
    %v296 = vrot.slane %v295, 2
    %v297 = vmax.f32 %v295, %v296
    %v298 = vrot.slane %v297, 1
    %v299 = vmax.f32 %v297, %v298
    %v300 = vmax.f32 %v61, %v63
    %v301 = vmax.f32 %v300, %v65
    %v302 = vmax.f32 %v301, %v67
    %v303 = vrot.slane %v302, 4
    %v304 = vmax.f32 %v302, %v303
    %v305 = vrot.slane %v304, 2
    %v306 = vmax.f32 %v304, %v305
    %v307 = vrot.slane %v306, 1
    %v308 = vmax.f32 %v306, %v307
    %v309 = vmax.f32 %v68, %v70
    %v310 = vmax.f32 %v309, %v72
    %v311 = vmax.f32 %v310, %v74
    %v312 = vrot.slane %v311, 4
    %v313 = vmax.f32 %v311, %v312
    %v314 = vrot.slane %v313, 2
    %v315 = vmax.f32 %v313, %v314
    %v316 = vrot.slane %v315, 1
    %v317 = vmax.f32 %v315, %v316
    %v318 = vmax.f32 %v69, %v71
    %v319 = vmax.f32 %v318, %v73
    %v320 = vmax.f32 %v319, %v75
    %v321 = vrot.slane %v320, 4
    %v322 = vmax.f32 %v320, %v321
    %v323 = vrot.slane %v322, 2
    %v324 = vmax.f32 %v322, %v323
    %v325 = vrot.slane %v324, 1
    %v326 = vmax.f32 %v324, %v325
    %v327 = vmax.f32 %v76, %v78
    %v328 = vmax.f32 %v327, %v80
    %v329 = vmax.f32 %v328, %v82
    %v330 = vrot.slane %v329, 4
    %v331 = vmax.f32 %v329, %v330
    %v332 = vrot.slane %v331, 2
    %v333 = vmax.f32 %v331, %v332
    %v334 = vrot.slane %v333, 1
    %v335 = vmax.f32 %v333, %v334
    %v336 = vmax.f32 %v77, %v79
    %v337 = vmax.f32 %v336, %v81
    %v338 = vmax.f32 %v337, %v83
    %v339 = vrot.slane %v338, 4
    %v340 = vmax.f32 %v338, %v339
    %v341 = vrot.slane %v340, 2
    %v342 = vmax.f32 %v340, %v341
    %v343 = vrot.slane %v342, 1
    %v344 = vmax.f32 %v342, %v343
    %v345 = vmax.f32 %v84, %v86
    %v346 = vmax.f32 %v345, %v88
    %v347 = vmax.f32 %v346, %v90
    %v348 = vrot.slane %v347, 4
    %v349 = vmax.f32 %v347, %v348
    %v350 = vrot.slane %v349, 2
    %v351 = vmax.f32 %v349, %v350
    %v352 = vrot.slane %v351, 1
    %v353 = vmax.f32 %v351, %v352
    %v354 = vmax.f32 %v85, %v87
    %v355 = vmax.f32 %v354, %v89
    %v356 = vmax.f32 %v355, %v91
    %v357 = vrot.slane %v356, 4
    %v358 = vmax.f32 %v356, %v357
    %v359 = vrot.slane %v358, 2
    %v360 = vmax.f32 %v358, %v359
    %v361 = vrot.slane %v360, 1
    %v362 = vmax.f32 %v360, %v361
    %v363 = vmax.f32 %v92, %v94
    %v364 = vmax.f32 %v363, %v96
    %v365 = vmax.f32 %v364, %v98
    %v366 = vrot.slane %v365, 4
    %v367 = vmax.f32 %v365, %v366
    %v368 = vrot.slane %v367, 2
    %v369 = vmax.f32 %v367, %v368
    %v370 = vrot.slane %v369, 1
    %v371 = vmax.f32 %v369, %v370
    %v372 = vmax.f32 %v93, %v95
    %v373 = vmax.f32 %v372, %v97
    %v374 = vmax.f32 %v373, %v99
    %v375 = vrot.slane %v374, 4
    %v376 = vmax.f32 %v374, %v375
    %v377 = vrot.slane %v376, 2
    %v378 = vmax.f32 %v376, %v377
    %v379 = vrot.slane %v378, 1
    %v380 = vmax.f32 %v378, %v379
    %v381 = vmax.f32 %v100, %v102
    %v382 = vmax.f32 %v381, %v104
    %v383 = vmax.f32 %v382, %v106
    %v384 = vrot.slane %v383, 4
    %v385 = vmax.f32 %v383, %v384
    %v386 = vrot.slane %v385, 2
    %v387 = vmax.f32 %v385, %v386
    %v388 = vrot.slane %v387, 1
    %v389 = vmax.f32 %v387, %v388
    %v390 = vmax.f32 %v101, %v103
    %v391 = vmax.f32 %v390, %v105
    %v392 = vmax.f32 %v391, %v107
    %v393 = vrot.slane %v392, 4
    %v394 = vmax.f32 %v392, %v393
    %v395 = vrot.slane %v394, 2
    %v396 = vmax.f32 %v394, %v395
    %v397 = vrot.slane %v396, 1
    %v398 = vmax.f32 %v396, %v397
    %v399 = vmax.f32 %v108, %v110
    %v400 = vmax.f32 %v399, %v112
    %v401 = vmax.f32 %v400, %v114
    %v402 = vrot.slane %v401, 4
    %v403 = vmax.f32 %v401, %v402
    %v404 = vrot.slane %v403, 2
    %v405 = vmax.f32 %v403, %v404
    %v406 = vrot.slane %v405, 1
    %v407 = vmax.f32 %v405, %v406
    %v408 = vmax.f32 %v109, %v111
    %v409 = vmax.f32 %v408, %v113
    %v410 = vmax.f32 %v409, %v115
    %v411 = vrot.slane %v410, 4
    %v412 = vmax.f32 %v410, %v411
    %v413 = vrot.slane %v412, 2
    %v414 = vmax.f32 %v412, %v413
    %v415 = vrot.slane %v414, 1
    %v416 = vmax.f32 %v414, %v415
    %v417 = vmax.f32 %v116, %v118
    %v418 = vmax.f32 %v417, %v120
    %v419 = vmax.f32 %v418, %v122
    %v420 = vrot.slane %v419, 4
    %v421 = vmax.f32 %v419, %v420
    %v422 = vrot.slane %v421, 2
    %v423 = vmax.f32 %v421, %v422
    %v424 = vrot.slane %v423, 1
    %v425 = vmax.f32 %v423, %v424
    %v426 = vmax.f32 %v117, %v119
    %v427 = vmax.f32 %v426, %v121
    %v428 = vmax.f32 %v427, %v123
    %v429 = vrot.slane %v428, 4
    %v430 = vmax.f32 %v428, %v429
    %v431 = vrot.slane %v430, 2
    %v432 = vmax.f32 %v430, %v431
    %v433 = vrot.slane %v432, 1
    %v434 = vmax.f32 %v432, %v433
    %vm451 = vcmask 1041409
    %v452 = vsel %vm451, %v277, %v275
    %vm453 = vcmask 1042434
    %v454 = vsel %vm453, %v279, %v452
    %vm455 = vcmask 1043459
    %v456 = vsel %vm455, %v281, %v454
    %vm457 = vcmask 1044484
    %v458 = vsel %vm457, %v283, %v456
    %vm459 = vcmask 1045509
    %v460 = vsel %vm459, %v285, %v458
    %vm461 = vcmask 1046534
    %v462 = vsel %vm461, %v287, %v460
    %vm463 = vcmask 1047559
    %v464 = vsel %vm463, %v289, %v462
    %v465 = vsel %vm451, %v278, %v276
    %v466 = vsel %vm453, %v280, %v465
    %v467 = vsel %vm455, %v282, %v466
    %v468 = vsel %vm457, %v284, %v467
    %v469 = vsel %vm459, %v286, %v468
    %v470 = vsel %vm461, %v288, %v469
    %v471 = vsel %vm463, %v290, %v470
    %v490 = vsel %vm451, %v317, %v299
    %v491 = vsel %vm453, %v335, %v490
    %v492 = vsel %vm455, %v353, %v491
    %v493 = vsel %vm457, %v371, %v492
    %v494 = vsel %vm459, %v389, %v493
    %v495 = vsel %vm461, %v407, %v494
    %v496 = vsel %vm463, %v425, %v495
    %v497 = vsel %vm451, %v326, %v308
    %v498 = vsel %vm453, %v344, %v497
    %v499 = vsel %vm455, %v362, %v498
    %v500 = vsel %vm457, %v380, %v499
    %v501 = vsel %vm459, %v398, %v500
    %v502 = vsel %vm461, %v416, %v501
    %v503 = vsel %vm463, %v434, %v502
    %506 = vrot.lane.b32.xlu0 %v464, 51
    %v507 = vpop.permute.xlu0 %506
    %508 = vrot.lane.b32.xlu0 %v496, 51
    %v509 = vpop.permute.xlu0 %508
    %510 = vrot.lane.b32.xlu0 %v471, 51
    %v511 = vpop.permute.xlu0 %510
    %512 = vrot.lane.b32.xlu0 %v503, 51
    %v513 = vpop.permute.xlu0 %512
    %v514 = vlaneseq
    %v515 = vand.u32 %v514, 127
    %vm516 = vcmp.lt.s32.totalorder %v515, 51
    %v517 = vsel %vm516, %v507, %v511
    %v518 = vsel %vm516, %v509, %v513
    %v519 = vsel %vm516, %v511, %v507
    %v520 = vsel %vm516, %v513, %v509
    %v521 = vld [vmem:[#allocation6] sm:$0xff]
    %v522 = vld [vmem:[#allocation6 + $0x8] sm:$0xff]
    %v523 = vld [vmem:[#allocation6 + $0x10] sm:$0xff]
    %v524 = vld [vmem:[#allocation6 + $0x18] sm:$0xff]
    %v525 = vmul.f32 %v521, %v519
    %v526 = vmul.f32 %v522, %v517
    %v527 = vmul.f32 %v523, %v520
    %v528 = vmul.f32 %v524, %v518
    %v529 = vadd.f32 %v525, 0.0
    %v530 = vadd.f32 %v526, 0.0
    %v531 = vadd.f32 %v527, 0.0
    %v532 = vadd.f32 %v528, 0.0
    %533 = vrot.lane.b32.xlu0 %v464, 50
    %v534 = vpop.permute.xlu0 %533
    %535 = vrot.lane.b32.xlu0 %v496, 50
    %v536 = vpop.permute.xlu0 %535
    %537 = vrot.lane.b32.xlu0 %v471, 50
    %v538 = vpop.permute.xlu0 %537
    %539 = vrot.lane.b32.xlu0 %v503, 50
    %v540 = vpop.permute.xlu0 %539
    %vm541 = vcmp.lt.s32.totalorder %v515, 50
    %v542 = vsel %vm541, %v534, %v538
    %v543 = vsel %vm541, %v536, %v540
    %v544 = vsel %vm541, %v538, %v534
    %v545 = vsel %vm541, %v540, %v536
    %s546 = scalar_lea.vmem [#allocation6], 32
    %v547 = vld [vmem:[%s546] sm:$0xff]
    %v548 = vld [vmem:[%s546 + $0x8] sm:$0xff]
    %v549 = vld [vmem:[%s546 + $0x10] sm:$0xff]
    %v550 = vld [vmem:[%s546 + $0x18] sm:$0xff]
    %v551 = vmul.f32 %v547, %v544
    %v552 = vmul.f32 %v548, %v542
    %v553 = vmul.f32 %v549, %v545
    %v554 = vmul.f32 %v550, %v543
    %v555 = vadd.f32 %v529, %v551
    %v556 = vadd.f32 %v530, %v552
    %v557 = vadd.f32 %v531, %v553
    %v558 = vadd.f32 %v532, %v554
    %559 = vrot.lane.b32.xlu0 %v464, 49
    %v560 = vpop.permute.xlu0 %559
    %561 = vrot.lane.b32.xlu0 %v496, 49
    %v562 = vpop.permute.xlu0 %561
    %563 = vrot.lane.b32.xlu0 %v471, 49
    %v564 = vpop.permute.xlu0 %563
    %565 = vrot.lane.b32.xlu0 %v503, 49
    %v566 = vpop.permute.xlu0 %565
    %vm567 = vcmp.lt.s32.totalorder %v515, 49
    %v568 = vsel %vm567, %v560, %v564
    %v569 = vsel %vm567, %v562, %v566
    %v570 = vsel %vm567, %v564, %v560
    %v571 = vsel %vm567, %v566, %v562
    %s572 = scalar_lea.vmem [#allocation6], 64
    %v573 = vld [vmem:[%s572] sm:$0xff]
    %v574 = vld [vmem:[%s572 + $0x8] sm:$0xff]
    %v575 = vld [vmem:[%s572 + $0x10] sm:$0xff]
    %v576 = vld [vmem:[%s572 + $0x18] sm:$0xff]
    %v577 = vmul.f32 %v573, %v570
    %v578 = vmul.f32 %v574, %v568
    %v579 = vmul.f32 %v575, %v571
    %v580 = vmul.f32 %v576, %v569
    %v581 = vadd.f32 %v555, %v577
    %v582 = vadd.f32 %v556, %v578
    %v583 = vadd.f32 %v557, %v579
    %v584 = vadd.f32 %v558, %v580
    %585 = vrot.lane.b32.xlu0 %v464, 48
    %v586 = vpop.permute.xlu0 %585
    %587 = vrot.lane.b32.xlu0 %v496, 48
    %v588 = vpop.permute.xlu0 %587
    %589 = vrot.lane.b32.xlu0 %v471, 48
    %v590 = vpop.permute.xlu0 %589
    %591 = vrot.lane.b32.xlu0 %v503, 48
    %v592 = vpop.permute.xlu0 %591
    %vm593 = vcmp.lt.s32.totalorder %v515, 48
    %v594 = vsel %vm593, %v586, %v590
    %v595 = vsel %vm593, %v588, %v592
    %v596 = vsel %vm593, %v590, %v586
    %v597 = vsel %vm593, %v592, %v588
    %s598 = scalar_lea.vmem [#allocation6], 96
    %v599 = vld [vmem:[%s598] sm:$0xff]
    %v600 = vld [vmem:[%s598 + $0x8] sm:$0xff]
    %v601 = vld [vmem:[%s598 + $0x10] sm:$0xff]
    %v602 = vld [vmem:[%s598 + $0x18] sm:$0xff]
    %v603 = vmul.f32 %v599, %v596
    %v604 = vmul.f32 %v600, %v594
    %v605 = vmul.f32 %v601, %v597
    %v606 = vmul.f32 %v602, %v595
    %v607 = vadd.f32 %v581, %v603
    %v608 = vadd.f32 %v582, %v604
    %v609 = vadd.f32 %v583, %v605
    %v610 = vadd.f32 %v584, %v606
    %611 = vrot.lane.b32.xlu0 %v464, 47
    %v612 = vpop.permute.xlu0 %611
    %613 = vrot.lane.b32.xlu0 %v496, 47
    %v614 = vpop.permute.xlu0 %613
    %615 = vrot.lane.b32.xlu0 %v471, 47
    %v616 = vpop.permute.xlu0 %615
    %617 = vrot.lane.b32.xlu0 %v503, 47
    %v618 = vpop.permute.xlu0 %617
    %vm619 = vcmp.lt.s32.totalorder %v515, 47
    %v620 = vsel %vm619, %v612, %v616
    %v621 = vsel %vm619, %v614, %v618
    %v622 = vsel %vm619, %v616, %v612
    %v623 = vsel %vm619, %v618, %v614
    %s624 = scalar_lea.vmem [#allocation6], 128
    %v625 = vld [vmem:[%s624] sm:$0xff]
    %v626 = vld [vmem:[%s624 + $0x8] sm:$0xff]
    %v627 = vld [vmem:[%s624 + $0x10] sm:$0xff]
    %v628 = vld [vmem:[%s624 + $0x18] sm:$0xff]
    %v629 = vmul.f32 %v625, %v622
    %v630 = vmul.f32 %v626, %v620
    %v631 = vmul.f32 %v627, %v623
    %v632 = vmul.f32 %v628, %v621
    %v633 = vadd.f32 %v607, %v629
    %v634 = vadd.f32 %v608, %v630
    %v635 = vadd.f32 %v609, %v631
    %v636 = vadd.f32 %v610, %v632
    %637 = vrot.lane.b32.xlu0 %v464, 46
    %v638 = vpop.permute.xlu0 %637
    %639 = vrot.lane.b32.xlu0 %v496, 46
    %v640 = vpop.permute.xlu0 %639
    %641 = vrot.lane.b32.xlu0 %v471, 46
    %v642 = vpop.permute.xlu0 %641
    %643 = vrot.lane.b32.xlu0 %v503, 46
    %v644 = vpop.permute.xlu0 %643
    %vm645 = vcmp.lt.s32.totalorder %v515, 46
    %v646 = vsel %vm645, %v638, %v642
    %v647 = vsel %vm645, %v640, %v644
    %v648 = vsel %vm645, %v642, %v638
    %v649 = vsel %vm645, %v644, %v640
    %s650 = scalar_lea.vmem [#allocation6], 160
    %v651 = vld [vmem:[%s650] sm:$0xff]
    %v652 = vld [vmem:[%s650 + $0x8] sm:$0xff]
    %v653 = vld [vmem:[%s650 + $0x10] sm:$0xff]
    %v654 = vld [vmem:[%s650 + $0x18] sm:$0xff]
    %v655 = vmul.f32 %v651, %v648
    %v656 = vmul.f32 %v652, %v646
    %v657 = vmul.f32 %v653, %v649
    %v658 = vmul.f32 %v654, %v647
    %v659 = vadd.f32 %v633, %v655
    %v660 = vadd.f32 %v634, %v656
    %v661 = vadd.f32 %v635, %v657
    %v662 = vadd.f32 %v636, %v658
    %663 = vrot.lane.b32.xlu0 %v464, 45
    %v664 = vpop.permute.xlu0 %663
    %665 = vrot.lane.b32.xlu0 %v496, 45
    %v666 = vpop.permute.xlu0 %665
    %667 = vrot.lane.b32.xlu0 %v471, 45
    %v668 = vpop.permute.xlu0 %667
    %669 = vrot.lane.b32.xlu0 %v503, 45
    %v670 = vpop.permute.xlu0 %669
    %vm671 = vcmp.lt.s32.totalorder %v515, 45
    %v672 = vsel %vm671, %v664, %v668
    %v673 = vsel %vm671, %v666, %v670
    %v674 = vsel %vm671, %v668, %v664
    %v675 = vsel %vm671, %v670, %v666
    %s676 = scalar_lea.vmem [#allocation6], 192
    %v677 = vld [vmem:[%s676] sm:$0xff]
    %v678 = vld [vmem:[%s676 + $0x8] sm:$0xff]
    %v679 = vld [vmem:[%s676 + $0x10] sm:$0xff]
    %v680 = vld [vmem:[%s676 + $0x18] sm:$0xff]
    %v681 = vmul.f32 %v677, %v674
    %v682 = vmul.f32 %v678, %v672
    %v683 = vmul.f32 %v679, %v675
    %v684 = vmul.f32 %v680, %v673
    %v685 = vadd.f32 %v659, %v681
    %v686 = vadd.f32 %v660, %v682
    %v687 = vadd.f32 %v661, %v683
    %v688 = vadd.f32 %v662, %v684
    %689 = vrot.lane.b32.xlu0 %v464, 35
    %v690 = vpop.permute.xlu0 %689
    %691 = vrot.lane.b32.xlu0 %v496, 35
    %v692 = vpop.permute.xlu0 %691
    %693 = vrot.lane.b32.xlu0 %v471, 35
    %v694 = vpop.permute.xlu0 %693
    %695 = vrot.lane.b32.xlu0 %v503, 35
    %v696 = vpop.permute.xlu0 %695
    %vm697 = vcmp.lt.s32.totalorder %v515, 35
    %v698 = vsel %vm697, %v690, %v694
    %v699 = vsel %vm697, %v692, %v696
    %v700 = vsel %vm697, %v694, %v690
    %v701 = vsel %vm697, %v696, %v692
    %s702 = scalar_lea.vmem [#allocation6], 224
    %v703 = vld [vmem:[%s702] sm:$0xff]
    %v704 = vld [vmem:[%s702 + $0x8] sm:$0xff]
    %v705 = vld [vmem:[%s702 + $0x10] sm:$0xff]
    %v706 = vld [vmem:[%s702 + $0x18] sm:$0xff]
    %v707 = vmul.f32 %v703, %v700
    %v708 = vmul.f32 %v704, %v698
    %v709 = vmul.f32 %v705, %v701
    %v710 = vmul.f32 %v706, %v699
    %v711 = vadd.f32 %v685, %v707
    %v712 = vadd.f32 %v686, %v708
    %v713 = vadd.f32 %v687, %v709
    %v714 = vadd.f32 %v688, %v710
    %715 = vrot.lane.b32.xlu0 %v464, 34
    %v716 = vpop.permute.xlu0 %715
    %717 = vrot.lane.b32.xlu0 %v496, 34
    %v718 = vpop.permute.xlu0 %717
    %719 = vrot.lane.b32.xlu0 %v471, 34
    %v720 = vpop.permute.xlu0 %719
    %721 = vrot.lane.b32.xlu0 %v503, 34
    %v722 = vpop.permute.xlu0 %721
    %vm723 = vcmp.lt.s32.totalorder %v515, 34
    %v724 = vsel %vm723, %v716, %v720
    %v725 = vsel %vm723, %v718, %v722
    %v726 = vsel %vm723, %v720, %v716
    %v727 = vsel %vm723, %v722, %v718
    %s728 = scalar_lea.vmem [#allocation6], 256
    %v729 = vld [vmem:[%s728] sm:$0xff]
    %v730 = vld [vmem:[%s728 + $0x8] sm:$0xff]
    %v731 = vld [vmem:[%s728 + $0x10] sm:$0xff]
    %v732 = vld [vmem:[%s728 + $0x18] sm:$0xff]
    %v733 = vmul.f32 %v729, %v726
    %v734 = vmul.f32 %v730, %v724
    %v735 = vmul.f32 %v731, %v727
    %v736 = vmul.f32 %v732, %v725
    %v737 = vadd.f32 %v711, %v733
    %v738 = vadd.f32 %v712, %v734
    %v739 = vadd.f32 %v713, %v735
    %v740 = vadd.f32 %v714, %v736
    %741 = vrot.lane.b32.xlu0 %v464, 33
    %v742 = vpop.permute.xlu0 %741
    %743 = vrot.lane.b32.xlu0 %v496, 33
    %v744 = vpop.permute.xlu0 %743
    %745 = vrot.lane.b32.xlu0 %v471, 33
    %v746 = vpop.permute.xlu0 %745
    %747 = vrot.lane.b32.xlu0 %v503, 33
    %v748 = vpop.permute.xlu0 %747
    %vm749 = vcmp.lt.s32.totalorder %v515, 33
    %v750 = vsel %vm749, %v742, %v746
    %v751 = vsel %vm749, %v744, %v748
    %v752 = vsel %vm749, %v746, %v742
    %v753 = vsel %vm749, %v748, %v744
    %s754 = scalar_lea.vmem [#allocation6], 288
    %v755 = vld [vmem:[%s754] sm:$0xff]
    %v756 = vld [vmem:[%s754 + $0x8] sm:$0xff]
    %v757 = vld [vmem:[%s754 + $0x10] sm:$0xff]
    %v758 = vld [vmem:[%s754 + $0x18] sm:$0xff]
    %v759 = vmul.f32 %v755, %v752
    %v760 = vmul.f32 %v756, %v750
    %v761 = vmul.f32 %v757, %v753
    %v762 = vmul.f32 %v758, %v751
    %v763 = vadd.f32 %v737, %v759
    %v764 = vadd.f32 %v738, %v760
    %v765 = vadd.f32 %v739, %v761
    %v766 = vadd.f32 %v740, %v762
    %767 = vrot.lane.b32.xlu0 %v464, 32
    %v768 = vpop.permute.xlu0 %767
    %769 = vrot.lane.b32.xlu0 %v496, 32
    %v770 = vpop.permute.xlu0 %769
    %771 = vrot.lane.b32.xlu0 %v471, 32
    %v772 = vpop.permute.xlu0 %771
    %773 = vrot.lane.b32.xlu0 %v503, 32
    %v774 = vpop.permute.xlu0 %773
    %vm775 = vcmp.lt.s32.totalorder %v515, 32
    %v776 = vsel %vm775, %v768, %v772
    %v777 = vsel %vm775, %v770, %v774
    %v778 = vsel %vm775, %v772, %v768
    %v779 = vsel %vm775, %v774, %v770
    %s780 = scalar_lea.vmem [#allocation6], 320
    %v781 = vld [vmem:[%s780] sm:$0xff]
    %v782 = vld [vmem:[%s780 + $0x8] sm:$0xff]
    %v783 = vld [vmem:[%s780 + $0x10] sm:$0xff]
    %v784 = vld [vmem:[%s780 + $0x18] sm:$0xff]
    %v785 = vmul.f32 %v781, %v778
    %v786 = vmul.f32 %v782, %v776
    %v787 = vmul.f32 %v783, %v779
    %v788 = vmul.f32 %v784, %v777
    %v789 = vadd.f32 %v763, %v785
    %v790 = vadd.f32 %v764, %v786
    %v791 = vadd.f32 %v765, %v787
    %v792 = vadd.f32 %v766, %v788
    %793 = vrot.lane.b32.xlu0 %v464, 31
    %v794 = vpop.permute.xlu0 %793
    %795 = vrot.lane.b32.xlu0 %v496, 31
    %v796 = vpop.permute.xlu0 %795
    %797 = vrot.lane.b32.xlu0 %v471, 31
    %v798 = vpop.permute.xlu0 %797
    %799 = vrot.lane.b32.xlu0 %v503, 31
    %v800 = vpop.permute.xlu0 %799
    %vm801 = vcmp.lt.s32.totalorder %v515, 31
    %v802 = vsel %vm801, %v794, %v798
    %v803 = vsel %vm801, %v796, %v800
    %v804 = vsel %vm801, %v798, %v794
    %v805 = vsel %vm801, %v800, %v796
    %s806 = scalar_lea.vmem [#allocation6], 352
    %v807 = vld [vmem:[%s806] sm:$0xff]
    %v808 = vld [vmem:[%s806 + $0x8] sm:$0xff]
    %v809 = vld [vmem:[%s806 + $0x10] sm:$0xff]
    %v810 = vld [vmem:[%s806 + $0x18] sm:$0xff]
    %v811 = vmul.f32 %v807, %v804
    %v812 = vmul.f32 %v808, %v802
    %v813 = vmul.f32 %v809, %v805
    %v814 = vmul.f32 %v810, %v803
    %v815 = vadd.f32 %v789, %v811
    %v816 = vadd.f32 %v790, %v812
    %v817 = vadd.f32 %v791, %v813
    %v818 = vadd.f32 %v792, %v814
    %819 = vrot.lane.b32.xlu0 %v464, 30
    %v820 = vpop.permute.xlu0 %819
    %821 = vrot.lane.b32.xlu0 %v496, 30
    %v822 = vpop.permute.xlu0 %821
    %823 = vrot.lane.b32.xlu0 %v471, 30
    %v824 = vpop.permute.xlu0 %823
    %825 = vrot.lane.b32.xlu0 %v503, 30
    %v826 = vpop.permute.xlu0 %825
    %vm827 = vcmp.lt.s32.totalorder %v515, 30
    %v828 = vsel %vm827, %v820, %v824
    %v829 = vsel %vm827, %v822, %v826
    %v830 = vsel %vm827, %v824, %v820
    %v831 = vsel %vm827, %v826, %v822
    %s832 = scalar_lea.vmem [#allocation6], 384
    %v833 = vld [vmem:[%s832] sm:$0xff]
    %v834 = vld [vmem:[%s832 + $0x8] sm:$0xff]
    %v835 = vld [vmem:[%s832 + $0x10] sm:$0xff]
    %v836 = vld [vmem:[%s832 + $0x18] sm:$0xff]
    %v837 = vmul.f32 %v833, %v830
    %v838 = vmul.f32 %v834, %v828
    %v839 = vmul.f32 %v835, %v831
    %v840 = vmul.f32 %v836, %v829
    %v841 = vadd.f32 %v815, %v837
    %v842 = vadd.f32 %v816, %v838
    %v843 = vadd.f32 %v817, %v839
    %v844 = vadd.f32 %v818, %v840
    %845 = vrot.lane.b32.xlu0 %v464, 29
    %v846 = vpop.permute.xlu0 %845
    %847 = vrot.lane.b32.xlu0 %v496, 29
    %v848 = vpop.permute.xlu0 %847
    %849 = vrot.lane.b32.xlu0 %v471, 29
    %v850 = vpop.permute.xlu0 %849
    %851 = vrot.lane.b32.xlu0 %v503, 29
    %v852 = vpop.permute.xlu0 %851
    %vm853 = vcmp.lt.s32.totalorder %v515, 29
    %v854 = vsel %vm853, %v846, %v850
    %v855 = vsel %vm853, %v848, %v852
    %v856 = vsel %vm853, %v850, %v846
    %v857 = vsel %vm853, %v852, %v848
    %s858 = scalar_lea.vmem [#allocation6], 416
    %v859 = vld [vmem:[%s858] sm:$0xff]
    %v860 = vld [vmem:[%s858 + $0x8] sm:$0xff]
    %v861 = vld [vmem:[%s858 + $0x10] sm:$0xff]
    %v862 = vld [vmem:[%s858 + $0x18] sm:$0xff]
    %v863 = vmul.f32 %v859, %v856
    %v864 = vmul.f32 %v860, %v854
    %v865 = vmul.f32 %v861, %v857
    %v866 = vmul.f32 %v862, %v855
    %v867 = vadd.f32 %v841, %v863
    %v868 = vadd.f32 %v842, %v864
    %v869 = vadd.f32 %v843, %v865
    %v870 = vadd.f32 %v844, %v866
    %871 = vrot.lane.b32.xlu0 %v464, 19
    %v872 = vpop.permute.xlu0 %871
    %873 = vrot.lane.b32.xlu0 %v496, 19
    %v874 = vpop.permute.xlu0 %873
    %875 = vrot.lane.b32.xlu0 %v471, 19
    %v876 = vpop.permute.xlu0 %875
    %877 = vrot.lane.b32.xlu0 %v503, 19
    %v878 = vpop.permute.xlu0 %877
    %vm879 = vcmp.lt.s32.totalorder %v515, 19
    %v880 = vsel %vm879, %v872, %v876
    %v881 = vsel %vm879, %v874, %v878
    %v882 = vsel %vm879, %v876, %v872
    %v883 = vsel %vm879, %v878, %v874
    %s884 = scalar_lea.vmem [#allocation6], 448
    %v885 = vld [vmem:[%s884] sm:$0xff]
    %v886 = vld [vmem:[%s884 + $0x8] sm:$0xff]
    %v887 = vld [vmem:[%s884 + $0x10] sm:$0xff]
    %v888 = vld [vmem:[%s884 + $0x18] sm:$0xff]
    %v889 = vmul.f32 %v885, %v882
    %v890 = vmul.f32 %v886, %v880
    %v891 = vmul.f32 %v887, %v883
    %v892 = vmul.f32 %v888, %v881
    %v893 = vadd.f32 %v867, %v889
    %v894 = vadd.f32 %v868, %v890
    %v895 = vadd.f32 %v869, %v891
    %v896 = vadd.f32 %v870, %v892
    %897 = vrot.lane.b32.xlu0 %v464, 18
    %v898 = vpop.permute.xlu0 %897
    %899 = vrot.lane.b32.xlu0 %v496, 18
    %v900 = vpop.permute.xlu0 %899
    %901 = vrot.lane.b32.xlu0 %v471, 18
    %v902 = vpop.permute.xlu0 %901
    %903 = vrot.lane.b32.xlu0 %v503, 18
    %v904 = vpop.permute.xlu0 %903
    %vm905 = vcmp.lt.s32.totalorder %v515, 18
    %v906 = vsel %vm905, %v898, %v902
    %v907 = vsel %vm905, %v900, %v904
    %v908 = vsel %vm905, %v902, %v898
    %v909 = vsel %vm905, %v904, %v900
    %s910 = scalar_lea.vmem [#allocation6], 480
    %v911 = vld [vmem:[%s910] sm:$0xff]
    %v912 = vld [vmem:[%s910 + $0x8] sm:$0xff]
    %v913 = vld [vmem:[%s910 + $0x10] sm:$0xff]
    %v914 = vld [vmem:[%s910 + $0x18] sm:$0xff]
    %v915 = vmul.f32 %v911, %v908
    %v916 = vmul.f32 %v912, %v906
    %v917 = vmul.f32 %v913, %v909
    %v918 = vmul.f32 %v914, %v907
    %v919 = vadd.f32 %v893, %v915
    %v920 = vadd.f32 %v894, %v916
    %v921 = vadd.f32 %v895, %v917
    %v922 = vadd.f32 %v896, %v918
    %923 = vrot.lane.b32.xlu0 %v464, 17
    %v924 = vpop.permute.xlu0 %923
    %925 = vrot.lane.b32.xlu0 %v496, 17
    %v926 = vpop.permute.xlu0 %925
    %927 = vrot.lane.b32.xlu0 %v471, 17
    %v928 = vpop.permute.xlu0 %927
    %929 = vrot.lane.b32.xlu0 %v503, 17
    %v930 = vpop.permute.xlu0 %929
    %vm931 = vcmp.lt.s32.totalorder %v515, 17
    %v932 = vsel %vm931, %v924, %v928
    %v933 = vsel %vm931, %v926, %v930
    %v934 = vsel %vm931, %v928, %v924
    %v935 = vsel %vm931, %v930, %v926
    %s936 = scalar_lea.vmem [#allocation6], 512
    %v937 = vld [vmem:[%s936] sm:$0xff]
    %v938 = vld [vmem:[%s936 + $0x8] sm:$0xff]
    %v939 = vld [vmem:[%s936 + $0x10] sm:$0xff]
    %v940 = vld [vmem:[%s936 + $0x18] sm:$0xff]
    %v941 = vmul.f32 %v937, %v934
    %v942 = vmul.f32 %v938, %v932
    %v943 = vmul.f32 %v939, %v935
    %v944 = vmul.f32 %v940, %v933
    %v945 = vadd.f32 %v919, %v941
    %v946 = vadd.f32 %v920, %v942
    %v947 = vadd.f32 %v921, %v943
    %v948 = vadd.f32 %v922, %v944
    %949 = vrot.lane.b32.xlu0 %v464, 16
    %v950 = vpop.permute.xlu0 %949
    %951 = vrot.lane.b32.xlu0 %v496, 16
    %v952 = vpop.permute.xlu0 %951
    %953 = vrot.lane.b32.xlu0 %v471, 16
    %v954 = vpop.permute.xlu0 %953
    %955 = vrot.lane.b32.xlu0 %v503, 16
    %v956 = vpop.permute.xlu0 %955
    %vm957 = vcmp.lt.s32.totalorder %v515, 16
    %v958 = vsel %vm957, %v950, %v954
    %v959 = vsel %vm957, %v952, %v956
    %v960 = vsel %vm957, %v954, %v950
    %v961 = vsel %vm957, %v956, %v952
    %s962 = scalar_lea.vmem [#allocation6], 544
    %v963 = vld [vmem:[%s962] sm:$0xff]
    %v964 = vld [vmem:[%s962 + $0x8] sm:$0xff]
    %v965 = vld [vmem:[%s962 + $0x10] sm:$0xff]
    %v966 = vld [vmem:[%s962 + $0x18] sm:$0xff]
    %v967 = vmul.f32 %v963, %v960
    %v968 = vmul.f32 %v964, %v958
    %v969 = vmul.f32 %v965, %v961
    %v970 = vmul.f32 %v966, %v959
    %v971 = vadd.f32 %v945, %v967
    %v972 = vadd.f32 %v946, %v968
    %v973 = vadd.f32 %v947, %v969
    %v974 = vadd.f32 %v948, %v970
    %975 = vrot.lane.b32.xlu0 %v464, 15
    %v976 = vpop.permute.xlu0 %975
    %977 = vrot.lane.b32.xlu0 %v496, 15
    %v978 = vpop.permute.xlu0 %977
    %979 = vrot.lane.b32.xlu0 %v471, 15
    %v980 = vpop.permute.xlu0 %979
    %981 = vrot.lane.b32.xlu0 %v503, 15
    %v982 = vpop.permute.xlu0 %981
    %vm983 = vcmp.lt.s32.totalorder %v515, 15
    %v984 = vsel %vm983, %v976, %v980
    %v985 = vsel %vm983, %v978, %v982
    %v986 = vsel %vm983, %v980, %v976
    %v987 = vsel %vm983, %v982, %v978
    %s988 = scalar_lea.vmem [#allocation6], 576
    %v989 = vld [vmem:[%s988] sm:$0xff]
    %v990 = vld [vmem:[%s988 + $0x8] sm:$0xff]
    %v991 = vld [vmem:[%s988 + $0x10] sm:$0xff]
    %v992 = vld [vmem:[%s988 + $0x18] sm:$0xff]
    %v993 = vmul.f32 %v989, %v986
    %v994 = vmul.f32 %v990, %v984
    %v995 = vmul.f32 %v991, %v987
    %v996 = vmul.f32 %v992, %v985
    %v997 = vadd.f32 %v971, %v993
    %v998 = vadd.f32 %v972, %v994
    %v999 = vadd.f32 %v973, %v995
    %v1000 = vadd.f32 %v974, %v996
    %1001 = vrot.lane.b32.xlu0 %v464, 14
    %v1002 = vpop.permute.xlu0 %1001
    %1003 = vrot.lane.b32.xlu0 %v496, 14
    %v1004 = vpop.permute.xlu0 %1003
    %1005 = vrot.lane.b32.xlu0 %v471, 14
    %v1006 = vpop.permute.xlu0 %1005
    %1007 = vrot.lane.b32.xlu0 %v503, 14
    %v1008 = vpop.permute.xlu0 %1007
    %vm1009 = vcmp.lt.s32.totalorder %v515, 14
    %v1010 = vsel %vm1009, %v1002, %v1006
    %v1011 = vsel %vm1009, %v1004, %v1008
    %v1012 = vsel %vm1009, %v1006, %v1002
    %v1013 = vsel %vm1009, %v1008, %v1004
    %s1014 = scalar_lea.vmem [#allocation6], 608
    %v1015 = vld [vmem:[%s1014] sm:$0xff]
    %v1016 = vld [vmem:[%s1014 + $0x8] sm:$0xff]
    %v1017 = vld [vmem:[%s1014 + $0x10] sm:$0xff]
    %v1018 = vld [vmem:[%s1014 + $0x18] sm:$0xff]
    %v1019 = vmul.f32 %v1015, %v1012
    %v1020 = vmul.f32 %v1016, %v1010
    %v1021 = vmul.f32 %v1017, %v1013
    %v1022 = vmul.f32 %v1018, %v1011
    %v1023 = vadd.f32 %v997, %v1019
    %v1024 = vadd.f32 %v998, %v1020
    %v1025 = vadd.f32 %v999, %v1021
    %v1026 = vadd.f32 %v1000, %v1022
    %1027 = vrot.lane.b32.xlu0 %v464, 13
    %v1028 = vpop.permute.xlu0 %1027
    %1029 = vrot.lane.b32.xlu0 %v496, 13
    %v1030 = vpop.permute.xlu0 %1029
    %1031 = vrot.lane.b32.xlu0 %v471, 13
    %v1032 = vpop.permute.xlu0 %1031
    %1033 = vrot.lane.b32.xlu0 %v503, 13
    %v1034 = vpop.permute.xlu0 %1033
    %vm1035 = vcmp.lt.s32.totalorder %v515, 13
    %v1036 = vsel %vm1035, %v1028, %v1032
    %v1037 = vsel %vm1035, %v1030, %v1034
    %v1038 = vsel %vm1035, %v1032, %v1028
    %v1039 = vsel %vm1035, %v1034, %v1030
    %s1040 = scalar_lea.vmem [#allocation6], 640
    %v1041 = vld [vmem:[%s1040] sm:$0xff]
    %v1042 = vld [vmem:[%s1040 + $0x8] sm:$0xff]
    %v1043 = vld [vmem:[%s1040 + $0x10] sm:$0xff]
    %v1044 = vld [vmem:[%s1040 + $0x18] sm:$0xff]
    %v1045 = vmul.f32 %v1041, %v1038
    %v1046 = vmul.f32 %v1042, %v1036
    %v1047 = vmul.f32 %v1043, %v1039
    %v1048 = vmul.f32 %v1044, %v1037
    %v1049 = vadd.f32 %v1023, %v1045
    %v1050 = vadd.f32 %v1024, %v1046
    %v1051 = vadd.f32 %v1025, %v1047
    %v1052 = vadd.f32 %v1026, %v1048
    %1053 = vrot.lane.b32.xlu0 %v464, 3
    %v1054 = vpop.permute.xlu0 %1053
    %1055 = vrot.lane.b32.xlu0 %v496, 3
    %v1056 = vpop.permute.xlu0 %1055
    %1057 = vrot.lane.b32.xlu0 %v471, 3
    %v1058 = vpop.permute.xlu0 %1057
    %1059 = vrot.lane.b32.xlu0 %v503, 3
    %v1060 = vpop.permute.xlu0 %1059
    %vm1061 = vcmp.lt.s32.totalorder %v515, 3
    %v1062 = vsel %vm1061, %v1054, %v1058
    %v1063 = vsel %vm1061, %v1056, %v1060
    %v1064 = vsel %vm1061, %v1058, %v1054
    %v1065 = vsel %vm1061, %v1060, %v1056
    %s1066 = scalar_lea.vmem [#allocation6], 672
    %v1067 = vld [vmem:[%s1066] sm:$0xff]
    %v1068 = vld [vmem:[%s1066 + $0x8] sm:$0xff]
    %v1069 = vld [vmem:[%s1066 + $0x10] sm:$0xff]
    %v1070 = vld [vmem:[%s1066 + $0x18] sm:$0xff]
    %v1071 = vmul.f32 %v1067, %v1064
    %v1072 = vmul.f32 %v1068, %v1062
    %v1073 = vmul.f32 %v1069, %v1065
    %v1074 = vmul.f32 %v1070, %v1063
    %v1075 = vadd.f32 %v1049, %v1071
    %v1076 = vadd.f32 %v1050, %v1072
    %v1077 = vadd.f32 %v1051, %v1073
    %v1078 = vadd.f32 %v1052, %v1074
    %1079 = vrot.lane.b32.xlu0 %v464, 2
    %v1080 = vpop.permute.xlu0 %1079
    %1081 = vrot.lane.b32.xlu0 %v496, 2
    %v1082 = vpop.permute.xlu0 %1081
    %1083 = vrot.lane.b32.xlu0 %v471, 2
    %v1084 = vpop.permute.xlu0 %1083
    %1085 = vrot.lane.b32.xlu0 %v503, 2
    %v1086 = vpop.permute.xlu0 %1085
    %vm1087 = vcmp.lt.s32.totalorder %v515, 2
    %v1088 = vsel %vm1087, %v1080, %v1084
    %v1089 = vsel %vm1087, %v1082, %v1086
    %v1090 = vsel %vm1087, %v1084, %v1080
    %v1091 = vsel %vm1087, %v1086, %v1082
    %s1092 = scalar_lea.vmem [#allocation6], 704
    %v1093 = vld [vmem:[%s1092] sm:$0xff]
    %v1094 = vld [vmem:[%s1092 + $0x8] sm:$0xff]
    %v1095 = vld [vmem:[%s1092 + $0x10] sm:$0xff]
    %v1096 = vld [vmem:[%s1092 + $0x18] sm:$0xff]
    %v1097 = vmul.f32 %v1093, %v1090
    %v1098 = vmul.f32 %v1094, %v1088
    %v1099 = vmul.f32 %v1095, %v1091
    %v1100 = vmul.f32 %v1096, %v1089
    %v1101 = vadd.f32 %v1075, %v1097
    %v1102 = vadd.f32 %v1076, %v1098
    %v1103 = vadd.f32 %v1077, %v1099
    %v1104 = vadd.f32 %v1078, %v1100
    %1105 = vrot.lane.b32.xlu0 %v464, 1
    %v1106 = vpop.permute.xlu0 %1105
    %1107 = vrot.lane.b32.xlu0 %v496, 1
    %v1108 = vpop.permute.xlu0 %1107
    %1109 = vrot.lane.b32.xlu0 %v471, 1
    %v1110 = vpop.permute.xlu0 %1109
    %1111 = vrot.lane.b32.xlu0 %v503, 1
    %v1112 = vpop.permute.xlu0 %1111
    %vm1113 = vcmp.lt.s32.totalorder %v515, 1
    %v1114 = vsel %vm1113, %v1106, %v1110
    %v1115 = vsel %vm1113, %v1108, %v1112
    %v1116 = vsel %vm1113, %v1110, %v1106
    %v1117 = vsel %vm1113, %v1112, %v1108
    %s1118 = scalar_lea.vmem [#allocation6], 736
    %v1119 = vld [vmem:[%s1118] sm:$0xff]
    %v1120 = vld [vmem:[%s1118 + $0x8] sm:$0xff]
    %v1121 = vld [vmem:[%s1118 + $0x10] sm:$0xff]
    %v1122 = vld [vmem:[%s1118 + $0x18] sm:$0xff]
    %v1123 = vmul.f32 %v1119, %v1116
    %v1124 = vmul.f32 %v1120, %v1114
    %v1125 = vmul.f32 %v1121, %v1117
    %v1126 = vmul.f32 %v1122, %v1115
    %v1127 = vadd.f32 %v1101, %v1123
    %v1128 = vadd.f32 %v1102, %v1124
    %v1129 = vadd.f32 %v1103, %v1125
    %v1130 = vadd.f32 %v1104, %v1126
    %s1131 = scalar_lea.vmem [#allocation6], 768
    %v1132 = vld [vmem:[%s1131] sm:$0xff]
    %v1133 = vld [vmem:[%s1131 + $0x8] sm:$0xff]
    %v1134 = vld [vmem:[%s1131 + $0x10] sm:$0xff]
    %v1135 = vld [vmem:[%s1131 + $0x18] sm:$0xff]
    %v1136 = vmul.f32 %v1132, %v464
    %v1137 = vmul.f32 %v1133, %v471
    %v1138 = vmul.f32 %v1134, %v496
    %v1139 = vmul.f32 %v1135, %v503
    %v1140 = vadd.f32 %v1127, %v1136
    %v1141 = vadd.f32 %v1128, %v1137
    %v1142 = vadd.f32 %v1129, %v1138
    %v1143 = vadd.f32 %v1130, %v1139
    %1144 = vrot.lane.b32.xlu0 %v464, 127
    %v1145 = vpop.permute.xlu0 %1144
    %1146 = vrot.lane.b32.xlu0 %v496, 127
    %v1147 = vpop.permute.xlu0 %1146
    %1148 = vrot.lane.b32.xlu0 %v471, 127
    %v1149 = vpop.permute.xlu0 %1148
    %1150 = vrot.lane.b32.xlu0 %v503, 127
    %v1151 = vpop.permute.xlu0 %1150
    %vm1152 = vcmp.lt.s32.totalorder %v515, 127
    %v1153 = vsel %vm1152, %v1145, %v1149
    %v1154 = vsel %vm1152, %v1147, %v1151
    %v1155 = vsel %vm1152, %v1149, %v1145
    %v1156 = vsel %vm1152, %v1151, %v1147
    %s1157 = scalar_lea.vmem [#allocation6], 800
    %v1158 = vld [vmem:[%s1157] sm:$0xff]
    %v1159 = vld [vmem:[%s1157 + $0x8] sm:$0xff]
    %v1160 = vld [vmem:[%s1157 + $0x10] sm:$0xff]
    %v1161 = vld [vmem:[%s1157 + $0x18] sm:$0xff]
    %v1162 = vmul.f32 %v1158, %v1153
    %v1163 = vmul.f32 %v1159, %v1155
    %v1164 = vmul.f32 %v1160, %v1154
    %v1165 = vmul.f32 %v1161, %v1156
    %v1166 = vadd.f32 %v1140, %v1162
    %v1167 = vadd.f32 %v1141, %v1163
    %v1168 = vadd.f32 %v1142, %v1164
    %v1169 = vadd.f32 %v1143, %v1165
    %1170 = vrot.lane.b32.xlu0 %v464, 126
    %v1171 = vpop.permute.xlu0 %1170
    %1172 = vrot.lane.b32.xlu0 %v496, 126
    %v1173 = vpop.permute.xlu0 %1172
    %1174 = vrot.lane.b32.xlu0 %v471, 126
    %v1175 = vpop.permute.xlu0 %1174
    %1176 = vrot.lane.b32.xlu0 %v503, 126
    %v1177 = vpop.permute.xlu0 %1176
    %vm1178 = vcmp.lt.s32.totalorder %v515, 126
    %v1179 = vsel %vm1178, %v1171, %v1175
    %v1180 = vsel %vm1178, %v1173, %v1177
    %v1181 = vsel %vm1178, %v1175, %v1171
    %v1182 = vsel %vm1178, %v1177, %v1173
    %s1183 = scalar_lea.vmem [#allocation6], 832
    %v1184 = vld [vmem:[%s1183] sm:$0xff]
    %v1185 = vld [vmem:[%s1183 + $0x8] sm:$0xff]
    %v1186 = vld [vmem:[%s1183 + $0x10] sm:$0xff]
    %v1187 = vld [vmem:[%s1183 + $0x18] sm:$0xff]
    %v1188 = vmul.f32 %v1184, %v1179
    %v1189 = vmul.f32 %v1185, %v1181
    %v1190 = vmul.f32 %v1186, %v1180
    %v1191 = vmul.f32 %v1187, %v1182
    %v1192 = vadd.f32 %v1166, %v1188
    %v1193 = vadd.f32 %v1167, %v1189
    %v1194 = vadd.f32 %v1168, %v1190
    %v1195 = vadd.f32 %v1169, %v1191
    %1196 = vrot.lane.b32.xlu0 %v464, 125
    %v1197 = vpop.permute.xlu0 %1196
    %1198 = vrot.lane.b32.xlu0 %v496, 125
    %v1199 = vpop.permute.xlu0 %1198
    %1200 = vrot.lane.b32.xlu0 %v471, 125
    %v1201 = vpop.permute.xlu0 %1200
    %1202 = vrot.lane.b32.xlu0 %v503, 125
    %v1203 = vpop.permute.xlu0 %1202
    %vm1204 = vcmp.lt.s32.totalorder %v515, 125
    %v1205 = vsel %vm1204, %v1197, %v1201
    %v1206 = vsel %vm1204, %v1199, %v1203
    %v1207 = vsel %vm1204, %v1201, %v1197
    %v1208 = vsel %vm1204, %v1203, %v1199
    %s1209 = scalar_lea.vmem [#allocation6], 864
    %v1210 = vld [vmem:[%s1209] sm:$0xff]
    %v1211 = vld [vmem:[%s1209 + $0x8] sm:$0xff]
    %v1212 = vld [vmem:[%s1209 + $0x10] sm:$0xff]
    %v1213 = vld [vmem:[%s1209 + $0x18] sm:$0xff]
    %v1214 = vmul.f32 %v1210, %v1205
    %v1215 = vmul.f32 %v1211, %v1207
    %v1216 = vmul.f32 %v1212, %v1206
    %v1217 = vmul.f32 %v1213, %v1208
    %v1218 = vadd.f32 %v1192, %v1214
    %v1219 = vadd.f32 %v1193, %v1215
    %v1220 = vadd.f32 %v1194, %v1216
    %v1221 = vadd.f32 %v1195, %v1217
    %1222 = vrot.lane.b32.xlu0 %v464, 115
    %v1223 = vpop.permute.xlu0 %1222
    %1224 = vrot.lane.b32.xlu0 %v496, 115
    %v1225 = vpop.permute.xlu0 %1224
    %1226 = vrot.lane.b32.xlu0 %v471, 115
    %v1227 = vpop.permute.xlu0 %1226
    %1228 = vrot.lane.b32.xlu0 %v503, 115
    %v1229 = vpop.permute.xlu0 %1228
    %vm1230 = vcmp.lt.s32.totalorder %v515, 115
    %v1231 = vsel %vm1230, %v1223, %v1227
    %v1232 = vsel %vm1230, %v1225, %v1229
    %v1233 = vsel %vm1230, %v1227, %v1223
    %v1234 = vsel %vm1230, %v1229, %v1225
    %s1235 = scalar_lea.vmem [#allocation6], 896
    %v1236 = vld [vmem:[%s1235] sm:$0xff]
    %v1237 = vld [vmem:[%s1235 + $0x8] sm:$0xff]
    %v1238 = vld [vmem:[%s1235 + $0x10] sm:$0xff]
    %v1239 = vld [vmem:[%s1235 + $0x18] sm:$0xff]
    %v1240 = vmul.f32 %v1236, %v1231
    %v1241 = vmul.f32 %v1237, %v1233
    %v1242 = vmul.f32 %v1238, %v1232
    %v1243 = vmul.f32 %v1239, %v1234
    %v1244 = vadd.f32 %v1218, %v1240
    %v1245 = vadd.f32 %v1219, %v1241
    %v1246 = vadd.f32 %v1220, %v1242
    %v1247 = vadd.f32 %v1221, %v1243
    %1248 = vrot.lane.b32.xlu0 %v464, 114
    %v1249 = vpop.permute.xlu0 %1248
    %1250 = vrot.lane.b32.xlu0 %v496, 114
    %v1251 = vpop.permute.xlu0 %1250
    %1252 = vrot.lane.b32.xlu0 %v471, 114
    %v1253 = vpop.permute.xlu0 %1252
    %1254 = vrot.lane.b32.xlu0 %v503, 114
    %v1255 = vpop.permute.xlu0 %1254
    %vm1256 = vcmp.lt.s32.totalorder %v515, 114
    %v1257 = vsel %vm1256, %v1249, %v1253
    %v1258 = vsel %vm1256, %v1251, %v1255
    %v1259 = vsel %vm1256, %v1253, %v1249
    %v1260 = vsel %vm1256, %v1255, %v1251
    %s1261 = scalar_lea.vmem [#allocation6], 928
    %v1262 = vld [vmem:[%s1261] sm:$0xff]
    %v1263 = vld [vmem:[%s1261 + $0x8] sm:$0xff]
    %v1264 = vld [vmem:[%s1261 + $0x10] sm:$0xff]
    %v1265 = vld [vmem:[%s1261 + $0x18] sm:$0xff]
    %v1266 = vmul.f32 %v1262, %v1257
    %v1267 = vmul.f32 %v1263, %v1259
    %v1268 = vmul.f32 %v1264, %v1258
    %v1269 = vmul.f32 %v1265, %v1260
    %v1270 = vadd.f32 %v1244, %v1266
    %v1271 = vadd.f32 %v1245, %v1267
    %v1272 = vadd.f32 %v1246, %v1268
    %v1273 = vadd.f32 %v1247, %v1269
    %1274 = vrot.lane.b32.xlu0 %v464, 113
    %v1275 = vpop.permute.xlu0 %1274
    %1276 = vrot.lane.b32.xlu0 %v496, 113
    %v1277 = vpop.permute.xlu0 %1276
    %1278 = vrot.lane.b32.xlu0 %v471, 113
    %v1279 = vpop.permute.xlu0 %1278
    %1280 = vrot.lane.b32.xlu0 %v503, 113
    %v1281 = vpop.permute.xlu0 %1280
    %vm1282 = vcmp.lt.s32.totalorder %v515, 113
    %v1283 = vsel %vm1282, %v1275, %v1279
    %v1284 = vsel %vm1282, %v1277, %v1281
    %v1285 = vsel %vm1282, %v1279, %v1275
    %v1286 = vsel %vm1282, %v1281, %v1277
    %s1287 = scalar_lea.vmem [#allocation6], 960
    %v1288 = vld [vmem:[%s1287] sm:$0xff]
    %v1289 = vld [vmem:[%s1287 + $0x8] sm:$0xff]
    %v1290 = vld [vmem:[%s1287 + $0x10] sm:$0xff]
    %v1291 = vld [vmem:[%s1287 + $0x18] sm:$0xff]
    %v1292 = vmul.f32 %v1288, %v1283
    %v1293 = vmul.f32 %v1289, %v1285
    %v1294 = vmul.f32 %v1290, %v1284
    %v1295 = vmul.f32 %v1291, %v1286
    %v1296 = vadd.f32 %v1270, %v1292
    %v1297 = vadd.f32 %v1271, %v1293
    %v1298 = vadd.f32 %v1272, %v1294
    %v1299 = vadd.f32 %v1273, %v1295
    %1300 = vrot.lane.b32.xlu0 %v464, 112
    %v1301 = vpop.permute.xlu0 %1300
    %1302 = vrot.lane.b32.xlu0 %v496, 112
    %v1303 = vpop.permute.xlu0 %1302
    %1304 = vrot.lane.b32.xlu0 %v471, 112
    %v1305 = vpop.permute.xlu0 %1304
    %1306 = vrot.lane.b32.xlu0 %v503, 112
    %v1307 = vpop.permute.xlu0 %1306
    %vm1308 = vcmp.lt.s32.totalorder %v515, 112
    %v1309 = vsel %vm1308, %v1301, %v1305
    %v1310 = vsel %vm1308, %v1303, %v1307
    %v1311 = vsel %vm1308, %v1305, %v1301
    %v1312 = vsel %vm1308, %v1307, %v1303
    %s1313 = scalar_lea.vmem [#allocation6], 992
    %v1314 = vld [vmem:[%s1313] sm:$0xff]
    %v1315 = vld [vmem:[%s1313 + $0x8] sm:$0xff]
    %v1316 = vld [vmem:[%s1313 + $0x10] sm:$0xff]
    %v1317 = vld [vmem:[%s1313 + $0x18] sm:$0xff]
    %v1318 = vmul.f32 %v1314, %v1309
    %v1319 = vmul.f32 %v1315, %v1311
    %v1320 = vmul.f32 %v1316, %v1310
    %v1321 = vmul.f32 %v1317, %v1312
    %v1322 = vadd.f32 %v1296, %v1318
    %v1323 = vadd.f32 %v1297, %v1319
    %v1324 = vadd.f32 %v1298, %v1320
    %v1325 = vadd.f32 %v1299, %v1321
    %1326 = vrot.lane.b32.xlu0 %v464, 111
    %v1327 = vpop.permute.xlu0 %1326
    %1328 = vrot.lane.b32.xlu0 %v496, 111
    %v1329 = vpop.permute.xlu0 %1328
    %1330 = vrot.lane.b32.xlu0 %v471, 111
    %v1331 = vpop.permute.xlu0 %1330
    %1332 = vrot.lane.b32.xlu0 %v503, 111
    %v1333 = vpop.permute.xlu0 %1332
    %vm1334 = vcmp.lt.s32.totalorder %v515, 111
    %v1335 = vsel %vm1334, %v1327, %v1331
    %v1336 = vsel %vm1334, %v1329, %v1333
    %v1337 = vsel %vm1334, %v1331, %v1327
    %v1338 = vsel %vm1334, %v1333, %v1329
    %s1339 = scalar_lea.vmem [#allocation6], 1024
    %v1340 = vld [vmem:[%s1339] sm:$0xff]
    %v1341 = vld [vmem:[%s1339 + $0x8] sm:$0xff]
    %v1342 = vld [vmem:[%s1339 + $0x10] sm:$0xff]
    %v1343 = vld [vmem:[%s1339 + $0x18] sm:$0xff]
    %v1344 = vmul.f32 %v1340, %v1335
    %v1345 = vmul.f32 %v1341, %v1337
    %v1346 = vmul.f32 %v1342, %v1336
    %v1347 = vmul.f32 %v1343, %v1338
    %v1348 = vadd.f32 %v1322, %v1344
    %v1349 = vadd.f32 %v1323, %v1345
    %v1350 = vadd.f32 %v1324, %v1346
    %v1351 = vadd.f32 %v1325, %v1347
    %1352 = vrot.lane.b32.xlu0 %v464, 110
    %v1353 = vpop.permute.xlu0 %1352
    %1354 = vrot.lane.b32.xlu0 %v496, 110
    %v1355 = vpop.permute.xlu0 %1354
    %1356 = vrot.lane.b32.xlu0 %v471, 110
    %v1357 = vpop.permute.xlu0 %1356
    %1358 = vrot.lane.b32.xlu0 %v503, 110
    %v1359 = vpop.permute.xlu0 %1358
    %vm1360 = vcmp.lt.s32.totalorder %v515, 110
    %v1361 = vsel %vm1360, %v1353, %v1357
    %v1362 = vsel %vm1360, %v1355, %v1359
    %v1363 = vsel %vm1360, %v1357, %v1353
    %v1364 = vsel %vm1360, %v1359, %v1355
    %s1365 = scalar_lea.vmem [#allocation6], 1056
    %v1366 = vld [vmem:[%s1365] sm:$0xff]
    %v1367 = vld [vmem:[%s1365 + $0x8] sm:$0xff]
    %v1368 = vld [vmem:[%s1365 + $0x10] sm:$0xff]
    %v1369 = vld [vmem:[%s1365 + $0x18] sm:$0xff]
    %v1370 = vmul.f32 %v1366, %v1361
    %v1371 = vmul.f32 %v1367, %v1363
    %v1372 = vmul.f32 %v1368, %v1362
    %v1373 = vmul.f32 %v1369, %v1364
    %v1374 = vadd.f32 %v1348, %v1370
    %v1375 = vadd.f32 %v1349, %v1371
    %v1376 = vadd.f32 %v1350, %v1372
    %v1377 = vadd.f32 %v1351, %v1373
    %1378 = vrot.lane.b32.xlu0 %v464, 109
    %v1379 = vpop.permute.xlu0 %1378
    %1380 = vrot.lane.b32.xlu0 %v496, 109
    %v1381 = vpop.permute.xlu0 %1380
    %1382 = vrot.lane.b32.xlu0 %v471, 109
    %v1383 = vpop.permute.xlu0 %1382
    %1384 = vrot.lane.b32.xlu0 %v503, 109
    %v1385 = vpop.permute.xlu0 %1384
    %vm1386 = vcmp.lt.s32.totalorder %v515, 109
    %v1387 = vsel %vm1386, %v1379, %v1383
    %v1388 = vsel %vm1386, %v1381, %v1385
    %v1389 = vsel %vm1386, %v1383, %v1379
    %v1390 = vsel %vm1386, %v1385, %v1381
    %s1391 = scalar_lea.vmem [#allocation6], 1088
    %v1392 = vld [vmem:[%s1391] sm:$0xff]
    %v1393 = vld [vmem:[%s1391 + $0x8] sm:$0xff]
    %v1394 = vld [vmem:[%s1391 + $0x10] sm:$0xff]
    %v1395 = vld [vmem:[%s1391 + $0x18] sm:$0xff]
    %v1396 = vmul.f32 %v1392, %v1387
    %v1397 = vmul.f32 %v1393, %v1389
    %v1398 = vmul.f32 %v1394, %v1388
    %v1399 = vmul.f32 %v1395, %v1390
    %v1400 = vadd.f32 %v1374, %v1396
    %v1401 = vadd.f32 %v1375, %v1397
    %v1402 = vadd.f32 %v1376, %v1398
    %v1403 = vadd.f32 %v1377, %v1399
    %1404 = vrot.lane.b32.xlu0 %v464, 99
    %v1405 = vpop.permute.xlu0 %1404
    %1406 = vrot.lane.b32.xlu0 %v496, 99
    %v1407 = vpop.permute.xlu0 %1406
    %1408 = vrot.lane.b32.xlu0 %v471, 99
    %v1409 = vpop.permute.xlu0 %1408
    %1410 = vrot.lane.b32.xlu0 %v503, 99
    %v1411 = vpop.permute.xlu0 %1410
    %vm1412 = vcmp.lt.s32.totalorder %v515, 99
    %v1413 = vsel %vm1412, %v1405, %v1409
    %v1414 = vsel %vm1412, %v1407, %v1411
    %v1415 = vsel %vm1412, %v1409, %v1405
    %v1416 = vsel %vm1412, %v1411, %v1407
    %s1417 = scalar_lea.vmem [#allocation6], 1120
    %v1418 = vld [vmem:[%s1417] sm:$0xff]
    %v1419 = vld [vmem:[%s1417 + $0x8] sm:$0xff]
    %v1420 = vld [vmem:[%s1417 + $0x10] sm:$0xff]
    %v1421 = vld [vmem:[%s1417 + $0x18] sm:$0xff]
    %v1422 = vmul.f32 %v1418, %v1413
    %v1423 = vmul.f32 %v1419, %v1415
    %v1424 = vmul.f32 %v1420, %v1414
    %v1425 = vmul.f32 %v1421, %v1416
    %v1426 = vadd.f32 %v1400, %v1422
    %v1427 = vadd.f32 %v1401, %v1423
    %v1428 = vadd.f32 %v1402, %v1424
    %v1429 = vadd.f32 %v1403, %v1425
    %1430 = vrot.lane.b32.xlu0 %v464, 98
    %v1431 = vpop.permute.xlu0 %1430
    %1432 = vrot.lane.b32.xlu0 %v496, 98
    %v1433 = vpop.permute.xlu0 %1432
    %1434 = vrot.lane.b32.xlu0 %v471, 98
    %v1435 = vpop.permute.xlu0 %1434
    %1436 = vrot.lane.b32.xlu0 %v503, 98
    %v1437 = vpop.permute.xlu0 %1436
    %vm1438 = vcmp.lt.s32.totalorder %v515, 98
    %v1439 = vsel %vm1438, %v1431, %v1435
    %v1440 = vsel %vm1438, %v1433, %v1437
    %v1441 = vsel %vm1438, %v1435, %v1431
    %v1442 = vsel %vm1438, %v1437, %v1433
    %s1443 = scalar_lea.vmem [#allocation6], 1152
    %v1444 = vld [vmem:[%s1443] sm:$0xff]
    %v1445 = vld [vmem:[%s1443 + $0x8] sm:$0xff]
    %v1446 = vld [vmem:[%s1443 + $0x10] sm:$0xff]
    %v1447 = vld [vmem:[%s1443 + $0x18] sm:$0xff]
    %v1448 = vmul.f32 %v1444, %v1439
    %v1449 = vmul.f32 %v1445, %v1441
    %v1450 = vmul.f32 %v1446, %v1440
    %v1451 = vmul.f32 %v1447, %v1442
    %v1452 = vadd.f32 %v1426, %v1448
    %v1453 = vadd.f32 %v1427, %v1449
    %v1454 = vadd.f32 %v1428, %v1450
    %v1455 = vadd.f32 %v1429, %v1451
    %1456 = vrot.lane.b32.xlu0 %v464, 97
    %v1457 = vpop.permute.xlu0 %1456
    %1458 = vrot.lane.b32.xlu0 %v496, 97
    %v1459 = vpop.permute.xlu0 %1458
    %1460 = vrot.lane.b32.xlu0 %v471, 97
    %v1461 = vpop.permute.xlu0 %1460
    %1462 = vrot.lane.b32.xlu0 %v503, 97
    %v1463 = vpop.permute.xlu0 %1462
    %vm1464 = vcmp.lt.s32.totalorder %v515, 97
    %v1465 = vsel %vm1464, %v1457, %v1461
    %v1466 = vsel %vm1464, %v1459, %v1463
    %v1467 = vsel %vm1464, %v1461, %v1457
    %v1468 = vsel %vm1464, %v1463, %v1459
    %s1469 = scalar_lea.vmem [#allocation6], 1184
    %v1470 = vld [vmem:[%s1469] sm:$0xff]
    %v1471 = vld [vmem:[%s1469 + $0x8] sm:$0xff]
    %v1472 = vld [vmem:[%s1469 + $0x10] sm:$0xff]
    %v1473 = vld [vmem:[%s1469 + $0x18] sm:$0xff]
    %v1474 = vmul.f32 %v1470, %v1465
    %v1475 = vmul.f32 %v1471, %v1467
    %v1476 = vmul.f32 %v1472, %v1466
    %v1477 = vmul.f32 %v1473, %v1468
    %v1478 = vadd.f32 %v1452, %v1474
    %v1479 = vadd.f32 %v1453, %v1475
    %v1480 = vadd.f32 %v1454, %v1476
    %v1481 = vadd.f32 %v1455, %v1477
    %1482 = vrot.lane.b32.xlu0 %v464, 96
    %v1483 = vpop.permute.xlu0 %1482
    %1484 = vrot.lane.b32.xlu0 %v496, 96
    %v1485 = vpop.permute.xlu0 %1484
    %1486 = vrot.lane.b32.xlu0 %v471, 96
    %v1487 = vpop.permute.xlu0 %1486
    %1488 = vrot.lane.b32.xlu0 %v503, 96
    %v1489 = vpop.permute.xlu0 %1488
    %vm1490 = vcmp.lt.s32.totalorder %v515, 96
    %v1491 = vsel %vm1490, %v1483, %v1487
    %v1492 = vsel %vm1490, %v1485, %v1489
    %v1493 = vsel %vm1490, %v1487, %v1483
    %v1494 = vsel %vm1490, %v1489, %v1485
    %s1495 = scalar_lea.vmem [#allocation6], 1216
    %v1496 = vld [vmem:[%s1495] sm:$0xff]
    %v1497 = vld [vmem:[%s1495 + $0x8] sm:$0xff]
    %v1498 = vld [vmem:[%s1495 + $0x10] sm:$0xff]
    %v1499 = vld [vmem:[%s1495 + $0x18] sm:$0xff]
    %v1500 = vmul.f32 %v1496, %v1491
    %v1501 = vmul.f32 %v1497, %v1493
    %v1502 = vmul.f32 %v1498, %v1492
    %v1503 = vmul.f32 %v1499, %v1494
    %v1504 = vadd.f32 %v1478, %v1500
    %v1505 = vadd.f32 %v1479, %v1501
    %v1506 = vadd.f32 %v1480, %v1502
    %v1507 = vadd.f32 %v1481, %v1503
    %1508 = vrot.lane.b32.xlu0 %v464, 95
    %v1509 = vpop.permute.xlu0 %1508
    %1510 = vrot.lane.b32.xlu0 %v496, 95
    %v1511 = vpop.permute.xlu0 %1510
    %1512 = vrot.lane.b32.xlu0 %v471, 95
    %v1513 = vpop.permute.xlu0 %1512
    %1514 = vrot.lane.b32.xlu0 %v503, 95
    %v1515 = vpop.permute.xlu0 %1514
    %vm1516 = vcmp.lt.s32.totalorder %v515, 95
    %v1517 = vsel %vm1516, %v1509, %v1513
    %v1518 = vsel %vm1516, %v1511, %v1515
    %v1519 = vsel %vm1516, %v1513, %v1509
    %v1520 = vsel %vm1516, %v1515, %v1511
    %s1521 = scalar_lea.vmem [#allocation6], 1248
    %v1522 = vld [vmem:[%s1521] sm:$0xff]
    %v1523 = vld [vmem:[%s1521 + $0x8] sm:$0xff]
    %v1524 = vld [vmem:[%s1521 + $0x10] sm:$0xff]
    %v1525 = vld [vmem:[%s1521 + $0x18] sm:$0xff]
    %v1526 = vmul.f32 %v1522, %v1517
    %v1527 = vmul.f32 %v1523, %v1519
    %v1528 = vmul.f32 %v1524, %v1518
    %v1529 = vmul.f32 %v1525, %v1520
    %v1530 = vadd.f32 %v1504, %v1526
    %v1531 = vadd.f32 %v1505, %v1527
    %v1532 = vadd.f32 %v1506, %v1528
    %v1533 = vadd.f32 %v1507, %v1529
    %1534 = vrot.lane.b32.xlu0 %v464, 94
    %v1535 = vpop.permute.xlu0 %1534
    %1536 = vrot.lane.b32.xlu0 %v496, 94
    %v1537 = vpop.permute.xlu0 %1536
    %1538 = vrot.lane.b32.xlu0 %v471, 94
    %v1539 = vpop.permute.xlu0 %1538
    %1540 = vrot.lane.b32.xlu0 %v503, 94
    %v1541 = vpop.permute.xlu0 %1540
    %vm1542 = vcmp.lt.s32.totalorder %v515, 94
    %v1543 = vsel %vm1542, %v1535, %v1539
    %v1544 = vsel %vm1542, %v1537, %v1541
    %v1545 = vsel %vm1542, %v1539, %v1535
    %v1546 = vsel %vm1542, %v1541, %v1537
    %s1547 = scalar_lea.vmem [#allocation6], 1280
    %v1548 = vld [vmem:[%s1547] sm:$0xff]
    %v1549 = vld [vmem:[%s1547 + $0x8] sm:$0xff]
    %v1550 = vld [vmem:[%s1547 + $0x10] sm:$0xff]
    %v1551 = vld [vmem:[%s1547 + $0x18] sm:$0xff]
    %v1552 = vmul.f32 %v1548, %v1543
    %v1553 = vmul.f32 %v1549, %v1545
    %v1554 = vmul.f32 %v1550, %v1544
    %v1555 = vmul.f32 %v1551, %v1546
    %v1556 = vadd.f32 %v1530, %v1552
    %v1557 = vadd.f32 %v1531, %v1553
    %v1558 = vadd.f32 %v1532, %v1554
    %v1559 = vadd.f32 %v1533, %v1555
    %1560 = vrot.lane.b32.xlu0 %v464, 93
    %v1561 = vpop.permute.xlu0 %1560
    %1562 = vrot.lane.b32.xlu0 %v496, 93
    %v1563 = vpop.permute.xlu0 %1562
    %1564 = vrot.lane.b32.xlu0 %v471, 93
    %v1565 = vpop.permute.xlu0 %1564
    %1566 = vrot.lane.b32.xlu0 %v503, 93
    %v1567 = vpop.permute.xlu0 %1566
    %vm1568 = vcmp.lt.s32.totalorder %v515, 93
    %v1569 = vsel %vm1568, %v1561, %v1565
    %v1570 = vsel %vm1568, %v1563, %v1567
    %v1571 = vsel %vm1568, %v1565, %v1561
    %v1572 = vsel %vm1568, %v1567, %v1563
    %s1573 = scalar_lea.vmem [#allocation6], 1312
    %v1574 = vld [vmem:[%s1573] sm:$0xff]
    %v1575 = vld [vmem:[%s1573 + $0x8] sm:$0xff]
    %v1576 = vld [vmem:[%s1573 + $0x10] sm:$0xff]
    %v1577 = vld [vmem:[%s1573 + $0x18] sm:$0xff]
    %v1578 = vmul.f32 %v1574, %v1569
    %v1579 = vmul.f32 %v1575, %v1571
    %v1580 = vmul.f32 %v1576, %v1570
    %v1581 = vmul.f32 %v1577, %v1572
    %v1582 = vadd.f32 %v1556, %v1578
    %v1583 = vadd.f32 %v1557, %v1579
    %v1584 = vadd.f32 %v1558, %v1580
    %v1585 = vadd.f32 %v1559, %v1581
    %1586 = vrot.lane.b32.xlu0 %v464, 83
    %v1587 = vpop.permute.xlu0 %1586
    %1588 = vrot.lane.b32.xlu0 %v496, 83
    %v1589 = vpop.permute.xlu0 %1588
    %1590 = vrot.lane.b32.xlu0 %v471, 83
    %v1591 = vpop.permute.xlu0 %1590
    %1592 = vrot.lane.b32.xlu0 %v503, 83
    %v1593 = vpop.permute.xlu0 %1592
    %vm1594 = vcmp.lt.s32.totalorder %v515, 83
    %v1595 = vsel %vm1594, %v1587, %v1591
    %v1596 = vsel %vm1594, %v1589, %v1593
    %v1597 = vsel %vm1594, %v1591, %v1587
    %v1598 = vsel %vm1594, %v1593, %v1589
    %s1599 = scalar_lea.vmem [#allocation6], 1344
    %v1600 = vld [vmem:[%s1599] sm:$0xff]
    %v1601 = vld [vmem:[%s1599 + $0x8] sm:$0xff]
    %v1602 = vld [vmem:[%s1599 + $0x10] sm:$0xff]
    %v1603 = vld [vmem:[%s1599 + $0x18] sm:$0xff]
    %v1604 = vmul.f32 %v1600, %v1595
    %v1605 = vmul.f32 %v1601, %v1597
    %v1606 = vmul.f32 %v1602, %v1596
    %v1607 = vmul.f32 %v1603, %v1598
    %v1608 = vadd.f32 %v1582, %v1604
    %v1609 = vadd.f32 %v1583, %v1605
    %v1610 = vadd.f32 %v1584, %v1606
    %v1611 = vadd.f32 %v1585, %v1607
    %1612 = vrot.lane.b32.xlu0 %v464, 82
    %v1613 = vpop.permute.xlu0 %1612
    %1614 = vrot.lane.b32.xlu0 %v496, 82
    %v1615 = vpop.permute.xlu0 %1614
    %1616 = vrot.lane.b32.xlu0 %v471, 82
    %v1617 = vpop.permute.xlu0 %1616
    %1618 = vrot.lane.b32.xlu0 %v503, 82
    %v1619 = vpop.permute.xlu0 %1618
    %vm1620 = vcmp.lt.s32.totalorder %v515, 82
    %v1621 = vsel %vm1620, %v1613, %v1617
    %v1622 = vsel %vm1620, %v1615, %v1619
    %v1623 = vsel %vm1620, %v1617, %v1613
    %v1624 = vsel %vm1620, %v1619, %v1615
    %s1625 = scalar_lea.vmem [#allocation6], 1376
    %v1626 = vld [vmem:[%s1625] sm:$0xff]
    %v1627 = vld [vmem:[%s1625 + $0x8] sm:$0xff]
    %v1628 = vld [vmem:[%s1625 + $0x10] sm:$0xff]
    %v1629 = vld [vmem:[%s1625 + $0x18] sm:$0xff]
    %v1630 = vmul.f32 %v1626, %v1621
    %v1631 = vmul.f32 %v1627, %v1623
    %v1632 = vmul.f32 %v1628, %v1622
    %v1633 = vmul.f32 %v1629, %v1624
    %v1634 = vadd.f32 %v1608, %v1630
    %v1635 = vadd.f32 %v1609, %v1631
    %v1636 = vadd.f32 %v1610, %v1632
    %v1637 = vadd.f32 %v1611, %v1633
    %1638 = vrot.lane.b32.xlu0 %v464, 81
    %v1639 = vpop.permute.xlu0 %1638
    %1640 = vrot.lane.b32.xlu0 %v496, 81
    %v1641 = vpop.permute.xlu0 %1640
    %1642 = vrot.lane.b32.xlu0 %v471, 81
    %v1643 = vpop.permute.xlu0 %1642
    %1644 = vrot.lane.b32.xlu0 %v503, 81
    %v1645 = vpop.permute.xlu0 %1644
    %vm1646 = vcmp.lt.s32.totalorder %v515, 81
    %v1647 = vsel %vm1646, %v1639, %v1643
    %v1648 = vsel %vm1646, %v1641, %v1645
    %v1649 = vsel %vm1646, %v1643, %v1639
    %v1650 = vsel %vm1646, %v1645, %v1641
    %s1651 = scalar_lea.vmem [#allocation6], 1408
    %v1652 = vld [vmem:[%s1651] sm:$0xff]
    %v1653 = vld [vmem:[%s1651 + $0x8] sm:$0xff]
    %v1654 = vld [vmem:[%s1651 + $0x10] sm:$0xff]
    %v1655 = vld [vmem:[%s1651 + $0x18] sm:$0xff]
    %v1656 = vmul.f32 %v1652, %v1647
    %v1657 = vmul.f32 %v1653, %v1649
    %v1658 = vmul.f32 %v1654, %v1648
    %v1659 = vmul.f32 %v1655, %v1650
    %v1660 = vadd.f32 %v1634, %v1656
    %v1661 = vadd.f32 %v1635, %v1657
    %v1662 = vadd.f32 %v1636, %v1658
    %v1663 = vadd.f32 %v1637, %v1659
    %1664 = vrot.lane.b32.xlu0 %v464, 80
    %v1665 = vpop.permute.xlu0 %1664
    %1666 = vrot.lane.b32.xlu0 %v496, 80
    %v1667 = vpop.permute.xlu0 %1666
    %1668 = vrot.lane.b32.xlu0 %v471, 80
    %v1669 = vpop.permute.xlu0 %1668
    %1670 = vrot.lane.b32.xlu0 %v503, 80
    %v1671 = vpop.permute.xlu0 %1670
    %vm1672 = vcmp.lt.s32.totalorder %v515, 80
    %v1673 = vsel %vm1672, %v1665, %v1669
    %v1674 = vsel %vm1672, %v1667, %v1671
    %v1675 = vsel %vm1672, %v1669, %v1665
    %v1676 = vsel %vm1672, %v1671, %v1667
    %s1677 = scalar_lea.vmem [#allocation6], 1440
    %v1678 = vld [vmem:[%s1677] sm:$0xff]
    %v1679 = vld [vmem:[%s1677 + $0x8] sm:$0xff]
    %v1680 = vld [vmem:[%s1677 + $0x10] sm:$0xff]
    %v1681 = vld [vmem:[%s1677 + $0x18] sm:$0xff]
    %v1682 = vmul.f32 %v1678, %v1673
    %v1683 = vmul.f32 %v1679, %v1675
    %v1684 = vmul.f32 %v1680, %v1674
    %v1685 = vmul.f32 %v1681, %v1676
    %v1686 = vadd.f32 %v1660, %v1682
    %v1687 = vadd.f32 %v1661, %v1683
    %v1688 = vadd.f32 %v1662, %v1684
    %v1689 = vadd.f32 %v1663, %v1685
    %1690 = vrot.lane.b32.xlu0 %v464, 79
    %v1691 = vpop.permute.xlu0 %1690
    %1692 = vrot.lane.b32.xlu0 %v496, 79
    %v1693 = vpop.permute.xlu0 %1692
    %1694 = vrot.lane.b32.xlu0 %v471, 79
    %v1695 = vpop.permute.xlu0 %1694
    %1696 = vrot.lane.b32.xlu0 %v503, 79
    %v1697 = vpop.permute.xlu0 %1696
    %vm1698 = vcmp.lt.s32.totalorder %v515, 79
    %v1699 = vsel %vm1698, %v1691, %v1695
    %v1700 = vsel %vm1698, %v1693, %v1697
    %v1701 = vsel %vm1698, %v1695, %v1691
    %v1702 = vsel %vm1698, %v1697, %v1693
    %s1703 = scalar_lea.vmem [#allocation6], 1472
    %v1704 = vld [vmem:[%s1703] sm:$0xff]
    %v1705 = vld [vmem:[%s1703 + $0x8] sm:$0xff]
    %v1706 = vld [vmem:[%s1703 + $0x10] sm:$0xff]
    %v1707 = vld [vmem:[%s1703 + $0x18] sm:$0xff]
    %v1708 = vmul.f32 %v1704, %v1699
    %v1709 = vmul.f32 %v1705, %v1701
    %v1710 = vmul.f32 %v1706, %v1700
    %v1711 = vmul.f32 %v1707, %v1702
    %v1712 = vadd.f32 %v1686, %v1708
    %v1713 = vadd.f32 %v1687, %v1709
    %v1714 = vadd.f32 %v1688, %v1710
    %v1715 = vadd.f32 %v1689, %v1711
    %1716 = vrot.lane.b32.xlu0 %v464, 78
    %v1717 = vpop.permute.xlu0 %1716
    %1718 = vrot.lane.b32.xlu0 %v496, 78
    %v1719 = vpop.permute.xlu0 %1718
    %1720 = vrot.lane.b32.xlu0 %v471, 78
    %v1721 = vpop.permute.xlu0 %1720
    %1722 = vrot.lane.b32.xlu0 %v503, 78
    %v1723 = vpop.permute.xlu0 %1722
    %vm1724 = vcmp.lt.s32.totalorder %v515, 78
    %v1725 = vsel %vm1724, %v1717, %v1721
    %v1726 = vsel %vm1724, %v1719, %v1723
    %v1727 = vsel %vm1724, %v1721, %v1717
    %v1728 = vsel %vm1724, %v1723, %v1719
    %s1729 = scalar_lea.vmem [#allocation6], 1504
    %v1730 = vld [vmem:[%s1729] sm:$0xff]
    %v1731 = vld [vmem:[%s1729 + $0x8] sm:$0xff]
    %v1732 = vld [vmem:[%s1729 + $0x10] sm:$0xff]
    %v1733 = vld [vmem:[%s1729 + $0x18] sm:$0xff]
    %v1734 = vmul.f32 %v1730, %v1725
    %v1735 = vmul.f32 %v1731, %v1727
    %v1736 = vmul.f32 %v1732, %v1726
    %v1737 = vmul.f32 %v1733, %v1728
    %v1738 = vadd.f32 %v1712, %v1734
    %v1739 = vadd.f32 %v1713, %v1735
    %v1740 = vadd.f32 %v1714, %v1736
    %v1741 = vadd.f32 %v1715, %v1737
    %1742 = vrot.lane.b32.xlu0 %v464, 77
    %v1743 = vpop.permute.xlu0 %1742
    %1744 = vrot.lane.b32.xlu0 %v496, 77
    %v1745 = vpop.permute.xlu0 %1744
    %1746 = vrot.lane.b32.xlu0 %v471, 77
    %v1747 = vpop.permute.xlu0 %1746
    %1748 = vrot.lane.b32.xlu0 %v503, 77
    %v1749 = vpop.permute.xlu0 %1748
    %vm1750 = vcmp.lt.s32.totalorder %v515, 77
    %v1751 = vsel %vm1750, %v1743, %v1747
    %v1752 = vsel %vm1750, %v1745, %v1749
    %v1753 = vsel %vm1750, %v1747, %v1743
    %v1754 = vsel %vm1750, %v1749, %v1745
    %s1755 = scalar_lea.vmem [#allocation6], 1536
    %v1756 = vld [vmem:[%s1755] sm:$0xff]
    %v1757 = vld [vmem:[%s1755 + $0x8] sm:$0xff]
    %v1758 = vld [vmem:[%s1755 + $0x10] sm:$0xff]
    %v1759 = vld [vmem:[%s1755 + $0x18] sm:$0xff]
    %v1760 = vmul.f32 %v1756, %v1751
    %v1761 = vmul.f32 %v1757, %v1753
    %v1762 = vmul.f32 %v1758, %v1752
    %v1763 = vmul.f32 %v1759, %v1754
    %v1764 = vadd.f32 %v1738, %v1760
    %v1765 = vadd.f32 %v1739, %v1761
    %v1766 = vadd.f32 %v1740, %v1762
    %v1767 = vadd.f32 %v1741, %v1763
    %v1768 = vadd.f32 %v1764, %v1766
    %v1769 = vadd.f32 %v1765, %v1767
    %s1770 = sld [smem:[#allocation2]]
    %v1771 = vstv %s1770
    %v1772 = vadd.f32 %v1768, %v1771
    %v1773 = vadd.f32 %v1769, %v1771
    %v1774 = vxor.u32 %v1772, 2147483648
    %v1775 = vxor.u32 %v1773, 2147483648
    %v1776 = vmul.f32 %v1774, 1.442695
    %v1777 = vpow.pop %v1776
    %v1778 = vmul.f32 %v1775, 1.442695
    %v1779 = vpow.pop %v1778
    %v1780 = vadd.f32 %v1777, 1.0
    %v1781 = vadd.f32 %v1779, 1.0
    %v1782 = vrcp.pop %v1780
    %v1783 = vmul.f32 %v1780, %v1782
    %v1784 = vsub.f32 1.0, %v1783
    %v1785 = vmul.f32 %v1782, %v1784
    %v1786 = vadd.f32 %v1782, %v1785
    %vm1787 = vweird.f32 %v1780
    %vm1788 = vweird.f32 %v1782
    %vm1789 = vmor %vm1787, %vm1788
    %v1790 = vsel %vm1789, %v1782, %v1786
    %v1791 = vand.u32 2147483647, %v1780
    %vm1792 = vcmp.eq.f32.partialorder %v1791, 8.507059e+37
    %v1793 = vand.u32 %v1780, 2147483648
    %v1794 = vor.u32 1.1754944e-38, %v1793
    %v1795 = vsel %vm1792, %v1794, %v1790
    %v1796 = vmul.f32 1.0, %v1795
    %v1797 = vrcp.pop %v1781
    %v1798 = vmul.f32 %v1781, %v1797
    %v1799 = vsub.f32 1.0, %v1798
    %v1800 = vmul.f32 %v1797, %v1799
    %v1801 = vadd.f32 %v1797, %v1800
    %vm1802 = vweird.f32 %v1781
    %vm1803 = vweird.f32 %v1797
    %vm1804 = vmor %vm1802, %vm1803
    %v1805 = vsel %vm1804, %v1797, %v1801
    %v1806 = vand.u32 2147483647, %v1781
    %vm1807 = vcmp.eq.f32.partialorder %v1806, 8.507059e+37
    %v1808 = vand.u32 %v1781, 2147483648
    %v1809 = vor.u32 1.1754944e-38, %v1808
    %v1810 = vsel %vm1807, %v1809, %v1805
    %v1811 = vmul.f32 1.0, %v1810
    %v1812 = vmul.f32 %v60, %v60
    %v1813 = vmul.f32 %v61, %v61
    %v1814 = vmul.f32 %v62, %v62
    %v1815 = vmul.f32 %v63, %v63
    %v1816 = vmul.f32 %v64, %v64
    %v1817 = vmul.f32 %v65, %v65
    %v1818 = vmul.f32 %v66, %v66
    %v1819 = vmul.f32 %v67, %v67
    %v1820 = vmul.f32 %v68, %v68
    %v1821 = vmul.f32 %v69, %v69
    %v1822 = vmul.f32 %v70, %v70
    %v1823 = vmul.f32 %v71, %v71
    %v1824 = vmul.f32 %v72, %v72
    %v1825 = vmul.f32 %v73, %v73
    %v1826 = vmul.f32 %v74, %v74
    %v1827 = vmul.f32 %v75, %v75
    %v1828 = vmul.f32 %v76, %v76
    %v1829 = vmul.f32 %v77, %v77
    %v1830 = vmul.f32 %v78, %v78
    %v1831 = vmul.f32 %v79, %v79
    %v1832 = vmul.f32 %v80, %v80
    %v1833 = vmul.f32 %v81, %v81
    %v1834 = vmul.f32 %v82, %v82
    %v1835 = vmul.f32 %v83, %v83
    %v1836 = vmul.f32 %v84, %v84
    %v1837 = vmul.f32 %v85, %v85
    %v1838 = vmul.f32 %v86, %v86
    %v1839 = vmul.f32 %v87, %v87
    %v1840 = vmul.f32 %v88, %v88
    %v1841 = vmul.f32 %v89, %v89
    %v1842 = vmul.f32 %v90, %v90
    %v1843 = vmul.f32 %v91, %v91
    %v1844 = vmul.f32 %v92, %v92
    %v1845 = vmul.f32 %v93, %v93
    %v1846 = vmul.f32 %v94, %v94
    %v1847 = vmul.f32 %v95, %v95
    %v1848 = vmul.f32 %v96, %v96
    %v1849 = vmul.f32 %v97, %v97
    %v1850 = vmul.f32 %v98, %v98
    %v1851 = vmul.f32 %v99, %v99
    %v1852 = vmul.f32 %v100, %v100
    %v1853 = vmul.f32 %v101, %v101
    %v1854 = vmul.f32 %v102, %v102
    %v1855 = vmul.f32 %v103, %v103
    %v1856 = vmul.f32 %v104, %v104
    %v1857 = vmul.f32 %v105, %v105
    %v1858 = vmul.f32 %v106, %v106
    %v1859 = vmul.f32 %v107, %v107
    %v1860 = vmul.f32 %v108, %v108
    %v1861 = vmul.f32 %v109, %v109
    %v1862 = vmul.f32 %v110, %v110
    %v1863 = vmul.f32 %v111, %v111
    %v1864 = vmul.f32 %v112, %v112
    %v1865 = vmul.f32 %v113, %v113
    %v1866 = vmul.f32 %v114, %v114
    %v1867 = vmul.f32 %v115, %v115
    %v1868 = vmul.f32 %v116, %v116
    %v1869 = vmul.f32 %v117, %v117
    %v1870 = vmul.f32 %v118, %v118
    %v1871 = vmul.f32 %v119, %v119
    %v1872 = vmul.f32 %v120, %v120
    %v1873 = vmul.f32 %v121, %v121
    %v1874 = vmul.f32 %v122, %v122
    %v1875 = vmul.f32 %v123, %v123
    %v1878 = vrot.slane %v1811, 7
    %vm1879 = vcmask 1040384
    %v1880 = vsel %vm1879, %v1796, %v1878
    %v1881 = vsel %vm451, %v1796, %v1878
    %v1882 = vrot.slane %v1881, 1
    %v1883 = vsel %vm453, %v1796, %v1878
    %v1884 = vrot.slane %v1883, 2
    %v1885 = vsel %vm455, %v1796, %v1878
    %v1886 = vrot.slane %v1885, 3
    %v1887 = vsel %vm457, %v1796, %v1878
    %v1888 = vrot.slane %v1887, 4
    %v1889 = vsel %vm459, %v1796, %v1878
    %v1890 = vrot.slane %v1889, 5
    %v1891 = vsel %vm461, %v1796, %v1878
    %v1892 = vrot.slane %v1891, 6
    %vm1893 = vcmask 1046528
    %v1894 = vsel %vm1893, %v1878, %v1796
    %v1895 = vrot.slane %v1894, 7
    %v1896 = vperm.slane %v1880, 0
    %v1897 = vperm.slane %v1880, 1
    %v1898 = vperm.slane %v1882, 0
    %v1899 = vperm.slane %v1882, 1
    %v1900 = vperm.slane %v1884, 0
    %v1901 = vperm.slane %v1884, 1
    %v1902 = vperm.slane %v1886, 0
    %v1903 = vperm.slane %v1886, 1
    %v1904 = vperm.slane %v1888, 0
    %v1905 = vperm.slane %v1888, 1
    %v1906 = vperm.slane %v1890, 0
    %v1907 = vperm.slane %v1890, 1
    %v1908 = vperm.slane %v1892, 0
    %v1909 = vperm.slane %v1892, 1
    %v1910 = vperm.slane %v1895, 0
    %v1911 = vperm.slane %v1895, 1
    %v1928 = vmul.f32 %v1812, %v1896
    %v1929 = vmul.f32 %v1813, %v1897
    %v1930 = vmul.f32 %v1814, %v1896
    %v1931 = vmul.f32 %v1815, %v1897
    %v1932 = vmul.f32 %v1816, %v1896
    %v1933 = vmul.f32 %v1817, %v1897
    %v1934 = vmul.f32 %v1818, %v1896
    %v1935 = vmul.f32 %v1819, %v1897
    %v1936 = vmul.f32 %v1820, %v1898
    %v1937 = vmul.f32 %v1821, %v1899
    %v1938 = vmul.f32 %v1822, %v1898
    %v1939 = vmul.f32 %v1823, %v1899
    %v1940 = vmul.f32 %v1824, %v1898
    %v1941 = vmul.f32 %v1825, %v1899
    %v1942 = vmul.f32 %v1826, %v1898
    %v1943 = vmul.f32 %v1827, %v1899
    %v1944 = vmul.f32 %v1828, %v1900
    %v1945 = vmul.f32 %v1829, %v1901
    %v1946 = vmul.f32 %v1830, %v1900
    %v1947 = vmul.f32 %v1831, %v1901
    %v1948 = vmul.f32 %v1832, %v1900
    %v1949 = vmul.f32 %v1833, %v1901
    %v1950 = vmul.f32 %v1834, %v1900
    %v1951 = vmul.f32 %v1835, %v1901
    %v1952 = vmul.f32 %v1836, %v1902
    %v1953 = vmul.f32 %v1837, %v1903
    %v1954 = vmul.f32 %v1838, %v1902
    %v1955 = vmul.f32 %v1839, %v1903
    %v1956 = vmul.f32 %v1840, %v1902
    %v1957 = vmul.f32 %v1841, %v1903
    %v1958 = vmul.f32 %v1842, %v1902
    %v1959 = vmul.f32 %v1843, %v1903
    %v1960 = vmul.f32 %v1844, %v1904
    %v1961 = vmul.f32 %v1845, %v1905
    %v1962 = vmul.f32 %v1846, %v1904
    %v1963 = vmul.f32 %v1847, %v1905
    %v1964 = vmul.f32 %v1848, %v1904
    %v1965 = vmul.f32 %v1849, %v1905
    %v1966 = vmul.f32 %v1850, %v1904
    %v1967 = vmul.f32 %v1851, %v1905
    %v1968 = vmul.f32 %v1852, %v1906
    %v1969 = vmul.f32 %v1853, %v1907
    %v1970 = vmul.f32 %v1854, %v1906
    %v1971 = vmul.f32 %v1855, %v1907
    %v1972 = vmul.f32 %v1856, %v1906
    %v1973 = vmul.f32 %v1857, %v1907
    %v1974 = vmul.f32 %v1858, %v1906
    %v1975 = vmul.f32 %v1859, %v1907
    %v1976 = vmul.f32 %v1860, %v1908
    %v1977 = vmul.f32 %v1861, %v1909
    %v1978 = vmul.f32 %v1862, %v1908
    %v1979 = vmul.f32 %v1863, %v1909
    %v1980 = vmul.f32 %v1864, %v1908
    %v1981 = vmul.f32 %v1865, %v1909
    %v1982 = vmul.f32 %v1866, %v1908
    %v1983 = vmul.f32 %v1867, %v1909
    %v1984 = vmul.f32 %v1868, %v1910
    %v1985 = vmul.f32 %v1869, %v1911
    %v1986 = vmul.f32 %v1870, %v1910
    %v1987 = vmul.f32 %v1871, %v1911
    %v1988 = vmul.f32 %v1872, %v1910
    %v1989 = vmul.f32 %v1873, %v1911
    %v1990 = vmul.f32 %v1874, %v1910
    %v1991 = vmul.f32 %v1875, %v1911
    %v1992 = vadd.f32 %v1928, %v1929
    %1993 = vadd.xlane.f32.xlu0 %v1992
    %v1994 = vpop.xlane.xlu0 %1993
    %v1995 = vadd.f32 %v1930, %v1931
    %1996 = vadd.xlane.f32.xlu0 %v1995
    %v1997 = vpop.xlane.xlu0 %1996
    %v1998 = vadd.f32 %v1932, %v1933
    %1999 = vadd.xlane.f32.xlu0 %v1998
    %v2000 = vpop.xlane.xlu0 %1999
    %v2001 = vadd.f32 %v1934, %v1935
    %2002 = vadd.xlane.f32.xlu0 %v2001
    %v2003 = vpop.xlane.xlu0 %2002
    %v2004 = vadd.f32 %v1936, %v1937
    %2005 = vadd.xlane.f32.xlu0 %v2004
    %v2006 = vpop.xlane.xlu0 %2005
    %v2007 = vadd.f32 %v1938, %v1939
    %2008 = vadd.xlane.f32.xlu0 %v2007
    %v2009 = vpop.xlane.xlu0 %2008
    %v2010 = vadd.f32 %v1940, %v1941
    %2011 = vadd.xlane.f32.xlu0 %v2010
    %v2012 = vpop.xlane.xlu0 %2011
    %v2013 = vadd.f32 %v1942, %v1943
    %2014 = vadd.xlane.f32.xlu0 %v2013
    %v2015 = vpop.xlane.xlu0 %2014
    %v2016 = vadd.f32 %v1944, %v1945
    %2017 = vadd.xlane.f32.xlu0 %v2016
    %v2018 = vpop.xlane.xlu0 %2017
    %v2019 = vadd.f32 %v1946, %v1947
    %2020 = vadd.xlane.f32.xlu0 %v2019
    %v2021 = vpop.xlane.xlu0 %2020
    %v2022 = vadd.f32 %v1948, %v1949
    %2023 = vadd.xlane.f32.xlu0 %v2022
    %v2024 = vpop.xlane.xlu0 %2023
    %v2025 = vadd.f32 %v1950, %v1951
    %2026 = vadd.xlane.f32.xlu0 %v2025
    %v2027 = vpop.xlane.xlu0 %2026
    %v2028 = vadd.f32 %v1952, %v1953
    %2029 = vadd.xlane.f32.xlu0 %v2028
    %v2030 = vpop.xlane.xlu0 %2029
    %v2031 = vadd.f32 %v1954, %v1955
    %2032 = vadd.xlane.f32.xlu0 %v2031
    %v2033 = vpop.xlane.xlu0 %2032
    %v2034 = vadd.f32 %v1956, %v1957
    %2035 = vadd.xlane.f32.xlu0 %v2034
    %v2036 = vpop.xlane.xlu0 %2035
    %v2037 = vadd.f32 %v1958, %v1959
    %2038 = vadd.xlane.f32.xlu0 %v2037
    %v2039 = vpop.xlane.xlu0 %2038
    %v2040 = vadd.f32 %v1960, %v1961
    %2041 = vadd.xlane.f32.xlu0 %v2040
    %v2042 = vpop.xlane.xlu0 %2041
    %v2043 = vadd.f32 %v1962, %v1963
    %2044 = vadd.xlane.f32.xlu0 %v2043
    %v2045 = vpop.xlane.xlu0 %2044
    %v2046 = vadd.f32 %v1964, %v1965
    %2047 = vadd.xlane.f32.xlu0 %v2046
    %v2048 = vpop.xlane.xlu0 %2047
    %v2049 = vadd.f32 %v1966, %v1967
    %2050 = vadd.xlane.f32.xlu0 %v2049
    %v2051 = vpop.xlane.xlu0 %2050
    %v2052 = vadd.f32 %v1968, %v1969
    %2053 = vadd.xlane.f32.xlu0 %v2052
    %v2054 = vpop.xlane.xlu0 %2053
    %v2055 = vadd.f32 %v1970, %v1971
    %2056 = vadd.xlane.f32.xlu0 %v2055
    %v2057 = vpop.xlane.xlu0 %2056
    %v2058 = vadd.f32 %v1972, %v1973
    %2059 = vadd.xlane.f32.xlu0 %v2058
    %v2060 = vpop.xlane.xlu0 %2059
    %v2061 = vadd.f32 %v1974, %v1975
    %2062 = vadd.xlane.f32.xlu0 %v2061
    %v2063 = vpop.xlane.xlu0 %2062
    %v2064 = vadd.f32 %v1976, %v1977
    %2065 = vadd.xlane.f32.xlu0 %v2064
    %v2066 = vpop.xlane.xlu0 %2065
    %v2067 = vadd.f32 %v1978, %v1979
    %2068 = vadd.xlane.f32.xlu0 %v2067
    %v2069 = vpop.xlane.xlu0 %2068
    %v2070 = vadd.f32 %v1980, %v1981
    %2071 = vadd.xlane.f32.xlu0 %v2070
    %v2072 = vpop.xlane.xlu0 %2071
    %v2073 = vadd.f32 %v1982, %v1983
    %2074 = vadd.xlane.f32.xlu0 %v2073
    %v2075 = vpop.xlane.xlu0 %2074
    %v2076 = vadd.f32 %v1984, %v1985
    %2077 = vadd.xlane.f32.xlu0 %v2076
    %v2078 = vpop.xlane.xlu0 %2077
    %v2079 = vadd.f32 %v1986, %v1987
    %2080 = vadd.xlane.f32.xlu0 %v2079
    %v2081 = vpop.xlane.xlu0 %2080
    %v2082 = vadd.f32 %v1988, %v1989
    %2083 = vadd.xlane.f32.xlu0 %v2082
    %v2084 = vpop.xlane.xlu0 %2083
    %v2085 = vadd.f32 %v1990, %v1991
    %2086 = vadd.xlane.f32.xlu0 %v2085
    %v2087 = vpop.xlane.xlu0 %2086
    %v2088 = vrcp.pop 256.0
    %v2089 = vmul.f32 256.0, %v2088
    %v2090 = vsub.f32 1.0, %v2089
    %v2091 = vmul.f32 %v2088, %v2090
    %v2092 = vadd.f32 %v2088, %v2091
    %vm2093 = vweird.f32 %v2088
    %v2094 = vsel %vm2093, %v2088, %v2092
    %v2095 = vmul.f32 %v1994, %v2094
    %v2096 = vmul.f32 %v1997, %v2094
    %v2097 = vmul.f32 %v2000, %v2094
    %v2098 = vmul.f32 %v2003, %v2094
    %v2099 = vmul.f32 %v2006, %v2094
    %v2100 = vmul.f32 %v2009, %v2094
    %v2101 = vmul.f32 %v2012, %v2094
    %v2102 = vmul.f32 %v2015, %v2094
    %v2103 = vmul.f32 %v2018, %v2094
    %v2104 = vmul.f32 %v2021, %v2094
    %v2105 = vmul.f32 %v2024, %v2094
    %v2106 = vmul.f32 %v2027, %v2094
    %v2107 = vmul.f32 %v2030, %v2094
    %v2108 = vmul.f32 %v2033, %v2094
    %v2109 = vmul.f32 %v2036, %v2094
    %v2110 = vmul.f32 %v2039, %v2094
    %v2111 = vmul.f32 %v2042, %v2094
    %v2112 = vmul.f32 %v2045, %v2094
    %v2113 = vmul.f32 %v2048, %v2094
    %v2114 = vmul.f32 %v2051, %v2094
    %v2115 = vmul.f32 %v2054, %v2094
    %v2116 = vmul.f32 %v2057, %v2094
    %v2117 = vmul.f32 %v2060, %v2094
    %v2118 = vmul.f32 %v2063, %v2094
    %v2119 = vmul.f32 %v2066, %v2094
    %v2120 = vmul.f32 %v2069, %v2094
    %v2121 = vmul.f32 %v2072, %v2094
    %v2122 = vmul.f32 %v2075, %v2094
    %v2123 = vmul.f32 %v2078, %v2094
    %v2124 = vmul.f32 %v2081, %v2094
    %v2125 = vmul.f32 %v2084, %v2094
    %v2126 = vmul.f32 %v2087, %v2094
    %v2127 = vmax.f32 %v1928, %v1929
    %2128 = vmax.xlane.f32.xlu0 %v2127
    %v2129 = vpop.xlane.xlu0 %2128
    %v2130 = vmax.f32 %v1930, %v1931
    %2131 = vmax.xlane.f32.xlu0 %v2130
    %v2132 = vpop.xlane.xlu0 %2131
    %v2133 = vmax.f32 %v1932, %v1933
    %2134 = vmax.xlane.f32.xlu0 %v2133
    %v2135 = vpop.xlane.xlu0 %2134
    %v2136 = vmax.f32 %v1934, %v1935
    %2137 = vmax.xlane.f32.xlu0 %v2136
    %v2138 = vpop.xlane.xlu0 %2137
    %v2139 = vmax.f32 %v1936, %v1937
    %2140 = vmax.xlane.f32.xlu0 %v2139
    %v2141 = vpop.xlane.xlu0 %2140
    %v2142 = vmax.f32 %v1938, %v1939
    %2143 = vmax.xlane.f32.xlu0 %v2142
    %v2144 = vpop.xlane.xlu0 %2143
    %v2145 = vmax.f32 %v1940, %v1941
    %2146 = vmax.xlane.f32.xlu0 %v2145
    %v2147 = vpop.xlane.xlu0 %2146
    %v2148 = vmax.f32 %v1942, %v1943
    %2149 = vmax.xlane.f32.xlu0 %v2148
    %v2150 = vpop.xlane.xlu0 %2149
    %v2151 = vmax.f32 %v1944, %v1945
    %2152 = vmax.xlane.f32.xlu0 %v2151
    %v2153 = vpop.xlane.xlu0 %2152
    %v2154 = vmax.f32 %v1946, %v1947
    %2155 = vmax.xlane.f32.xlu0 %v2154
    %v2156 = vpop.xlane.xlu0 %2155
    %v2157 = vmax.f32 %v1948, %v1949
    %2158 = vmax.xlane.f32.xlu0 %v2157
    %v2159 = vpop.xlane.xlu0 %2158
    %v2160 = vmax.f32 %v1950, %v1951
    %2161 = vmax.xlane.f32.xlu0 %v2160
    %v2162 = vpop.xlane.xlu0 %2161
    %v2163 = vmax.f32 %v1952, %v1953
    %2164 = vmax.xlane.f32.xlu0 %v2163
    %v2165 = vpop.xlane.xlu0 %2164
    %v2166 = vmax.f32 %v1954, %v1955
    %2167 = vmax.xlane.f32.xlu0 %v2166
    %v2168 = vpop.xlane.xlu0 %2167
    %v2169 = vmax.f32 %v1956, %v1957
    %2170 = vmax.xlane.f32.xlu0 %v2169
    %v2171 = vpop.xlane.xlu0 %2170
    %v2172 = vmax.f32 %v1958, %v1959
    %2173 = vmax.xlane.f32.xlu0 %v2172
    %v2174 = vpop.xlane.xlu0 %2173
    %v2175 = vmax.f32 %v1960, %v1961
    %2176 = vmax.xlane.f32.xlu0 %v2175
    %v2177 = vpop.xlane.xlu0 %2176
    %v2178 = vmax.f32 %v1962, %v1963
    %2179 = vmax.xlane.f32.xlu0 %v2178
    %v2180 = vpop.xlane.xlu0 %2179
    %v2181 = vmax.f32 %v1964, %v1965
    %2182 = vmax.xlane.f32.xlu0 %v2181
    %v2183 = vpop.xlane.xlu0 %2182
    %v2184 = vmax.f32 %v1966, %v1967
    %2185 = vmax.xlane.f32.xlu0 %v2184
    %v2186 = vpop.xlane.xlu0 %2185
    %v2187 = vmax.f32 %v1968, %v1969
    %2188 = vmax.xlane.f32.xlu0 %v2187
    %v2189 = vpop.xlane.xlu0 %2188
    %v2190 = vmax.f32 %v1970, %v1971
    %2191 = vmax.xlane.f32.xlu0 %v2190
    %v2192 = vpop.xlane.xlu0 %2191
    %v2193 = vmax.f32 %v1972, %v1973
    %2194 = vmax.xlane.f32.xlu0 %v2193
    %v2195 = vpop.xlane.xlu0 %2194
    %v2196 = vmax.f32 %v1974, %v1975
    %2197 = vmax.xlane.f32.xlu0 %v2196
    %v2198 = vpop.xlane.xlu0 %2197
    %v2199 = vmax.f32 %v1976, %v1977
    %2200 = vmax.xlane.f32.xlu0 %v2199
    %v2201 = vpop.xlane.xlu0 %2200
    %v2202 = vmax.f32 %v1978, %v1979
    %2203 = vmax.xlane.f32.xlu0 %v2202
    %v2204 = vpop.xlane.xlu0 %2203
    %v2205 = vmax.f32 %v1980, %v1981
    %2206 = vmax.xlane.f32.xlu0 %v2205
    %v2207 = vpop.xlane.xlu0 %2206
    %v2208 = vmax.f32 %v1982, %v1983
    %2209 = vmax.xlane.f32.xlu0 %v2208
    %v2210 = vpop.xlane.xlu0 %2209
    %v2211 = vmax.f32 %v1984, %v1985
    %2212 = vmax.xlane.f32.xlu0 %v2211
    %v2213 = vpop.xlane.xlu0 %2212
    %v2214 = vmax.f32 %v1986, %v1987
    %2215 = vmax.xlane.f32.xlu0 %v2214
    %v2216 = vpop.xlane.xlu0 %2215
    %v2217 = vmax.f32 %v1988, %v1989
    %2218 = vmax.xlane.f32.xlu0 %v2217
    %v2219 = vpop.xlane.xlu0 %2218
    %v2220 = vmax.f32 %v1990, %v1991
    %2221 = vmax.xlane.f32.xlu0 %v2220
    %v2222 = vpop.xlane.xlu0 %2221
    %v2255 = vperm.slane %v2095, %v515
    %v2256 = vadd.s32 %v515, 4294967288
    %v2257 = vperm.slane %v2096, %v2256
    %vm2258 = vcmask 130112
    %v2259 = vsel %vm2258, %v2257, %v2255
    %v2260 = vadd.s32 %v515, 4294967280
    %v2261 = vperm.slane %v2097, %v2260
    %vm2262 = vcmask 195712
    %v2263 = vsel %vm2262, %v2261, %v2259
    %v2264 = vadd.s32 %v515, 4294967272
    %v2265 = vperm.slane %v2098, %v2264
    %vm2266 = vcmask 261312
    %v2267 = vsel %vm2266, %v2265, %v2263
    %v2268 = vperm.slane %v2099, %v515
    %v2269 = vperm.slane %v2100, %v2256
    %v2270 = vsel %vm2258, %v2269, %v2268
    %v2271 = vperm.slane %v2101, %v2260
    %v2272 = vsel %vm2262, %v2271, %v2270
    %v2273 = vperm.slane %v2102, %v2264
    %v2274 = vsel %vm2266, %v2273, %v2272
    %v2275 = vperm.slane %v2103, %v515
    %v2276 = vperm.slane %v2104, %v2256
    %v2277 = vsel %vm2258, %v2276, %v2275
    %v2278 = vperm.slane %v2105, %v2260
    %v2279 = vsel %vm2262, %v2278, %v2277
    %v2280 = vperm.slane %v2106, %v2264
    %v2281 = vsel %vm2266, %v2280, %v2279
    %v2282 = vperm.slane %v2107, %v515
    %v2283 = vperm.slane %v2108, %v2256
    %v2284 = vsel %vm2258, %v2283, %v2282
    %v2285 = vperm.slane %v2109, %v2260
    %v2286 = vsel %vm2262, %v2285, %v2284
    %v2287 = vperm.slane %v2110, %v2264
    %v2288 = vsel %vm2266, %v2287, %v2286
    %v2289 = vperm.slane %v2111, %v515
    %v2290 = vperm.slane %v2112, %v2256
    %v2291 = vsel %vm2258, %v2290, %v2289
    %v2292 = vperm.slane %v2113, %v2260
    %v2293 = vsel %vm2262, %v2292, %v2291
    %v2294 = vperm.slane %v2114, %v2264
    %v2295 = vsel %vm2266, %v2294, %v2293
    %v2296 = vperm.slane %v2115, %v515
    %v2297 = vperm.slane %v2116, %v2256
    %v2298 = vsel %vm2258, %v2297, %v2296
    %v2299 = vperm.slane %v2117, %v2260
    %v2300 = vsel %vm2262, %v2299, %v2298
    %v2301 = vperm.slane %v2118, %v2264
    %v2302 = vsel %vm2266, %v2301, %v2300
    %v2303 = vperm.slane %v2119, %v515
    %v2304 = vperm.slane %v2120, %v2256
    %v2305 = vsel %vm2258, %v2304, %v2303
    %v2306 = vperm.slane %v2121, %v2260
    %v2307 = vsel %vm2262, %v2306, %v2305
    %v2308 = vperm.slane %v2122, %v2264
    %v2309 = vsel %vm2266, %v2308, %v2307
    %v2310 = vperm.slane %v2123, %v515
    %v2311 = vperm.slane %v2124, %v2256
    %v2312 = vsel %vm2258, %v2311, %v2310
    %v2313 = vperm.slane %v2125, %v2260
    %v2314 = vsel %vm2262, %v2313, %v2312
    %v2315 = vperm.slane %v2126, %v2264
    %v2316 = vsel %vm2266, %v2315, %v2314
    %v2317 = vsel %vm451, %v2274, %v2267
    %v2318 = vsel %vm453, %v2281, %v2317
    %v2319 = vsel %vm455, %v2288, %v2318
    %v2320 = vsel %vm457, %v2295, %v2319
    %v2321 = vsel %vm459, %v2302, %v2320
    %v2322 = vsel %vm461, %v2309, %v2321
    %v2323 = vsel %vm463, %v2316, %v2322
    %v2356 = vperm.slane %v2129, %v515
    %v2357 = vperm.slane %v2132, %v2256
    %v2358 = vsel %vm2258, %v2357, %v2356
    %v2359 = vperm.slane %v2135, %v2260
    %v2360 = vsel %vm2262, %v2359, %v2358
    %v2361 = vperm.slane %v2138, %v2264
    %v2362 = vsel %vm2266, %v2361, %v2360
    %v2363 = vperm.slane %v2141, %v515
    %v2364 = vperm.slane %v2144, %v2256
    %v2365 = vsel %vm2258, %v2364, %v2363
    %v2366 = vperm.slane %v2147, %v2260
    %v2367 = vsel %vm2262, %v2366, %v2365
    %v2368 = vperm.slane %v2150, %v2264
    %v2369 = vsel %vm2266, %v2368, %v2367
    %v2370 = vperm.slane %v2153, %v515
    %v2371 = vperm.slane %v2156, %v2256
    %v2372 = vsel %vm2258, %v2371, %v2370
    %v2373 = vperm.slane %v2159, %v2260
    %v2374 = vsel %vm2262, %v2373, %v2372
    %v2375 = vperm.slane %v2162, %v2264
    %v2376 = vsel %vm2266, %v2375, %v2374
    %v2377 = vperm.slane %v2165, %v515
    %v2378 = vperm.slane %v2168, %v2256
    %v2379 = vsel %vm2258, %v2378, %v2377
    %v2380 = vperm.slane %v2171, %v2260
    %v2381 = vsel %vm2262, %v2380, %v2379
    %v2382 = vperm.slane %v2174, %v2264
    %v2383 = vsel %vm2266, %v2382, %v2381
    %v2384 = vperm.slane %v2177, %v515
    %v2385 = vperm.slane %v2180, %v2256
    %v2386 = vsel %vm2258, %v2385, %v2384
    %v2387 = vperm.slane %v2183, %v2260
    %v2388 = vsel %vm2262, %v2387, %v2386
    %v2389 = vperm.slane %v2186, %v2264
    %v2390 = vsel %vm2266, %v2389, %v2388
    %v2391 = vperm.slane %v2189, %v515
    %v2392 = vperm.slane %v2192, %v2256
    %v2393 = vsel %vm2258, %v2392, %v2391
    %v2394 = vperm.slane %v2195, %v2260
    %v2395 = vsel %vm2262, %v2394, %v2393
    %v2396 = vperm.slane %v2198, %v2264
    %v2397 = vsel %vm2266, %v2396, %v2395
    %v2398 = vperm.slane %v2201, %v515
    %v2399 = vperm.slane %v2204, %v2256
    %v2400 = vsel %vm2258, %v2399, %v2398
    %v2401 = vperm.slane %v2207, %v2260
    %v2402 = vsel %vm2262, %v2401, %v2400
    %v2403 = vperm.slane %v2210, %v2264
    %v2404 = vsel %vm2266, %v2403, %v2402
    %v2405 = vperm.slane %v2213, %v515
    %v2406 = vperm.slane %v2216, %v2256
    %v2407 = vsel %vm2258, %v2406, %v2405
    %v2408 = vperm.slane %v2219, %v2260
    %v2409 = vsel %vm2262, %v2408, %v2407
    %v2410 = vperm.slane %v2222, %v2264
    %v2411 = vsel %vm2266, %v2410, %v2409
    %v2412 = vsel %vm451, %v2369, %v2362
    %v2413 = vsel %vm453, %v2376, %v2412
    %v2414 = vsel %vm455, %v2383, %v2413
    %v2415 = vsel %vm457, %v2390, %v2414
    %v2416 = vsel %vm459, %v2397, %v2415
    %v2417 = vsel %vm461, %v2404, %v2416
    %v2418 = vsel %vm463, %v2411, %v2417
    %v2419 = vld [vmem:[%s3] sm:$0xff]
    %v2420 = vld [vmem:[%s3 + $0x8] sm:$0xff]
    %v2421 = vld [vmem:[%s3 + $0x10] sm:$0xff]
    %v2422 = vld [vmem:[%s3 + $0x18] sm:$0xff]
    %v2423 = vld [vmem:[%s4] sm:$0x1]
    %v2425 = vperm.slane %v2423, 0
    %vm2427 = vcmask 261120
    %v2428 = vsel %vm2427, %v2323, 0
    %v2430 = vsel %vm2427, %v2418, 0
    %2432 = vmatpush.msra.mxu0 0.0
    %2433 = vmatpush.msra.mxu0 0.0
    %2434 = vmatpush.msra.mxu0 0.0
    %2435 = vmatpush.msra.mxu0 0.0
    %2436 = vmatpush.msra.mxu0 0.0
    %2437 = vmatpush.msra.mxu0 0.0
    %2438 = vmatpush.msra.mxu0 0.0
    %2439 = vmatpush.msra.mxu0 0.0
    %2440 = vmatpush.msra.mxu0 0.0
    %2441 = vmatpush.msra.mxu0 0.0
    %2442 = vmatpush.msra.mxu0 0.0
    %2443 = vmatpush.msra.mxu0 0.0
    %2444 = vmatpush.msra.mxu0 %v2422
    %2445 = vmatpush.msra.mxu0 %v2421
    %2446 = vmatpush.msra.mxu0 %v2420
    %2447 = vmatpush.msra.mxu0 %v2419
    %2448 = vmatmul.f32.gmra.mxu0 %v2428
    %v2449 = vpop.f32.mrf.mxu0
    %v2450 = vadd.f32 %v2425, %v2449
    %2451 = vmatmul.f32.gmra.mxu0 %v2430
    %v2452 = vpop.f32.mrf.mxu0
    %v2453 = vadd.f32 %v2425, %v2452
    %2454 = vdwg.mxu0
    %v2455 = vmax.f32 %v2450, 0.0
    %v2456 = vmax.f32 %v2453, 0.0
    %v2457 = vld [vmem:[%s5] sm:$0x3]
    %v2458 = vld [vmem:[%s6] sm:$0x1]
    %v2460 = vperm.slane %v2458, 0
    %vm2462 = vcmask 15360
    %v2464 = vsel %vm2462, %v2455, 0
    %v2467 = vsel %vm2462, %v2456, 0
    %vm2469 = vcmask 1041408
    %v2471 = vsel %vm2469, %v2457, 0
    %2473 = vmatpush.msra.mxu0 0.0
    %2474 = vmatpush.msra.mxu0 0.0
    %2475 = vmatpush.msra.mxu0 0.0
    %2476 = vmatpush.msra.mxu0 0.0
    %2477 = vmatpush.msra.mxu0 0.0
    %2478 = vmatpush.msra.mxu0 0.0
    %2479 = vmatpush.msra.mxu0 0.0
    %2480 = vmatpush.msra.mxu0 0.0
    %2481 = vmatpush.msra.mxu0 0.0
    %2482 = vmatpush.msra.mxu0 0.0
    %2483 = vmatpush.msra.mxu0 0.0
    %2484 = vmatpush.msra.mxu0 0.0
    %2485 = vmatpush.msra.mxu0 0.0
    %2486 = vmatpush.msra.mxu0 0.0
    %2487 = vmatpush.msra.mxu0 0.0
    %2488 = vmatpush.msra.mxu0 %v2471
    %2489 = vmatmul.f32.gmra.mxu0 %v2464
    %v2490 = vpop.f32.mrf.mxu0
    %v2491 = vadd.f32 %v2460, %v2490
    %2492 = vmatmul.f32.gmra.mxu0 %v2467
    %v2493 = vpop.f32.mrf.mxu0
    %v2494 = vadd.f32 %v2460, %v2493
    %2495 = vdwg.mxu0
    %v2496 = vxor.u32 %v2491, 2147483648
    %v2497 = vxor.u32 %v2494, 2147483648
    %v2498 = vmul.f32 %v2496, 1.442695
    %v2499 = vpow.pop %v2498
    %v2500 = vmul.f32 %v2497, 1.442695
    %v2501 = vpow.pop %v2500
    %v2502 = vadd.f32 %v2499, 1.0
    %v2503 = vadd.f32 %v2501, 1.0
    %v2504 = vrcp.pop %v2502
    %v2505 = vmul.f32 %v2502, %v2504
    %v2506 = vsub.f32 1.0, %v2505
    %v2507 = vmul.f32 %v2504, %v2506
    %v2508 = vadd.f32 %v2504, %v2507
    %vm2509 = vweird.f32 %v2502
    %vm2510 = vweird.f32 %v2504
    %vm2511 = vmor %vm2509, %vm2510
    %v2512 = vsel %vm2511, %v2504, %v2508
    %v2513 = vand.u32 2147483647, %v2502
    %vm2514 = vcmp.eq.f32.partialorder %v2513, 8.507059e+37
    %v2515 = vand.u32 %v2502, 2147483648
    %v2516 = vor.u32 1.1754944e-38, %v2515
    %v2517 = vsel %vm2514, %v2516, %v2512
    %v2518 = vmul.f32 1.0, %v2517
    %v2519 = vrcp.pop %v2503
    %v2520 = vmul.f32 %v2503, %v2519
    %v2521 = vsub.f32 1.0, %v2520
    %v2522 = vmul.f32 %v2519, %v2521
    %v2523 = vadd.f32 %v2519, %v2522
    %vm2524 = vweird.f32 %v2503
    %vm2525 = vweird.f32 %v2519
    %vm2526 = vmor %vm2524, %vm2525
    %v2527 = vsel %vm2526, %v2519, %v2523
    %v2528 = vand.u32 2147483647, %v2503
    %vm2529 = vcmp.eq.f32.partialorder %v2528, 8.507059e+37
    %v2530 = vand.u32 %v2503, 2147483648
    %v2531 = vor.u32 1.1754944e-38, %v2530
    %v2532 = vsel %vm2529, %v2531, %v2527
    %v2533 = vmul.f32 1.0, %v2532
    %v2534 = vadd.f32 %v2518, %v2533
    %v2535 = vmul.f32 %v1928, %v1928
    %v2536 = vmul.f32 %v1929, %v1929
    %v2537 = vmul.f32 %v1930, %v1930
    %v2538 = vmul.f32 %v1931, %v1931
    %v2539 = vmul.f32 %v1932, %v1932
    %v2540 = vmul.f32 %v1933, %v1933
    %v2541 = vmul.f32 %v1934, %v1934
    %v2542 = vmul.f32 %v1935, %v1935
    %v2543 = vmul.f32 %v1936, %v1936
    %v2544 = vmul.f32 %v1937, %v1937
    %v2545 = vmul.f32 %v1938, %v1938
    %v2546 = vmul.f32 %v1939, %v1939
    %v2547 = vmul.f32 %v1940, %v1940
    %v2548 = vmul.f32 %v1941, %v1941
    %v2549 = vmul.f32 %v1942, %v1942
    %v2550 = vmul.f32 %v1943, %v1943
    %v2551 = vmul.f32 %v1944, %v1944
    %v2552 = vmul.f32 %v1945, %v1945
    %v2553 = vmul.f32 %v1946, %v1946
    %v2554 = vmul.f32 %v1947, %v1947
    %v2555 = vmul.f32 %v1948, %v1948
    %v2556 = vmul.f32 %v1949, %v1949
    %v2557 = vmul.f32 %v1950, %v1950
    %v2558 = vmul.f32 %v1951, %v1951
    %v2559 = vmul.f32 %v1952, %v1952
    %v2560 = vmul.f32 %v1953, %v1953
    %v2561 = vmul.f32 %v1954, %v1954
    %v2562 = vmul.f32 %v1955, %v1955
    %v2563 = vmul.f32 %v1956, %v1956
    %v2564 = vmul.f32 %v1957, %v1957
    %v2565 = vmul.f32 %v1958, %v1958
    %v2566 = vmul.f32 %v1959, %v1959
    %v2567 = vmul.f32 %v1960, %v1960
    %v2568 = vmul.f32 %v1961, %v1961
    %v2569 = vmul.f32 %v1962, %v1962
    %v2570 = vmul.f32 %v1963, %v1963
    %v2571 = vmul.f32 %v1964, %v1964
    %v2572 = vmul.f32 %v1965, %v1965
    %v2573 = vmul.f32 %v1966, %v1966
    %v2574 = vmul.f32 %v1967, %v1967
    %v2575 = vmul.f32 %v1968, %v1968
    %v2576 = vmul.f32 %v1969, %v1969
    %v2577 = vmul.f32 %v1970, %v1970
    %v2578 = vmul.f32 %v1971, %v1971
    %v2579 = vmul.f32 %v1972, %v1972
    %v2580 = vmul.f32 %v1973, %v1973
    %v2581 = vmul.f32 %v1974, %v1974
    %v2582 = vmul.f32 %v1975, %v1975
    %v2583 = vmul.f32 %v1976, %v1976
    %v2584 = vmul.f32 %v1977, %v1977
    %v2585 = vmul.f32 %v1978, %v1978
    %v2586 = vmul.f32 %v1979, %v1979
    %v2587 = vmul.f32 %v1980, %v1980
    %v2588 = vmul.f32 %v1981, %v1981
    %v2589 = vmul.f32 %v1982, %v1982
    %v2590 = vmul.f32 %v1983, %v1983
    %v2591 = vmul.f32 %v1984, %v1984
    %v2592 = vmul.f32 %v1985, %v1985
    %v2593 = vmul.f32 %v1986, %v1986
    %v2594 = vmul.f32 %v1987, %v1987
    %v2595 = vmul.f32 %v1988, %v1988
    %v2596 = vmul.f32 %v1989, %v1989
    %v2597 = vmul.f32 %v1990, %v1990
    %v2598 = vmul.f32 %v1991, %v1991
    %v2599 = vperm.slane %v2534, 0
    %v2600 = vlaneseq
    %v2601 = vshrl.u32 %v2600, 7
    %2603 = vset.pattern.permute.xlu0 %v2601
    %2604 = vperm.xlu0 %2603, %v2599
    %v2605 = vpop.permute.xlu0 %2604
    %v2606 = vlaneseq
    %v2607 = vshrl.u32 %v2606, 7
    %v2608 = vadd.s32 %v2607, 8
    %2609 = vset.pattern.permute.xlu0 %v2608
    %2610 = vperm.xlu0 %2609, %v2599
    %v2611 = vpop.permute.xlu0 %2610
    %v2612 = vlaneseq
    %v2613 = vshrl.u32 %v2612, 7
    %v2614 = vadd.s32 %v2613, 16
    %2615 = vset.pattern.permute.xlu0 %v2614
    %2616 = vperm.xlu0 %2615, %v2599
    %v2617 = vpop.permute.xlu0 %2616
    %v2618 = vlaneseq
    %v2619 = vshrl.u32 %v2618, 7
    %v2620 = vadd.s32 %v2619, 24
    %2621 = vset.pattern.permute.xlu0 %v2620
    %2622 = vperm.xlu0 %2621, %v2599
    %v2623 = vpop.permute.xlu0 %2622
    %v2624 = vperm.slane %v2534, 1
    %v2625 = vlaneseq
    %v2626 = vshrl.u32 %v2625, 7
    %2628 = vset.pattern.permute.xlu0 %v2626
    %2629 = vperm.xlu0 %2628, %v2624
    %v2630 = vpop.permute.xlu0 %2629
    %v2631 = vlaneseq
    %v2632 = vshrl.u32 %v2631, 7
    %v2633 = vadd.s32 %v2632, 8
    %2634 = vset.pattern.permute.xlu0 %v2633
    %2635 = vperm.xlu0 %2634, %v2624
    %v2636 = vpop.permute.xlu0 %2635
    %v2637 = vlaneseq
    %v2638 = vshrl.u32 %v2637, 7
    %v2639 = vadd.s32 %v2638, 16
    %2640 = vset.pattern.permute.xlu0 %v2639
    %2641 = vperm.xlu0 %2640, %v2624
    %v2642 = vpop.permute.xlu0 %2641
    %v2643 = vlaneseq
    %v2644 = vshrl.u32 %v2643, 7
    %v2645 = vadd.s32 %v2644, 24
    %2646 = vset.pattern.permute.xlu0 %v2645
    %2647 = vperm.xlu0 %2646, %v2624
    %v2648 = vpop.permute.xlu0 %2647
    %v2649 = vperm.slane %v2534, 2
    %v2650 = vlaneseq
    %v2651 = vshrl.u32 %v2650, 7
    %2653 = vset.pattern.permute.xlu0 %v2651
    %2654 = vperm.xlu0 %2653, %v2649
    %v2655 = vpop.permute.xlu0 %2654
    %v2656 = vlaneseq
    %v2657 = vshrl.u32 %v2656, 7
    %v2658 = vadd.s32 %v2657, 8
    %2659 = vset.pattern.permute.xlu0 %v2658
    %2660 = vperm.xlu0 %2659, %v2649
    %v2661 = vpop.permute.xlu0 %2660
    %v2662 = vlaneseq
    %v2663 = vshrl.u32 %v2662, 7
    %v2664 = vadd.s32 %v2663, 16
    %2665 = vset.pattern.permute.xlu0 %v2664
    %2666 = vperm.xlu0 %2665, %v2649
    %v2667 = vpop.permute.xlu0 %2666
    %v2668 = vlaneseq
    %v2669 = vshrl.u32 %v2668, 7
    %v2670 = vadd.s32 %v2669, 24
    %2671 = vset.pattern.permute.xlu0 %v2670
    %2672 = vperm.xlu0 %2671, %v2649
    %v2673 = vpop.permute.xlu0 %2672
    %v2674 = vperm.slane %v2534, 3
    %v2675 = vlaneseq
    %v2676 = vshrl.u32 %v2675, 7
    %2678 = vset.pattern.permute.xlu0 %v2676
    %2679 = vperm.xlu0 %2678, %v2674
    %v2680 = vpop.permute.xlu0 %2679
    %v2681 = vlaneseq
    %v2682 = vshrl.u32 %v2681, 7
    %v2683 = vadd.s32 %v2682, 8
    %2684 = vset.pattern.permute.xlu0 %v2683
    %2685 = vperm.xlu0 %2684, %v2674
    %v2686 = vpop.permute.xlu0 %2685
    %v2687 = vlaneseq
    %v2688 = vshrl.u32 %v2687, 7
    %v2689 = vadd.s32 %v2688, 16
    %2690 = vset.pattern.permute.xlu0 %v2689
    %2691 = vperm.xlu0 %2690, %v2674
    %v2692 = vpop.permute.xlu0 %2691
    %v2693 = vlaneseq
    %v2694 = vshrl.u32 %v2693, 7
    %v2695 = vadd.s32 %v2694, 24
    %2696 = vset.pattern.permute.xlu0 %v2695
    %2697 = vperm.xlu0 %2696, %v2674
    %v2698 = vpop.permute.xlu0 %2697
    %v2699 = vperm.slane %v2534, 4
    %v2700 = vlaneseq
    %v2701 = vshrl.u32 %v2700, 7
    %2703 = vset.pattern.permute.xlu0 %v2701
    %2704 = vperm.xlu0 %2703, %v2699
    %v2705 = vpop.permute.xlu0 %2704
    %v2706 = vlaneseq
    %v2707 = vshrl.u32 %v2706, 7
    %v2708 = vadd.s32 %v2707, 8
    %2709 = vset.pattern.permute.xlu0 %v2708
    %2710 = vperm.xlu0 %2709, %v2699
    %v2711 = vpop.permute.xlu0 %2710
    %v2712 = vlaneseq
    %v2713 = vshrl.u32 %v2712, 7
    %v2714 = vadd.s32 %v2713, 16
    %2715 = vset.pattern.permute.xlu0 %v2714
    %2716 = vperm.xlu0 %2715, %v2699
    %v2717 = vpop.permute.xlu0 %2716
    %v2718 = vlaneseq
    %v2719 = vshrl.u32 %v2718, 7
    %v2720 = vadd.s32 %v2719, 24
    %2721 = vset.pattern.permute.xlu0 %v2720
    %2722 = vperm.xlu0 %2721, %v2699
    %v2723 = vpop.permute.xlu0 %2722
    %v2724 = vperm.slane %v2534, 5
    %v2725 = vlaneseq
    %v2726 = vshrl.u32 %v2725, 7
    %2728 = vset.pattern.permute.xlu0 %v2726
    %2729 = vperm.xlu0 %2728, %v2724
    %v2730 = vpop.permute.xlu0 %2729
    %v2731 = vlaneseq
    %v2732 = vshrl.u32 %v2731, 7
    %v2733 = vadd.s32 %v2732, 8
    %2734 = vset.pattern.permute.xlu0 %v2733
    %2735 = vperm.xlu0 %2734, %v2724
    %v2736 = vpop.permute.xlu0 %2735
    %v2737 = vlaneseq
    %v2738 = vshrl.u32 %v2737, 7
    %v2739 = vadd.s32 %v2738, 16
    %2740 = vset.pattern.permute.xlu0 %v2739
    %2741 = vperm.xlu0 %2740, %v2724
    %v2742 = vpop.permute.xlu0 %2741
    %v2743 = vlaneseq
    %v2744 = vshrl.u32 %v2743, 7
    %v2745 = vadd.s32 %v2744, 24
    %2746 = vset.pattern.permute.xlu0 %v2745
    %2747 = vperm.xlu0 %2746, %v2724
    %v2748 = vpop.permute.xlu0 %2747
    %v2749 = vperm.slane %v2534, 6
    %v2750 = vlaneseq
    %v2751 = vshrl.u32 %v2750, 7
    %2753 = vset.pattern.permute.xlu0 %v2751
    %2754 = vperm.xlu0 %2753, %v2749
    %v2755 = vpop.permute.xlu0 %2754
    %v2756 = vlaneseq
    %v2757 = vshrl.u32 %v2756, 7
    %v2758 = vadd.s32 %v2757, 8
    %2759 = vset.pattern.permute.xlu0 %v2758
    %2760 = vperm.xlu0 %2759, %v2749
    %v2761 = vpop.permute.xlu0 %2760
    %v2762 = vlaneseq
    %v2763 = vshrl.u32 %v2762, 7
    %v2764 = vadd.s32 %v2763, 16
    %2765 = vset.pattern.permute.xlu0 %v2764
    %2766 = vperm.xlu0 %2765, %v2749
    %v2767 = vpop.permute.xlu0 %2766
    %v2768 = vlaneseq
    %v2769 = vshrl.u32 %v2768, 7
    %v2770 = vadd.s32 %v2769, 24
    %2771 = vset.pattern.permute.xlu0 %v2770
    %2772 = vperm.xlu0 %2771, %v2749
    %v2773 = vpop.permute.xlu0 %2772
    %v2774 = vperm.slane %v2534, 7
    %v2775 = vlaneseq
    %v2776 = vshrl.u32 %v2775, 7
    %2778 = vset.pattern.permute.xlu0 %v2776
    %2779 = vperm.xlu0 %2778, %v2774
    %v2780 = vpop.permute.xlu0 %2779
    %v2781 = vlaneseq
    %v2782 = vshrl.u32 %v2781, 7
    %v2783 = vadd.s32 %v2782, 8
    %2784 = vset.pattern.permute.xlu0 %v2783
    %2785 = vperm.xlu0 %2784, %v2774
    %v2786 = vpop.permute.xlu0 %2785
    %v2787 = vlaneseq
    %v2788 = vshrl.u32 %v2787, 7
    %v2789 = vadd.s32 %v2788, 16
    %2790 = vset.pattern.permute.xlu0 %v2789
    %2791 = vperm.xlu0 %2790, %v2774
    %v2792 = vpop.permute.xlu0 %2791
    %v2793 = vlaneseq
    %v2794 = vshrl.u32 %v2793, 7
    %v2795 = vadd.s32 %v2794, 24
    %2796 = vset.pattern.permute.xlu0 %v2795
    %2797 = vperm.xlu0 %2796, %v2774
    %v2798 = vpop.permute.xlu0 %2797
    %v2799 = vmul.f32 %v2535, %v2605
    %v2800 = vmul.f32 %v2536, %v2605
    %v2801 = vmul.f32 %v2537, %v2611
    %v2802 = vmul.f32 %v2538, %v2611
    %v2803 = vmul.f32 %v2539, %v2617
    %v2804 = vmul.f32 %v2540, %v2617
    %v2805 = vmul.f32 %v2541, %v2623
    %v2806 = vmul.f32 %v2542, %v2623
    %v2807 = vmul.f32 %v2543, %v2630
    %v2808 = vmul.f32 %v2544, %v2630
    %v2809 = vmul.f32 %v2545, %v2636
    %v2810 = vmul.f32 %v2546, %v2636
    %v2811 = vmul.f32 %v2547, %v2642
    %v2812 = vmul.f32 %v2548, %v2642
    %v2813 = vmul.f32 %v2549, %v2648
    %v2814 = vmul.f32 %v2550, %v2648
    %v2815 = vmul.f32 %v2551, %v2655
    %v2816 = vmul.f32 %v2552, %v2655
    %v2817 = vmul.f32 %v2553, %v2661
    %v2818 = vmul.f32 %v2554, %v2661
    %v2819 = vmul.f32 %v2555, %v2667
    %v2820 = vmul.f32 %v2556, %v2667
    %v2821 = vmul.f32 %v2557, %v2673
    %v2822 = vmul.f32 %v2558, %v2673
    %v2823 = vmul.f32 %v2559, %v2680
    %v2824 = vmul.f32 %v2560, %v2680
    %v2825 = vmul.f32 %v2561, %v2686
    %v2826 = vmul.f32 %v2562, %v2686
    %v2827 = vmul.f32 %v2563, %v2692
    %v2828 = vmul.f32 %v2564, %v2692
    %v2829 = vmul.f32 %v2565, %v2698
    %v2830 = vmul.f32 %v2566, %v2698
    %v2831 = vmul.f32 %v2567, %v2705
    %v2832 = vmul.f32 %v2568, %v2705
    %v2833 = vmul.f32 %v2569, %v2711
    %v2834 = vmul.f32 %v2570, %v2711
    %v2835 = vmul.f32 %v2571, %v2717
    %v2836 = vmul.f32 %v2572, %v2717
    %v2837 = vmul.f32 %v2573, %v2723
    %v2838 = vmul.f32 %v2574, %v2723
    %v2839 = vmul.f32 %v2575, %v2730
    %v2840 = vmul.f32 %v2576, %v2730
    %v2841 = vmul.f32 %v2577, %v2736
    %v2842 = vmul.f32 %v2578, %v2736
    %v2843 = vmul.f32 %v2579, %v2742
    %v2844 = vmul.f32 %v2580, %v2742
    %v2845 = vmul.f32 %v2581, %v2748
    %v2846 = vmul.f32 %v2582, %v2748
    %v2847 = vmul.f32 %v2583, %v2755
    %v2848 = vmul.f32 %v2584, %v2755
    %v2849 = vmul.f32 %v2585, %v2761
    %v2850 = vmul.f32 %v2586, %v2761
    %v2851 = vmul.f32 %v2587, %v2767
    %v2852 = vmul.f32 %v2588, %v2767
    %v2853 = vmul.f32 %v2589, %v2773
    %v2854 = vmul.f32 %v2590, %v2773
    %v2855 = vmul.f32 %v2591, %v2780
    %v2856 = vmul.f32 %v2592, %v2780
    %v2857 = vmul.f32 %v2593, %v2786
    %v2858 = vmul.f32 %v2594, %v2786
    %v2859 = vmul.f32 %v2595, %v2792
    %v2860 = vmul.f32 %v2596, %v2792
    %v2861 = vmul.f32 %v2597, %v2798
    %v2862 = vmul.f32 %v2598, %v2798
    %2863 = vst [vmem:[#allocation8] sm:$0xff] %v2799
    %2864 = vst [vmem:[#allocation8 + $0x8] sm:$0xff] %v2800
    %2865 = vst [vmem:[#allocation8 + $0x10] sm:$0xff] %v2801
    %2866 = vst [vmem:[#allocation8 + $0x18] sm:$0xff] %v2802
    %2867 = vst [vmem:[#allocation8 + $0x20] sm:$0xff] %v2803
    %2868 = vst [vmem:[#allocation8 + $0x28] sm:$0xff] %v2804
    %2869 = vst [vmem:[#allocation8 + $0x30] sm:$0xff] %v2805
    %2870 = vst [vmem:[#allocation8 + $0x38] sm:$0xff] %v2806
    %2871 = vst [vmem:[#allocation8 + $0x40] sm:$0xff] %v2807
    %2872 = vst [vmem:[#allocation8 + $0x48] sm:$0xff] %v2808
    %2873 = vst [vmem:[#allocation8 + $0x50] sm:$0xff] %v2809
    %2874 = vst [vmem:[#allocation8 + $0x58] sm:$0xff] %v2810
    %2875 = vst [vmem:[#allocation8 + $0x60] sm:$0xff] %v2811
    %2876 = vst [vmem:[#allocation8 + $0x68] sm:$0xff] %v2812
    %2877 = vst [vmem:[#allocation8 + $0x70] sm:$0xff] %v2813
    %2878 = vst [vmem:[#allocation8 + $0x78] sm:$0xff] %v2814
    %2879 = vst [vmem:[#allocation8 + $0x80] sm:$0xff] %v2815
    %2880 = vst [vmem:[#allocation8 + $0x88] sm:$0xff] %v2816
    %2881 = vst [vmem:[#allocation8 + $0x90] sm:$0xff] %v2817
    %2882 = vst [vmem:[#allocation8 + $0x98] sm:$0xff] %v2818
    %2883 = vst [vmem:[#allocation8 + $0xa0] sm:$0xff] %v2819
    %2884 = vst [vmem:[#allocation8 + $0xa8] sm:$0xff] %v2820
    %2885 = vst [vmem:[#allocation8 + $0xb0] sm:$0xff] %v2821
    %2886 = vst [vmem:[#allocation8 + $0xb8] sm:$0xff] %v2822
    %2887 = vst [vmem:[#allocation8 + $0xc0] sm:$0xff] %v2823
    %2888 = vst [vmem:[#allocation8 + $0xc8] sm:$0xff] %v2824
    %2889 = vst [vmem:[#allocation8 + $0xd0] sm:$0xff] %v2825
    %2890 = vst [vmem:[#allocation8 + $0xd8] sm:$0xff] %v2826
    %2891 = vst [vmem:[#allocation8 + $0xe0] sm:$0xff] %v2827
    %2892 = vst [vmem:[#allocation8 + $0xe8] sm:$0xff] %v2828
    %2893 = vst [vmem:[#allocation8 + $0xf0] sm:$0xff] %v2829
    %2894 = vst [vmem:[#allocation8 + $0xf8] sm:$0xff] %v2830
    %2895 = vst [vmem:[#allocation8 + $0x100] sm:$0xff] %v2831
    %2896 = vst [vmem:[#allocation8 + $0x108] sm:$0xff] %v2832
    %2897 = vst [vmem:[#allocation8 + $0x110] sm:$0xff] %v2833
    %2898 = vst [vmem:[#allocation8 + $0x118] sm:$0xff] %v2834
    %2899 = vst [vmem:[#allocation8 + $0x120] sm:$0xff] %v2835
    %2900 = vst [vmem:[#allocation8 + $0x128] sm:$0xff] %v2836
    %2901 = vst [vmem:[#allocation8 + $0x130] sm:$0xff] %v2837
    %2902 = vst [vmem:[#allocation8 + $0x138] sm:$0xff] %v2838
    %2903 = vst [vmem:[#allocation8 + $0x140] sm:$0xff] %v2839
    %2904 = vst [vmem:[#allocation8 + $0x148] sm:$0xff] %v2840
    %2905 = vst [vmem:[#allocation8 + $0x150] sm:$0xff] %v2841
    %2906 = vst [vmem:[#allocation8 + $0x158] sm:$0xff] %v2842
    %2907 = vst [vmem:[#allocation8 + $0x160] sm:$0xff] %v2843
    %2908 = vst [vmem:[#allocation8 + $0x168] sm:$0xff] %v2844
    %2909 = vst [vmem:[#allocation8 + $0x170] sm:$0xff] %v2845
    %2910 = vst [vmem:[#allocation8 + $0x178] sm:$0xff] %v2846
    %2911 = vst [vmem:[#allocation8 + $0x180] sm:$0xff] %v2847
    %2912 = vst [vmem:[#allocation8 + $0x188] sm:$0xff] %v2848
    %2913 = vst [vmem:[#allocation8 + $0x190] sm:$0xff] %v2849
    %2914 = vst [vmem:[#allocation8 + $0x198] sm:$0xff] %v2850
    %2915 = vst [vmem:[#allocation8 + $0x1a0] sm:$0xff] %v2851
    %2916 = vst [vmem:[#allocation8 + $0x1a8] sm:$0xff] %v2852
    %2917 = vst [vmem:[#allocation8 + $0x1b0] sm:$0xff] %v2853
    %2918 = vst [vmem:[#allocation8 + $0x1b8] sm:$0xff] %v2854
    %2919 = vst [vmem:[#allocation8 + $0x1c0] sm:$0xff] %v2855
    %2920 = vst [vmem:[#allocation8 + $0x1c8] sm:$0xff] %v2856
    %2921 = vst [vmem:[#allocation8 + $0x1d0] sm:$0xff] %v2857
    %2922 = vst [vmem:[#allocation8 + $0x1d8] sm:$0xff] %v2858
    %2923 = vst [vmem:[#allocation8 + $0x1e0] sm:$0xff] %v2859
    %2924 = vst [vmem:[#allocation8 + $0x1e8] sm:$0xff] %v2860
    %2925 = vst [vmem:[#allocation8 + $0x1f0] sm:$0xff] %v2861
    %2926 = vst [vmem:[#allocation8 + $0x1f8] sm:$0xff] %v2862
    // Predicated region
    $region38: #{tpu_custom_call.1} parent=1 // pred_check
      _
    $region39: #{tpu_custom_call.1} parent=1 // pred_check_branch
      %2928 = sbr.rel (0) target = $region41
    $region40: #{tpu_custom_call.1} parent=1 // pred_region
      %2930 = vsyncadd [#allocation5], 0
      %s2931 = sshll.u32 [#allocation8], 4
      %s2932 = int_to_ptr.vmem [resolvable:$true] %s2931
      %s2933 = sshll.u32 %s7, 4
      %s2934 = int_to_ptr.hbm [resolvable:$true] %s2933
      %2939 = dma.vmem_to_hbm [thread:$0]  %s2932, 8192, %s2934, [#allocation5], 256, 256, 16
    $region41: #{tpu_custom_call.1} parent=1 // pred_fallthru
      _
    // Predicated region
    $region42: #{tpu_custom_call.1} parent=1 // pred_check
      _
    $region43: #{tpu_custom_call.1} parent=1 // pred_check_branch
      %2941 = sbr.rel (0) target = $region45
    $region44: #{tpu_custom_call.1} parent=1 // pred_region
      %2943 = dma.done [#allocation5], 8192
    $region45: #{tpu_custom_call.1} parent=1 // pred_fallthru
      _
    %2944 = vsyncpa [#allocation4], 1
    %2945 = vsyncpa [#allocation7], 1
    %2946 = vsyncpa [#allocation5], 1

</llo_original>
